<compile_context>
chip_gen: v7x
topology: tpu7x:2x2x1
jax: 0.10.0
libtpu: 0.0.40
codegen_flags: <defaults>
</compile_context>

<pallas_src>
import functools

import jax
import jax.numpy as jnp
from jax import lax
from jax.experimental import pallas as pl
from jax.experimental.pallas import tpu as pltpu


def _round_up(v, m):
    return ((v + m - 1) // m) * m


def _tile_vmem_bytes(th, w, c1p, chp, c2p):
    """Rough per-grid-step VMEM working set (double-buffered blocks + scratch)."""
    x_blk = th * w * c1p * 4
    halo = 2 * w * c1p * 4
    out_blk = th * w * c2p * 4
    wts = c1p * chp * 2 + 9 * chp * c2p * 2 + 2 * max(chp, c2p) * 4
    pipelined = 2 * (x_blk + halo + out_blk + wts)        # double buffering
    xf = (th + 2) * w * c1p * 2                           # bf16 scratch
    hw = (th + 2) * w * 3 * chp * 2                       # bf16 scratch
    acc = th * w * c2p * 4                                # f32 accumulator
    temps = (th + 2) * w * chp * 6                        # conv1 temporaries
    return pipelined + xf + hw + acc + temps


def _choose_tile_h(h, w, c1p, chp, c2p, budget_bytes=10 * 1024 * 1024):
    """Largest divisor of H (preferring multiples of 8) that fits the budget.

    The budget is conservative so the working set stays well inside the
    default scoped-VMEM limit on every generation (incl. v7x's 64 MiB VMEM).
    """
    divisors = [d for d in range(h, 0, -1) if h % d == 0]
    fitting = [d for d in divisors
               if _tile_vmem_bytes(d, w, c1p, chp, c2p) <= budget_bytes]
    for d in fitting:
        if d % 8 == 0:
            return d
    return fitting[0] if fitting else 1


def _bottleneck_kernel(x_ref, xt_ref, xb_ref, w1_ref, b1_ref,
                       w2_ref, b2_ref, o_ref,
                       xf_ref, hw_ref, acc_ref, *, add: bool):
    # Block shapes per grid step (i = row tile, n = batch image):
    #   x_ref  : (1, TH, W, C1p) f32   row tile of the input image
    #   xt_ref : (1, 1,  W, C1p) f32   row directly above the tile (clamped)
    #   xb_ref : (1, 1,  W, C1p) f32   row directly below the tile (clamped)
    #   w1_ref : (C1p, Chp)      bf16  1x1 conv weights (BN scale folded in)
    #   b1_ref : (1, Chp)        f32   folded BN bias for conv1
    #   w2_ref : (3, 3*Chp, C2p) bf16  3x3 conv weights (BN scale folded in),
    #                                  kj taps fused on the contraction axis
    #   b2_ref : (1, C2p)        f32   folded BN bias for conv2
    #   o_ref  : (1, TH, W, C2p) f32
    # Scratch:
    #   xf_ref : (TH+2, W, C1p)   bf16  tile + halo rows (MXU operand)
    #   hw_ref : (TH+2, W, 3*Chp) bf16  W-direction im2col of the hidden act.
    #   acc_ref: (TH*W, C2p)      f32   conv2 accumulator
    TH = x_ref.shape[1]
    W = x_ref.shape[2]
    C1p = x_ref.shape[3]
    Chp = w1_ref.shape[1]
    C2p = w2_ref.shape[2]
    i = pl.program_id(0)

    # ---- assemble row tile + 1-row halo, cast once to bf16 for the MXU ----
    xf_ref[0:1, :, :] = xt_ref[0].astype(jnp.bfloat16)
    xf_ref[1:TH + 1, :, :] = x_ref[0].astype(jnp.bfloat16)
    xf_ref[TH + 1:TH + 2, :, :] = xb_ref[0].astype(jnp.bfloat16)

    # ---- conv1 (1x1) + BN + SiLU (matmul in bf16, epilogue in f32) ----
    h = jnp.dot(xf_ref[...].reshape((TH + 2) * W, C1p), w1_ref[...],
                preferred_element_type=jnp.float32)
    h = h + b1_ref[...]                             # BN scale folded into w1
    h = h * jax.nn.sigmoid(h)                       # SiLU (sigmoid -> EUP)
    h = h.astype(jnp.bfloat16).reshape(TH + 2, W, Chp)

    # ---- W-direction im2col: fuse the three kj taps along the K axis ----
    zcol = jnp.zeros((TH + 2, 1, Chp), jnp.bfloat16)
    hw_ref[:, :, Chp:2 * Chp] = h                              # kj = 1 (center)
    hw_ref[:, 1:, 0:Chp] = h[:, :W - 1, :]                     # kj = 0 (left)
    hw_ref[:, 0:1, 0:Chp] = zcol
    hw_ref[:, :W - 1, 2 * Chp:3 * Chp] = h[:, 1:, :]           # kj = 2 (right)
    hw_ref[:, W - 1:, 2 * Chp:3 * Chp] = zcol

    # ---- zero only the halo rows that fall outside the image ----
    @pl.when(i == 0)
    def _():
        hw_ref[0:1, :, :] = jnp.zeros((1, W, 3 * Chp), jnp.bfloat16)

    @pl.when(i == pl.num_programs(0) - 1)
    def _():
        hw_ref[TH + 1:TH + 2, :, :] = jnp.zeros((1, W, 3 * Chp), jnp.bfloat16)

    # ---- conv2 (3x3) as three fat matmuls (contraction = 3*Chp) ----
    acc_ref[...] = jnp.dot(hw_ref[0:TH, :, :].reshape(TH * W, 3 * Chp),
                           w2_ref[0], preferred_element_type=jnp.float32)
    acc_ref[...] += jnp.dot(hw_ref[1:TH + 1, :, :].reshape(TH * W, 3 * Chp),
                            w2_ref[1], preferred_element_type=jnp.float32)
    acc_ref[...] += jnp.dot(hw_ref[2:TH + 2, :, :].reshape(TH * W, 3 * Chp),
                            w2_ref[2], preferred_element_type=jnp.float32)

    # ---- BN + SiLU epilogue in f32, optional residual, lane-dense store ----
    y = acc_ref[...] + b2_ref[...]                  # BN scale folded into w2
    y = y * jax.nn.sigmoid(y)
    y = y.reshape(TH, W, C2p)
    if add:
        y = y + x_ref[0]
    o_ref[0] = y.astype(o_ref.dtype)


def _fold_bn(gamma, beta, mean, var, eps):
    scale = gamma / jnp.sqrt(var + eps)
    bias = beta - mean * scale
    return scale, bias


def bottleneck(x_nchw, w1_oihw, g1, be1, m1, v1,
               w2_oihw, g2, be2, m2, v2,
               shortcut=True, eps=1e-5, tile_h=None):
    """Pallas TPU implementation of Bottleneck.forward (NCHW in / NCHW out)."""
    N, C1, H, W = x_nchw.shape
    Ch = w1_oihw.shape[0]
    C2 = w2_oihw.shape[0]
    add = bool(shortcut and C1 == C2)

    # Channel padding to multiples of 128 -> lane-dense MXU operands & stores.
    C1p = _round_up(C1, 128)
    Chp = _round_up(Ch, 128)
    C2p = _round_up(C2, 128)

    # NCHW -> NHWC layout glue. (If the surrounding model can stay NHWC these
    # transposes -- a full HBM round trip each -- should be dropped.)
    x = jnp.transpose(x_nchw, (0, 2, 3, 1)).astype(jnp.float32)
    x = jnp.pad(x, ((0, 0), (0, 0), (0, 0), (0, C1p - C1)))

    # Fold eval-mode BN into (scale, bias); fold scale into the conv weights
    # on the host so the in-kernel epilogue is bias-add + SiLU only.
    s1, b1 = _fold_bn(g1, be1, m1, v1, eps)
    s2, b2 = _fold_bn(g2, be2, m2, v2, eps)

    # conv1 weights: OIHW (Ch,C1,1,1) -> (C1p, Chp) bf16, scale folded.
    w1 = jnp.transpose(w1_oihw[:, :, 0, 0], (1, 0)) * s1[None, :]
    w1 = jnp.pad(w1, ((0, C1p - C1), (0, Chp - Ch))).astype(jnp.bfloat16)

    # conv2 weights: OIHW (C2,Ch,3,3) -> HWIO -> scale fold -> pad ->
    # (3, 3*Chp, C2p) bf16, with the three kj taps fused along contraction.
    w2 = jnp.transpose(w2_oihw, (2, 3, 1, 0)) * s2[None, None, None, :]
    w2 = jnp.pad(w2, ((0, 0), (0, 0), (0, Chp - Ch), (0, C2p - C2)))
    w2 = w2.reshape(3, 3 * Chp, C2p).astype(jnp.bfloat16)

    b1 = jnp.pad(b1, (0, Chp - Ch)).reshape(1, Chp).astype(jnp.float32)
    b2 = jnp.pad(b2, (0, C2p - C2)).reshape(1, C2p).astype(jnp.float32)

    TH = _choose_tile_h(H, W, C1p, Chp, C2p) if tile_h is None else int(tile_h)
    assert H % TH == 0, "tile_h must divide H"
    HT = H // TH

    kernel = functools.partial(_bottleneck_kernel, add=add)

    out = pl.pallas_call(
        kernel,
        out_shape=jax.ShapeDtypeStruct((N, H, W, C2p), jnp.float32),
        grid_spec=pltpu.PrefetchScalarGridSpec(
            num_scalar_prefetch=0,
            grid=(HT, N),     # spatial row tiles first: both cores busy at N=1
            in_specs=[
                # row tile of x
                pl.BlockSpec((1, TH, W, C1p), lambda i, n: (n, i, 0, 0)),
                # halo row above (clamped; zeroed in-kernel at the image border)
                pl.BlockSpec((1, 1, W, C1p),
                             lambda i, n: (n, jnp.maximum(i * TH - 1, 0), 0, 0)),
                # halo row below (clamped; zeroed in-kernel at the image border)
                pl.BlockSpec((1, 1, W, C1p),
                             lambda i, n: (n, jnp.minimum((i + 1) * TH, H - 1), 0, 0)),
                pl.BlockSpec((C1p, Chp), lambda i, n: (0, 0)),
                pl.BlockSpec((1, Chp), lambda i, n: (0, 0)),
                pl.BlockSpec((3, 3 * Chp, C2p), lambda i, n: (0, 0, 0)),
                pl.BlockSpec((1, C2p), lambda i, n: (0, 0)),
            ],
            out_specs=pl.BlockSpec((1, TH, W, C2p), lambda i, n: (n, i, 0, 0)),
            scratch_shapes=[
                pltpu.VMEM((TH + 2, W, C1p), jnp.bfloat16),      # x tile + halo
                pltpu.VMEM((TH + 2, W, 3 * Chp), jnp.bfloat16),  # im2col of h
                pltpu.VMEM((TH * W, C2p), jnp.float32),          # conv2 accum
            ],
        ),
        compiler_params=pltpu.CompilerParams(
            dimension_semantics=("parallel", "parallel")),
    )(x, x, x, w1, b1, w2, b2)

    out = out[..., :C2]                                   # drop channel padding
    return jnp.transpose(out, (0, 3, 1, 2))               # back to NCHW


def _reference_bottleneck(x, w1_oihw, g1, be1, m1, v1,
                          w2_oihw, g2, be2, m2, v2,
                          shortcut=True, eps=1e-5):
    """Pure-JAX (XLA) reference in NCHW, eval-mode BN."""
    def conv_bn_silu(x, w, g, b, m, v, pad):
        y = lax.conv_general_dilated(
            x, w, window_strides=(1, 1), padding=[(pad, pad), (pad, pad)],
            dimension_numbers=('NCHW', 'OIHW', 'NCHW'))
        scale = (g / jnp.sqrt(v + eps)).reshape(1, -1, 1, 1)
        bias = (b - m * g / jnp.sqrt(v + eps)).reshape(1, -1, 1, 1)
        y = y * scale + bias
        return y * jax.nn.sigmoid(y)

    h = conv_bn_silu(x, w1_oihw, g1, be1, m1, v1, 0)
    y = conv_bn_silu(h, w2_oihw, g2, be2, m2, v2, 1)
    if shortcut and x.shape[1] == w2_oihw.shape[0]:
        return x + y
    return y


if __name__ == "__main__":
    # Shapes consistent with Bottleneck(c1=4, c2=4, shortcut=True, e=0.5).
    N, C1, C2, H, W = 2, 4, 4, 16, 16
    e = 0.5
    Ch = int(C1 * e)

    key = jax.random.PRNGKey(0)
    ks = jax.random.split(key, 11)

    x_nchw = jax.random.normal(ks[0], (N, C1, H, W), jnp.float32)

    # conv1 parameters (PyTorch layouts), deterministic init
    w1_oihw = 0.1 * jax.random.normal(ks[1], (Ch, C1, 1, 1), jnp.float32)
    g1 = 1.0 + 0.1 * jax.random.normal(ks[2], (Ch,), jnp.float32)
    be1 = 0.1 * jax.random.normal(ks[3], (Ch,), jnp.float32)
    m1 = 0.1 * jax.random.normal(ks[4], (Ch,), jnp.float32)
    v1 = jnp.abs(jax.random.normal(ks[5], (Ch,), jnp.float32)) + 0.5

    # conv2 parameters
    w2_oihw = 0.1 * jax.random.normal(ks[6], (C2, Ch, 3, 3), jnp.float32)
    g2 = 1.0 + 0.1 * jax.random.normal(ks[7], (C2,), jnp.float32)
    be2 = 0.1 * jax.random.normal(ks[8], (C2,), jnp.float32)
    m2 = 0.1 * jax.random.normal(ks[9], (C2,), jnp.float32)
    v2 = jnp.abs(jax.random.normal(ks[10], (C2,), jnp.float32)) + 0.5

    args = (x_nchw, w1_oihw, g1, be1, m1, v1, w2_oihw, g2, be2, m2, v2)

    ref = jax.block_until_ready(_reference_bottleneck(*args, shortcut=True))

    # Default tiling (heuristic picks the whole 16-row image as one tile).
    out = jax.block_until_ready(bottleneck(*args, shortcut=True))
    assert out.shape == (N, C2, H, W)
    err = float(jnp.max(jnp.abs(out - ref)))
    # bf16 MXU operands (f32 accumulation) -> tolerance relaxed vs pure-f32.
    assert jnp.allclose(out, ref, atol=2e-2, rtol=2e-2), f"max abs err {err}"

    # Force two row tiles to exercise the halo exchange / border-zero paths.
    out2 = jax.block_until_ready(bottleneck(*args, shortcut=True, tile_h=8))
    err2 = float(jnp.max(jnp.abs(out2 - ref)))
    assert jnp.allclose(out2, ref, atol=2e-2, rtol=2e-2), f"max abs err {err2}"

    print("KERNEL_OK")
</pallas_src>

<mosaic_0001>
module attributes {stable_mosaic.version = 11 : i64} {
  func.func @_bottleneck_kernel(%arg0: i32, %arg1: i32, %arg2: memref<1x16x16x128xf32, #tpu.memory_space<vmem>>, %arg3: memref<1x1x16x128xf32, #tpu.memory_space<vmem>>, %arg4: memref<1x1x16x128xf32, #tpu.memory_space<vmem>>, %arg5: memref<128x128xbf16, #tpu.memory_space<vmem>>, %arg6: memref<1x128xf32, #tpu.memory_space<vmem>>, %arg7: memref<3x384x128xbf16, #tpu.memory_space<vmem>>, %arg8: memref<1x128xf32, #tpu.memory_space<vmem>>, %arg9: memref<1x16x16x128xf32, #tpu.memory_space<vmem>>, %arg10: memref<18x16x128xbf16, #tpu.memory_space<vmem>>, %arg11: memref<18x16x384xbf16, #tpu.memory_space<vmem>>, %arg12: memref<256x128xf32, #tpu.memory_space<vmem>>) attributes {dimension_semantics = [#tpu.dimension_semantics<parallel>, #tpu.dimension_semantics<parallel>], iteration_bounds = array<i64: 1, 2>, scalar_prefetch = 0 : i64, scratch_operands = 3 : i64, tpu.core_type = #tpu.core_type<tc>, window_params = [{transform_indices = @transform_0, window_bounds = array<i64: 1, 16, 16, 128>}, {transform_indices = @transform_1, window_bounds = array<i64: 1, 1, 16, 128>}, {transform_indices = @transform_2, window_bounds = array<i64: 1, 1, 16, 128>}, {pipeline_mode = #tpu.pipeline_mode<synchronous>, transform_indices = @transform_3, window_bounds = array<i64: 128, 128>}, {pipeline_mode = #tpu.pipeline_mode<synchronous>, transform_indices = @transform_4, window_bounds = array<i64: 1, 128>}, {pipeline_mode = #tpu.pipeline_mode<synchronous>, transform_indices = @transform_5, window_bounds = array<i64: 3, 384, 128>}, {pipeline_mode = #tpu.pipeline_mode<synchronous>, transform_indices = @transform_6, window_bounds = array<i64: 1, 128>}, {transform_indices = @transform_7, window_bounds = array<i64: 1, 16, 16, 128>}]} {
    %c0 = arith.constant 0 : index
    %c0_0 = arith.constant 0 : index
    %c0_1 = arith.constant 0 : index
    %c0_2 = arith.constant 0 : index
    %0 = vector.load %arg3[%c0, %c0_0, %c0_1, %c0_2] : memref<1x1x16x128xf32, #tpu.memory_space<vmem>>, vector<1x1x16x128xf32>
    %1 = vector.shape_cast %0 : vector<1x1x16x128xf32> to vector<1x16x128xf32>
    %2 = arith.truncf %1 : vector<1x16x128xf32> to vector<1x16x128xbf16>
    %c0_3 = arith.constant 0 : index
    %c0_4 = arith.constant 0 : index
    %c0_5 = arith.constant 0 : index
    %3 = vector.load %arg10[%c0_3, %c0_4, %c0_5] : memref<18x16x128xbf16, #tpu.memory_space<vmem>>, vector<1x16x128xbf16>
    tpu.vector_store %arg10[%c0_3, %c0_4, %c0_5], %2 {strides = array<i32>} : memref<18x16x128xbf16, #tpu.memory_space<vmem>>, vector<1x16x128xbf16>,
    %c0_6 = arith.constant 0 : index
    %c0_7 = arith.constant 0 : index
    %c0_8 = arith.constant 0 : index
    %c0_9 = arith.constant 0 : index
    %4 = vector.load %arg2[%c0_6, %c0_7, %c0_8, %c0_9] : memref<1x16x16x128xf32, #tpu.memory_space<vmem>>, vector<1x16x16x128xf32>
    %5 = vector.shape_cast %4 : vector<1x16x16x128xf32> to vector<16x16x128xf32>
    %6 = arith.truncf %5 : vector<16x16x128xf32> to vector<16x16x128xbf16>
    %c1 = arith.constant 1 : index
    %c0_10 = arith.constant 0 : index
    %c0_11 = arith.constant 0 : index
    %7 = vector.load %arg10[%c1, %c0_10, %c0_11] : memref<18x16x128xbf16, #tpu.memory_space<vmem>>, vector<16x16x128xbf16>
    tpu.vector_store %arg10[%c1, %c0_10, %c0_11], %6 {strides = array<i32>} : memref<18x16x128xbf16, #tpu.memory_space<vmem>>, vector<16x16x128xbf16>,
    %c0_12 = arith.constant 0 : index
    %c0_13 = arith.constant 0 : index
    %c0_14 = arith.constant 0 : index
    %c0_15 = arith.constant 0 : index
    %8 = vector.load %arg4[%c0_12, %c0_13, %c0_14, %c0_15] : memref<1x1x16x128xf32, #tpu.memory_space<vmem>>, vector<1x1x16x128xf32>
    %9 = vector.shape_cast %8 : vector<1x1x16x128xf32> to vector<1x16x128xf32>
    %10 = arith.truncf %9 : vector<1x16x128xf32> to vector<1x16x128xbf16>
    %c17 = arith.constant 17 : index
    %c0_16 = arith.constant 0 : index
    %c0_17 = arith.constant 0 : index
    %11 = vector.load %arg10[%c17, %c0_16, %c0_17] : memref<18x16x128xbf16, #tpu.memory_space<vmem>>, vector<1x16x128xbf16>
    tpu.vector_store %arg10[%c17, %c0_16, %c0_17], %10 {strides = array<i32>} : memref<18x16x128xbf16, #tpu.memory_space<vmem>>, vector<1x16x128xbf16>,
    %c0_18 = arith.constant 0 : index
    %c0_19 = arith.constant 0 : index
    %c0_20 = arith.constant 0 : index
    %12 = vector.load %arg10[%c0_18, %c0_19, %c0_20] : memref<18x16x128xbf16, #tpu.memory_space<vmem>>, vector<18x16x128xbf16>
    %13 = vector.shape_cast %12 : vector<18x16x128xbf16> to vector<288x128xbf16>
    %c0_21 = arith.constant 0 : index
    %c0_22 = arith.constant 0 : index
    %14 = vector.load %arg5[%c0_21, %c0_22] : memref<128x128xbf16, #tpu.memory_space<vmem>>, vector<128x128xbf16>
    %cst = arith.constant dense<0.000000e+00> : vector<288x128xf32>
    %15 = tpu.matmul %13, %14, %cst {dimension_numbers = #tpu.dot_dimension_numbers<[1], [0], [0], [1], [0, 0, 1, 1], [], []>} : vector<288x128xbf16>, vector<128x128xbf16>, vector<288x128xf32> -> vector<288x128xf32>
    %c0_23 = arith.constant 0 : index
    %c0_24 = arith.constant 0 : index
    %16 = vector.load %arg6[%c0_23, %c0_24] : memref<1x128xf32, #tpu.memory_space<vmem>>, vector<1x128xf32>
    %17 = vector.broadcast %16 : vector<1x128xf32> to vector<288x128xf32>
    %18 = arith.addf %15, %17 : vector<288x128xf32>
    %19 = arith.negf %18 : vector<288x128xf32>
    %20 = math.exp %19 : vector<288x128xf32>
    %cst_25 = arith.constant 1.000000e+00 : f32
    %21 = vector.broadcast %cst_25 : f32 to vector<288x128xf32>
    %22 = arith.addf %21, %20 : vector<288x128xf32>
    %23 = arith.divf %21, %22 : vector<288x128xf32>
    %24 = arith.mulf %18, %23 : vector<288x128xf32>
    %25 = arith.truncf %24 : vector<288x128xf32> to vector<288x128xbf16>
    %26 = vector.shape_cast %25 : vector<288x128xbf16> to vector<18x16x128xbf16>
    %cst_26 = arith.constant 0.000000e+00 : bf16
    %27 = vector.broadcast %cst_26 : bf16 to vector<18x1x128xbf16>
    %c0_27 = arith.constant 0 : index
    %c0_28 = arith.constant 0 : index
    %c128 = arith.constant 128 : index
    %28 = vector.load %arg11[%c0_27, %c0_28, %c128] : memref<18x16x384xbf16, #tpu.memory_space<vmem>>, vector<18x16x128xbf16>
    tpu.vector_store %arg11[%c0_27, %c0_28, %c128], %26 {strides = array<i32>} : memref<18x16x384xbf16, #tpu.memory_space<vmem>>, vector<18x16x128xbf16>,
    %29 = vector.extract_strided_slice %26 {offsets = [0, 0, 0], sizes = [18, 15, 128], strides = [1, 1, 1]} : vector<18x16x128xbf16> to vector<18x15x128xbf16>
    %c0_29 = arith.constant 0 : index
    %c1_30 = arith.constant 1 : index
    %c0_31 = arith.constant 0 : index
    %30 = vector.load %arg11[%c0_29, %c1_30, %c0_31] : memref<18x16x384xbf16, #tpu.memory_space<vmem>>, vector<18x15x128xbf16>
    tpu.vector_store %arg11[%c0_29, %c1_30, %c0_31], %29 {strides = array<i32>} : memref<18x16x384xbf16, #tpu.memory_space<vmem>>, vector<18x15x128xbf16>,
    %c0_32 = arith.constant 0 : index
    %c0_33 = arith.constant 0 : index
    %c0_34 = arith.constant 0 : index
    %31 = vector.load %arg11[%c0_32, %c0_33, %c0_34] : memref<18x16x384xbf16, #tpu.memory_space<vmem>>, vector<18x1x128xbf16>
    tpu.vector_store %arg11[%c0_32, %c0_33, %c0_34], %27 {strides = array<i32>} : memref<18x16x384xbf16, #tpu.memory_space<vmem>>, vector<18x1x128xbf16>,
    %32 = vector.extract_strided_slice %26 {offsets = [0, 1, 0], sizes = [18, 15, 128], strides = [1, 1, 1]} : vector<18x16x128xbf16> to vector<18x15x128xbf16>
    %c0_35 = arith.constant 0 : index
    %c0_36 = arith.constant 0 : index
    %c256 = arith.constant 256 : index
    %33 = vector.load %arg11[%c0_35, %c0_36, %c256] : memref<18x16x384xbf16, #tpu.memory_space<vmem>>, vector<18x15x128xbf16>
    tpu.vector_store %arg11[%c0_35, %c0_36, %c256], %32 {strides = array<i32>} : memref<18x16x384xbf16, #tpu.memory_space<vmem>>, vector<18x15x128xbf16>,
    %c0_37 = arith.constant 0 : index
    %c15 = arith.constant 15 : index
    %c256_38 = arith.constant 256 : index
    %34 = vector.load %arg11[%c0_37, %c15, %c256_38] : memref<18x16x384xbf16, #tpu.memory_space<vmem>>, vector<18x1x128xbf16>
    tpu.vector_store %arg11[%c0_37, %c15, %c256_38], %27 {strides = array<i32>} : memref<18x16x384xbf16, #tpu.memory_space<vmem>>, vector<18x1x128xbf16>,
    %c0_i32 = arith.constant 0 : i32
    %35 = arith.cmpi eq, %arg0, %c0_i32 : i32
    %36 = arith.extui %35 : i1 to i32
    %c0_i32_39 = arith.constant 0 : i32
    %37 = arith.cmpi ne, %36, %c0_i32_39 : i32
    scf.if %37 {
      %cst_85 = arith.constant 0.000000e+00 : bf16
      %80 = vector.broadcast %cst_85 : bf16 to vector<1x16x384xbf16>
      %c0_86 = arith.constant 0 : index
      %c0_87 = arith.constant 0 : index
      %c0_88 = arith.constant 0 : index
      %81 = vector.load %arg11[%c0_86, %c0_87, %c0_88] : memref<18x16x384xbf16, #tpu.memory_space<vmem>>, vector<1x16x384xbf16>
      tpu.vector_store %arg11[%c0_86, %c0_87, %c0_88], %80 {strides = array<i32>} : memref<18x16x384xbf16, #tpu.memory_space<vmem>>, vector<1x16x384xbf16>,
    } else {
    }
    %c0_i32_40 = arith.constant 0 : i32
    %38 = arith.cmpi eq, %arg0, %c0_i32_40 : i32
    %39 = arith.extui %38 : i1 to i32
    %c0_i32_41 = arith.constant 0 : i32
    %40 = arith.cmpi ne, %39, %c0_i32_41 : i32
    scf.if %40 {
      %cst_85 = arith.constant 0.000000e+00 : bf16
      %80 = vector.broadcast %cst_85 : bf16 to vector<1x16x384xbf16>
      %c17_86 = arith.constant 17 : index
      %c0_87 = arith.constant 0 : index
      %c0_88 = arith.constant 0 : index
      %81 = vector.load %arg11[%c17_86, %c0_87, %c0_88] : memref<18x16x384xbf16, #tpu.memory_space<vmem>>, vector<1x16x384xbf16>
      tpu.vector_store %arg11[%c17_86, %c0_87, %c0_88], %80 {strides = array<i32>} : memref<18x16x384xbf16, #tpu.memory_space<vmem>>, vector<1x16x384xbf16>,
    } else {
    }
    %c0_42 = arith.constant 0 : index
    %c0_43 = arith.constant 0 : index
    %c0_44 = arith.constant 0 : index
    %41 = vector.load %arg11[%c0_42, %c0_43, %c0_44] : memref<18x16x384xbf16, #tpu.memory_space<vmem>>, vector<16x16x384xbf16>
    %42 = vector.shape_cast %41 : vector<16x16x384xbf16> to vector<256x384xbf16>
    %c0_45 = arith.constant 0 : index
    %c0_46 = arith.constant 0 : index
    %c0_47 = arith.constant 0 : index
    %43 = vector.load %arg7[%c0_45, %c0_46, %c0_47] : memref<3x384x128xbf16, #tpu.memory_space<vmem>>, vector<1x384x128xbf16>
    %44 = vector.shape_cast %43 : vector<1x384x128xbf16> to vector<384x128xbf16>
    %cst_48 = arith.constant dense<0.000000e+00> : vector<256x128xf32>
    %45 = tpu.matmul %42, %44, %cst_48 {dimension_numbers = #tpu.dot_dimension_numbers<[1], [0], [0], [1], [0, 0, 1, 1], [], []>} : vector<256x384xbf16>, vector<384x128xbf16>, vector<256x128xf32> -> vector<256x128xf32>
    %c0_49 = arith.constant 0 : index
    %c0_50 = arith.constant 0 : index
    %46 = vector.load %arg12[%c0_49, %c0_50] : memref<256x128xf32, #tpu.memory_space<vmem>>, vector<256x128xf32>
    tpu.vector_store %arg12[%c0_49, %c0_50], %45 {strides = array<i32>} : memref<256x128xf32, #tpu.memory_space<vmem>>, vector<256x128xf32>,
    %c0_51 = arith.constant 0 : index
    %c0_52 = arith.constant 0 : index
    %47 = vector.load %arg12[%c0_51, %c0_52] : memref<256x128xf32, #tpu.memory_space<vmem>>, vector<256x128xf32>
    %c1_53 = arith.constant 1 : index
    %c0_54 = arith.constant 0 : index
    %c0_55 = arith.constant 0 : index
    %48 = vector.load %arg11[%c1_53, %c0_54, %c0_55] : memref<18x16x384xbf16, #tpu.memory_space<vmem>>, vector<16x16x384xbf16>
    %49 = vector.shape_cast %48 : vector<16x16x384xbf16> to vector<256x384xbf16>
    %c1_56 = arith.constant 1 : index
    %c0_57 = arith.constant 0 : index
    %c0_58 = arith.constant 0 : index
    %50 = vector.load %arg7[%c1_56, %c0_57, %c0_58] : memref<3x384x128xbf16, #tpu.memory_space<vmem>>, vector<1x384x128xbf16>
    %51 = vector.shape_cast %50 : vector<1x384x128xbf16> to vector<384x128xbf16>
    %cst_59 = arith.constant dense<0.000000e+00> : vector<256x128xf32>
    %52 = tpu.matmul %49, %51, %cst_59 {dimension_numbers = #tpu.dot_dimension_numbers<[1], [0], [0], [1], [0, 0, 1, 1], [], []>} : vector<256x384xbf16>, vector<384x128xbf16>, vector<256x128xf32> -> vector<256x128xf32>
    %53 = arith.addf %47, %52 : vector<256x128xf32>
    %c0_60 = arith.constant 0 : index
    %c0_61 = arith.constant 0 : index
    %54 = vector.load %arg12[%c0_60, %c0_61] : memref<256x128xf32, #tpu.memory_space<vmem>>, vector<256x128xf32>
    tpu.vector_store %arg12[%c0_60, %c0_61], %53 {strides = array<i32>} : memref<256x128xf32, #tpu.memory_space<vmem>>, vector<256x128xf32>,
    %c0_62 = arith.constant 0 : index
    %c0_63 = arith.constant 0 : index
    %55 = vector.load %arg12[%c0_62, %c0_63] : memref<256x128xf32, #tpu.memory_space<vmem>>, vector<256x128xf32>
    %c2 = arith.constant 2 : index
    %c0_64 = arith.constant 0 : index
    %c0_65 = arith.constant 0 : index
    %56 = vector.load %arg11[%c2, %c0_64, %c0_65] : memref<18x16x384xbf16, #tpu.memory_space<vmem>>, vector<16x16x384xbf16>
    %57 = vector.shape_cast %56 : vector<16x16x384xbf16> to vector<256x384xbf16>
    %c2_66 = arith.constant 2 : index
    %c0_67 = arith.constant 0 : index
    %c0_68 = arith.constant 0 : index
    %58 = vector.load %arg7[%c2_66, %c0_67, %c0_68] : memref<3x384x128xbf16, #tpu.memory_space<vmem>>, vector<1x384x128xbf16>
    %59 = vector.shape_cast %58 : vector<1x384x128xbf16> to vector<384x128xbf16>
    %cst_69 = arith.constant dense<0.000000e+00> : vector<256x128xf32>
    %60 = tpu.matmul %57, %59, %cst_69 {dimension_numbers = #tpu.dot_dimension_numbers<[1], [0], [0], [1], [0, 0, 1, 1], [], []>} : vector<256x384xbf16>, vector<384x128xbf16>, vector<256x128xf32> -> vector<256x128xf32>
    %61 = arith.addf %55, %60 : vector<256x128xf32>
    %c0_70 = arith.constant 0 : index
    %c0_71 = arith.constant 0 : index
    %62 = vector.load %arg12[%c0_70, %c0_71] : memref<256x128xf32, #tpu.memory_space<vmem>>, vector<256x128xf32>
    tpu.vector_store %arg12[%c0_70, %c0_71], %61 {strides = array<i32>} : memref<256x128xf32, #tpu.memory_space<vmem>>, vector<256x128xf32>,
    %c0_72 = arith.constant 0 : index
    %c0_73 = arith.constant 0 : index
    %63 = vector.load %arg12[%c0_72, %c0_73] : memref<256x128xf32, #tpu.memory_space<vmem>>, vector<256x128xf32>
    %c0_74 = arith.constant 0 : index
    %c0_75 = arith.constant 0 : index
    %64 = vector.load %arg8[%c0_74, %c0_75] : memref<1x128xf32, #tpu.memory_space<vmem>>, vector<1x128xf32>
    %65 = vector.broadcast %64 : vector<1x128xf32> to vector<256x128xf32>
    %66 = arith.addf %63, %65 : vector<256x128xf32>
    %67 = arith.negf %66 : vector<256x128xf32>
    %68 = math.exp %67 : vector<256x128xf32>
    %cst_76 = arith.constant 1.000000e+00 : f32
    %69 = vector.broadcast %cst_76 : f32 to vector<256x128xf32>
    %70 = arith.addf %69, %68 : vector<256x128xf32>
    %71 = arith.divf %69, %70 : vector<256x128xf32>
    %72 = arith.mulf %66, %71 : vector<256x128xf32>
    %73 = vector.shape_cast %72 : vector<256x128xf32> to vector<16x16x128xf32>
    %c0_77 = arith.constant 0 : index
    %c0_78 = arith.constant 0 : index
    %c0_79 = arith.constant 0 : index
    %c0_80 = arith.constant 0 : index
    %74 = vector.load %arg2[%c0_77, %c0_78, %c0_79, %c0_80] : memref<1x16x16x128xf32, #tpu.memory_space<vmem>>, vector<1x16x16x128xf32>
    %75 = vector.shape_cast %74 : vector<1x16x16x128xf32> to vector<16x16x128xf32>
    %76 = arith.addf %73, %75 : vector<16x16x128xf32>
    %c0_81 = arith.constant 0 : index
    %c0_82 = arith.constant 0 : index
    %c0_83 = arith.constant 0 : index
    %c0_84 = arith.constant 0 : index
    %77 = vector.load %arg9[%c0_81, %c0_82, %c0_83, %c0_84] : memref<1x16x16x128xf32, #tpu.memory_space<vmem>>, vector<1x16x16x128xf32>
    %78 = vector.shape_cast %77 : vector<1x16x16x128xf32> to vector<16x16x128xf32>
    %79 = vector.shape_cast %76 : vector<16x16x128xf32> to vector<1x16x16x128xf32>
    tpu.vector_store %arg9[%c0_81, %c0_82, %c0_83, %c0_84], %79 {strides = array<i32>} : memref<1x16x16x128xf32, #tpu.memory_space<vmem>>, vector<1x16x16x128xf32>,
    return
  }
  func.func @transform_0(%arg0: i32, %arg1: i32) -> (i32, i32, i32, i32) {
    %c0_i32 = arith.constant 0 : i32
    %c0_i32_0 = arith.constant 0 : i32
    %c0_i32_1 = arith.constant 0 : i32
    return %arg1, %arg0, %c0_i32, %c0_i32_0 : i32, i32, i32, i32
  }
  func.func @transform_1(%arg0: i32, %arg1: i32) -> (i32, i32, i32, i32) {
    %c16_i32 = arith.constant 16 : i32
    %0 = arith.muli %arg0, %c16_i32 : i32
    %c1_i32 = arith.constant 1 : i32
    %1 = arith.subi %0, %c1_i32 : i32
    %c0_i32 = arith.constant 0 : i32
    %2 = arith.maxsi %1, %c0_i32 : i32
    %c0_i32_0 = arith.constant 0 : i32
    %c0_i32_1 = arith.constant 0 : i32
    %c0_i32_2 = arith.constant 0 : i32
    return %arg1, %2, %c0_i32_0, %c0_i32_1 : i32, i32, i32, i32
  }
  func.func @transform_2(%arg0: i32, %arg1: i32) -> (i32, i32, i32, i32) {
    %c1_i32 = arith.constant 1 : i32
    %0 = arith.addi %arg0, %c1_i32 : i32
    %c16_i32 = arith.constant 16 : i32
    %1 = arith.muli %0, %c16_i32 : i32
    %c15_i32 = arith.constant 15 : i32
    %2 = arith.minsi %1, %c15_i32 : i32
    %c0_i32 = arith.constant 0 : i32
    %c0_i32_0 = arith.constant 0 : i32
    %c0_i32_1 = arith.constant 0 : i32
    return %arg1, %2, %c0_i32, %c0_i32_0 : i32, i32, i32, i32
  }
  func.func @transform_3(%arg0: i32, %arg1: i32) -> (i32, i32) {
    %c0_i32 = arith.constant 0 : i32
    %c0_i32_0 = arith.constant 0 : i32
    %c0_i32_1 = arith.constant 0 : i32
    return %c0_i32, %c0_i32_0 : i32, i32
  }
  func.func @transform_4(%arg0: i32, %arg1: i32) -> (i32, i32) {
    %c0_i32 = arith.constant 0 : i32
    %c0_i32_0 = arith.constant 0 : i32
    %c0_i32_1 = arith.constant 0 : i32
    return %c0_i32, %c0_i32_0 : i32, i32
  }
  func.func @transform_5(%arg0: i32, %arg1: i32) -> (i32, i32, i32) {
    %c0_i32 = arith.constant 0 : i32
    %c0_i32_0 = arith.constant 0 : i32
    %c0_i32_1 = arith.constant 0 : i32
    %c0_i32_2 = arith.constant 0 : i32
    return %c0_i32, %c0_i32_0, %c0_i32_1 : i32, i32, i32
  }
  func.func @transform_6(%arg0: i32, %arg1: i32) -> (i32, i32) {
    %c0_i32 = arith.constant 0 : i32
    %c0_i32_0 = arith.constant 0 : i32
    %c0_i32_1 = arith.constant 0 : i32
    return %c0_i32, %c0_i32_0 : i32, i32
  }
  func.func @transform_7(%arg0: i32, %arg1: i32) -> (i32, i32, i32, i32) {
    %c0_i32 = arith.constant 0 : i32
    %c0_i32_0 = arith.constant 0 : i32
    %c0_i32_1 = arith.constant 0 : i32
    return %arg1, %arg0, %c0_i32, %c0_i32_0 : i32, i32, i32, i32
  }
}

</mosaic_0001>

<llo_original>
// kernel: tpu_custom_call.1
$region0: #{tpu_custom_call.1}
  #allocation0 [shape = 'u32[]', space=smem, size = 0x4, offset = 0x4, fixed_abs, tag = 'smem constant byte address 0x4 - core index']
  #allocation1 [shape = 'u32[144,128]{1,0:T(1,128)}', space=vmem, size = 0x12000, scoped, tag = 'internal scratch']
  #allocation2 [shape = 'bf16[18,16,128]{2,1,0:T(16,128)(2,1)}', space=vmem, size = 0x12000, scoped, tag = 'scratch operand']
  #allocation3 [shape = 'bf16[18,16,384]{2,1,0:T(16,128)(2,1)}', space=vmem, size = 0x36000, scoped, tag = 'scratch operand']
  #allocation4 [shape = 'f32[256,128]{1,0:T(8,128)}', space=vmem, size = 0x20000, scoped, tag = 'scratch operand']
  %s0 = inlined_call_operand.hbm [shape: f32[2,16,16,128], index: 0, kind: input, shape index: {}]
  %s1 = inlined_call_operand.hbm [shape: f32[2,16,16,128], index: 1, kind: input, shape index: {}]
  %s2 = inlined_call_operand.hbm [shape: f32[2,16,16,128], index: 2, kind: input, shape index: {}]
  %s3 = inlined_call_operand.hbm [shape: bf16[128,128], index: 3, kind: input, shape index: {}]
  %s4 = inlined_call_operand.vmem [shape: f32[1,128], index: 4, kind: input, shape index: {}]
  %s5 = inlined_call_operand.hbm [shape: bf16[3,384,128], index: 5, kind: input, shape index: {}]
  %s6 = inlined_call_operand.vmem [shape: f32[1,128], index: 6, kind: input, shape index: {}]
  %s7 = inlined_call_operand.hbm [shape: f32[2,16,16,128], index: 7, kind: output, shape index: {}]
  %s8 = sld [smem:[#allocation0]]
  $region85: #{tpu_custom_call.1} parent=0
    _
  %s10 = ssub.s32 1, %s8
  %s11 = scalar_select 0, %s10, %s8
  $region1: #{tpu_custom_call.1} parent=0
    #allocation5 [shape = 'u8[262144]{0}', space=vmem, size = 0x40000, scoped, tag = 'input window, operand 0']
    #allocation6 [shape = 's32[2]{0}', space=sflag, size = 0x8, scoped, tag = 'scoped memory for tpu_custom_call.1']
    #allocation7 [shape = 's32[2]{0}', space=sflag, size = 0x8, scoped, tag = 'scoped memory for tpu_custom_call.1']
    #allocation8 [shape = 'u8[16384]{0}', space=vmem, size = 0x4000, scoped, tag = 'input window, operand 1']
    #allocation9 [shape = 's32[2]{0}', space=sflag, size = 0x8, scoped, tag = 'scoped memory for tpu_custom_call.1']
    #allocation10 [shape = 'u8[16384]{0}', space=vmem, size = 0x4000, scoped, tag = 'input window, operand 2']
    #allocation11 [shape = 'u8[32768]{0}', space=vmem, size = 0x8000, scoped, tag = 'input window, operand 3, single buffered']
    #allocation12 [shape = 's32[1]{0}', space=sflag, size = 0x4, scoped, tag = 'scoped memory for tpu_custom_call.1']
    #allocation13 [shape = 'u8[294912]{0}', space=vmem, size = 0x48000, scoped, tag = 'input window, operand 5, single buffered']
    #allocation14 [shape = 'u8[262144]{0}', space=vmem, size = 0x40000, scoped, tag = 'output window, operand 0']
    %12 = vsyncpa [#allocation6], 0
    %s13 = scalar_lea.sflag [#allocation6], 1
    %14 = vsyncpa %s13, 0
    %15 = vsyncpa [#allocation9], 0
    %s16 = scalar_lea.sflag [#allocation9], 1
    %17 = vsyncpa %s16, 0
    %18 = vsyncpa [#allocation12], 0
    %19 = vsyncpa [#allocation7], 0
    %s20 = scalar_lea.sflag [#allocation7], 1
    %21 = vsyncpa %s20, 0
    loop: start=0, step=1, limit=4
    $region2: #{tpu_custom_call.1} parent=1 // loop_pre_header
      _
    $region3: #{tpu_custom_call.1} parent=1 // loop_header
      %s23 = sphi 0, %s27
      %p24 = scmp.ge.s32.totalorder %s23, 4
      %s30 = sphi 0, %s42
      %s31 = sphi 0, %s38
      %s32 = sphi 0, %s30
      %s33 = sphi 0, %s31
      %s34 = sphi 0, %s32
      %s35 = sphi 0, %s33
      %s47 = sphi 0, %s49
      %s50 = sphi 0, %s47
      %s51 = sphi 0, %s50
      %s67 = sphi 0, %s51
      %s83 = sphi 0, %s85
      %s86 = sphi 0, %s83
      %s87 = sphi 0, %s86
      %s103 = sphi 0, %s87
      %s119 = sphi 0, %s121
      %s122 = sphi 0, %s119
      %s123 = sphi 0, %s122
      %s139 = sphi 0, %s123
      %s143 = sphi 0, %s143
      %s145 = sphi 0, %s143
      %s146 = sphi 0, %s145
      %s160 = sphi 0, %s146
      %s164 = sphi 0, %s164
      %s166 = sphi 0, %s164
      %s167 = sphi 0, %s166
      %s181 = sphi 0, %s167
      %s185 = sphi 0, %s185
      %s187 = sphi 0, %s185
      %s188 = sphi 0, %s187
      %s202 = sphi 0, %s188
      %s206 = sphi 0, %s206
      %s208 = sphi 0, %s206
      %s209 = sphi 0, %s208
      %s223 = sphi 0, %s209
      %s231 = sphi 0, %s233
      %s234 = sphi 0, %s231
      %s235 = sphi 0, %s234
      %s251 = sphi 0, %s235
    $region4: #{tpu_custom_call.1} parent=1 // loop_header_branch
      %26 = sbr.rel (%p24) target = $region8
    $region5: #{tpu_custom_call.1} parent=1 // loop_body
      %s28 = ssub.s32 %s23, 1
      %s29 = ssub.s32 %s23, 2
      %s36 = sadd.s32 1, %s31
      %p37 = scmp.ge.s32.totalorder %s36, 2
      %s38 = scalar_select %p37, 0, %s36
      %s39 = sadd.s32 1, %s30
      %s40 = scalar_select %p37, %s39, %s30
      %p41 = scmp.ge.s32.totalorder %s40, 1
      %s42 = scalar_select %p41, 0, %s40
      %s43 = ssub.s32 %s31, %s38
      %s44 = ssub.s32 %s30, %s42
      %s45 = sor.u32 %s43, %s44
      %p46 = scmp.eq.s32.totalorder %s45, 0
      %s48 = sadd.s32 %s47, 1
      %s49 = scalar_select %p46, %s47, %s48
      %p52 = pneg %p46
      %p53 = scmp.eq.s32.totalorder %s23, 1
      %p54 = por %p52, %p53
      %p55 = scmp.ne.s32.totalorder %s47, %s50
      %p56 = scmp.eq.s32.totalorder %s23, 0
      %p57 = por %p55, %p56
      %p58 = scmp.ne.s32.totalorder %s47, %s50
      %p59 = scmp.eq.s32.totalorder %s28, 1
      %p60 = por %p58, %p59
      %p61 = scmp.ne.s32.totalorder %s50, %s51
      %p62 = scmp.eq.s32.totalorder %s28, 0
      %p63 = por %p61, %p62
      %p64 = scmp.ne.s32.totalorder %s50, %s51
      %p65 = scmp.eq.s32.totalorder %s29, 1
      %p66 = por %p64, %p65
      %p68 = scmp.ne.s32.totalorder %s51, %s67
      %p69 = scmp.eq.s32.totalorder %s29, 0
      %p70 = por %p68, %p69
      %s71 = smul.u32 %s30, 16
      %s72 = ssub.s32 %s71, 1
      %p73 = scmp.gt.s32.totalorder %s72, 0
      %s74 = scalar_select %p73, %s72, 0
      %s75 = smul.u32 %s42, 16
      %s76 = ssub.s32 %s75, 1
      %p77 = scmp.gt.s32.totalorder %s76, 0
      %s78 = scalar_select %p77, %s76, 0
      %s79 = ssub.s32 %s31, %s38
      %s80 = ssub.s32 %s74, %s78
      %s81 = sor.u32 %s79, %s80
      %p82 = scmp.eq.s32.totalorder %s81, 0
      %s84 = sadd.s32 %s83, 1
      %s85 = scalar_select %p82, %s83, %s84
      %p88 = pneg %p82
      %p89 = scmp.eq.s32.totalorder %s23, 1
      %p90 = por %p88, %p89
      %p91 = scmp.ne.s32.totalorder %s83, %s86
      %p92 = scmp.eq.s32.totalorder %s23, 0
      %p93 = por %p91, %p92
      %p94 = scmp.ne.s32.totalorder %s83, %s86
      %p95 = scmp.eq.s32.totalorder %s28, 1
      %p96 = por %p94, %p95
      %p97 = scmp.ne.s32.totalorder %s86, %s87
      %p98 = scmp.eq.s32.totalorder %s28, 0
      %p99 = por %p97, %p98
      %p100 = scmp.ne.s32.totalorder %s86, %s87
      %p101 = scmp.eq.s32.totalorder %s29, 1
      %p102 = por %p100, %p101
      %p104 = scmp.ne.s32.totalorder %s87, %s103
      %p105 = scmp.eq.s32.totalorder %s29, 0
      %p106 = por %p104, %p105
      %s107 = sadd.s32 %s30, 1
      %s108 = smul.u32 %s107, 16
      %p109 = scmp.lt.s32.totalorder %s108, 15
      %s110 = scalar_select %p109, %s108, 15
      %s111 = sadd.s32 %s42, 1
      %s112 = smul.u32 %s111, 16
      %p113 = scmp.lt.s32.totalorder %s112, 15
      %s114 = scalar_select %p113, %s112, 15
      %s115 = ssub.s32 %s31, %s38
      %s116 = ssub.s32 %s110, %s114
      %s117 = sor.u32 %s115, %s116
      %p118 = scmp.eq.s32.totalorder %s117, 0
      %s120 = sadd.s32 %s119, 1
      %s121 = scalar_select %p118, %s119, %s120
      %p124 = pneg %p118
      %p125 = scmp.eq.s32.totalorder %s23, 1
      %p126 = por %p124, %p125
      %p127 = scmp.ne.s32.totalorder %s119, %s122
      %p128 = scmp.eq.s32.totalorder %s23, 0
      %p129 = por %p127, %p128
      %p130 = scmp.ne.s32.totalorder %s119, %s122
      %p131 = scmp.eq.s32.totalorder %s28, 1
      %p132 = por %p130, %p131
      %p133 = scmp.ne.s32.totalorder %s122, %s123
      %p134 = scmp.eq.s32.totalorder %s28, 0
      %p135 = por %p133, %p134
      %p136 = scmp.ne.s32.totalorder %s122, %s123
      %p137 = scmp.eq.s32.totalorder %s29, 1
      %p138 = por %p136, %p137
      %p140 = scmp.ne.s32.totalorder %s123, %s139
      %p141 = scmp.eq.s32.totalorder %s29, 0
      %p142 = por %p140, %p141
      %s144 = sadd.s32 %s143, 1
      %p147 = scmp.eq.s32.totalorder %s23, 1
      %p148 = scmp.ne.s32.totalorder %s143, %s145
      %p149 = scmp.eq.s32.totalorder %s23, 0
      %p150 = por %p148, %p149
      %p151 = scmp.ne.s32.totalorder %s143, %s145
      %p152 = scmp.eq.s32.totalorder %s28, 1
      %p153 = por %p151, %p152
      %p154 = scmp.ne.s32.totalorder %s145, %s146
      %p155 = scmp.eq.s32.totalorder %s28, 0
      %p156 = por %p154, %p155
      %p157 = scmp.ne.s32.totalorder %s145, %s146
      %p158 = scmp.eq.s32.totalorder %s29, 1
      %p159 = por %p157, %p158
      %p161 = scmp.ne.s32.totalorder %s146, %s160
      %p162 = scmp.eq.s32.totalorder %s29, 0
      %p163 = por %p161, %p162
      %s165 = sadd.s32 %s164, 1
      %p168 = scmp.eq.s32.totalorder %s23, 1
      %p169 = scmp.ne.s32.totalorder %s164, %s166
      %p170 = scmp.eq.s32.totalorder %s23, 0
      %p171 = por %p169, %p170
      %p172 = scmp.ne.s32.totalorder %s164, %s166
      %p173 = scmp.eq.s32.totalorder %s28, 1
      %p174 = por %p172, %p173
      %p175 = scmp.ne.s32.totalorder %s166, %s167
      %p176 = scmp.eq.s32.totalorder %s28, 0
      %p177 = por %p175, %p176
      %p178 = scmp.ne.s32.totalorder %s166, %s167
      %p179 = scmp.eq.s32.totalorder %s29, 1
      %p180 = por %p178, %p179
      %p182 = scmp.ne.s32.totalorder %s167, %s181
      %p183 = scmp.eq.s32.totalorder %s29, 0
      %p184 = por %p182, %p183
      %s186 = sadd.s32 %s185, 1
      %p189 = scmp.eq.s32.totalorder %s23, 1
      %p190 = scmp.ne.s32.totalorder %s185, %s187
      %p191 = scmp.eq.s32.totalorder %s23, 0
      %p192 = por %p190, %p191
      %p193 = scmp.ne.s32.totalorder %s185, %s187
      %p194 = scmp.eq.s32.totalorder %s28, 1
      %p195 = por %p193, %p194
      %p196 = scmp.ne.s32.totalorder %s187, %s188
      %p197 = scmp.eq.s32.totalorder %s28, 0
      %p198 = por %p196, %p197
      %p199 = scmp.ne.s32.totalorder %s187, %s188
      %p200 = scmp.eq.s32.totalorder %s29, 1
      %p201 = por %p199, %p200
      %p203 = scmp.ne.s32.totalorder %s188, %s202
      %p204 = scmp.eq.s32.totalorder %s29, 0
      %p205 = por %p203, %p204
      %s207 = sadd.s32 %s206, 1
      %p210 = scmp.eq.s32.totalorder %s23, 1
      %p211 = scmp.ne.s32.totalorder %s206, %s208
      %p212 = scmp.eq.s32.totalorder %s23, 0
      %p213 = por %p211, %p212
      %p214 = scmp.ne.s32.totalorder %s206, %s208
      %p215 = scmp.eq.s32.totalorder %s28, 1
      %p216 = por %p214, %p215
      %p217 = scmp.ne.s32.totalorder %s208, %s209
      %p218 = scmp.eq.s32.totalorder %s28, 0
      %p219 = por %p217, %p218
      %p220 = scmp.ne.s32.totalorder %s208, %s209
      %p221 = scmp.eq.s32.totalorder %s29, 1
      %p222 = por %p220, %p221
      %p224 = scmp.ne.s32.totalorder %s209, %s223
      %p225 = scmp.eq.s32.totalorder %s29, 0
      %p226 = por %p224, %p225
      %s227 = ssub.s32 %s31, %s38
      %s228 = ssub.s32 %s30, %s42
      %s229 = sor.u32 %s227, %s228
      %p230 = scmp.eq.s32.totalorder %s229, 0
      %s232 = sadd.s32 %s231, 1
      %s233 = scalar_select %p230, %s231, %s232
      %p236 = pneg %p230
      %p237 = scmp.eq.s32.totalorder %s23, 1
      %p238 = por %p236, %p237
      %p239 = scmp.ne.s32.totalorder %s231, %s234
      %p240 = scmp.eq.s32.totalorder %s23, 0
      %p241 = por %p239, %p240
      %p242 = scmp.ne.s32.totalorder %s231, %s234
      %p243 = scmp.eq.s32.totalorder %s28, 1
      %p244 = por %p242, %p243
      %p245 = scmp.ne.s32.totalorder %s234, %s235
      %p246 = scmp.eq.s32.totalorder %s28, 0
      %p247 = por %p245, %p246
      %p248 = scmp.ne.s32.totalorder %s234, %s235
      %p249 = scmp.eq.s32.totalorder %s29, 1
      %p250 = por %p248, %p249
      %p252 = scmp.ne.s32.totalorder %s235, %s251
      %p253 = scmp.eq.s32.totalorder %s29, 0
      %p254 = por %p252, %p253
      %p255 = scmp.le.s32.totalorder 1, %s23
      %p256 = scmp.lt.s32.totalorder %s23, 3
      %p257 = pnand %p255, %p256
      %p258 = pneg %p257
      // Predicated region
      $region9: #{tpu_custom_call.1} parent=5 // pred_check
        _
      $region10: #{tpu_custom_call.1} parent=5 // pred_check_branch
        %260 = sbr.rel (%p257) target = $region12
      $region11: #{tpu_custom_call.1} parent=5 // pred_region
        %s261 = ssub.s32 %s23, 1
        // Predicated region
        $region13: #{tpu_custom_call.1} parent=11 // pred_check
          %p262 = pneg %p156
        $region14: #{tpu_custom_call.1} parent=11 // pred_check_branch
          %264 = sbr.rel (%p262) target = $region16
        $region15: #{tpu_custom_call.1} parent=11 // pred_region
          %s266 = ssub.s32 1024, 1024
          %267 = vsyncadd [#allocation12], %s266
          %s268 = sshll.u32 [#allocation11], 4
          %s269 = int_to_ptr.vmem [resolvable:$true] %s268
          %274 = dma.hbm_to_vmem [thread:$0]  %s3, 1024, %s269, [#allocation12], 64, 64, 4
        $region16: #{tpu_custom_call.1} parent=11 // pred_fallthru
          _
        // Predicated region
        $region17: #{tpu_custom_call.1} parent=11 // pred_check
          %p275 = pneg %p177
        $region18: #{tpu_custom_call.1} parent=11 // pred_check_branch
          %277 = sbr.rel (%p275) target = $region20
        $region19: #{tpu_custom_call.1} parent=11 // pred_region
          _
        $region20: #{tpu_custom_call.1} parent=11 // pred_fallthru
          _
        // Predicated region
        $region21: #{tpu_custom_call.1} parent=11 // pred_check
          %p278 = pneg %p198
        $region22: #{tpu_custom_call.1} parent=11 // pred_check_branch
          %280 = sbr.rel (%p278) target = $region24
        $region23: #{tpu_custom_call.1} parent=11 // pred_region
          %s282 = ssub.s32 9216, 9216
          %283 = vsyncadd [#allocation12], %s282
          %s284 = sshll.u32 [#allocation13], 4
          %s285 = int_to_ptr.vmem [resolvable:$true] %s284
          %290 = dma.hbm_to_vmem [thread:$0]  %s5, 9216, %s285, [#allocation12], 64, 64, 4
        $region24: #{tpu_custom_call.1} parent=11 // pred_fallthru
          _
        // Predicated region
        $region25: #{tpu_custom_call.1} parent=11 // pred_check
          %p291 = pneg %p219
        $region26: #{tpu_custom_call.1} parent=11 // pred_check_branch
          %293 = sbr.rel (%p291) target = $region28
        $region27: #{tpu_custom_call.1} parent=11 // pred_region
          _
        $region28: #{tpu_custom_call.1} parent=11 // pred_fallthru
          _
      $region12: #{tpu_custom_call.1} parent=5 // pred_fallthru
        _
      %p294 = scmp.lt.s32.totalorder %s23, 2
      // Predicated region
      $region29: #{tpu_custom_call.1} parent=5 // pred_check
        %p295 = pneg %p294
      $region30: #{tpu_custom_call.1} parent=5 // pred_check_branch
        %297 = sbr.rel (%p295) target = $region32
      $region31: #{tpu_custom_call.1} parent=5 // pred_region
        // Predicated region
        $region33: #{tpu_custom_call.1} parent=31 // pred_check
          %p298 = pneg %p57
        $region34: #{tpu_custom_call.1} parent=31 // pred_check_branch
          %300 = sbr.rel (%p298) target = $region36
        $region35: #{tpu_custom_call.1} parent=31 // pred_region
          %s301 = sand.u32 %s47, 1
          %s302 = scalar_lea.sflag [#allocation6], %s301
          %s303 = sand.u32 %s47, 1
          %s304 = smul.addr %s303, 256
          %s305 = scalar_lea.vmem [#allocation5], %s304
          %s306 = smul.u32 16, %s30
          %s308 = ssub.s32 4096, 4096
          %309 = vsyncadd %s302, %s308
          %s310 = smul.addr %s306, 2
          %s311 = smul.addr %s31, 32
          %s312 = sadd.s32 %s310, %s311
          %s313 = smul.addr %s312, 128
          %s314 = scalar_lea.hbm %s0, %s313
          %s315 = sshll.u32 %s305, 4
          %s316 = int_to_ptr.vmem [resolvable:$true] %s315
          %321 = dma.hbm_to_vmem [thread:$0]  %s314, 4096, %s316, %s302, 128, 128, 8
        $region36: #{tpu_custom_call.1} parent=31 // pred_fallthru
          _
        // Predicated region
        $region37: #{tpu_custom_call.1} parent=31 // pred_check
          %p322 = pneg %p93
        $region38: #{tpu_custom_call.1} parent=31 // pred_check_branch
          %324 = sbr.rel (%p322) target = $region40
        $region39: #{tpu_custom_call.1} parent=31 // pred_region
          %s325 = sand.u32 %s23, 1
          %s326 = scalar_lea.sflag [#allocation9], %s325
          %s327 = sand.u32 %s83, 1
          %s328 = smul.addr %s327, 16
          %s329 = scalar_lea.vmem [#allocation8], %s328
          %s330 = smul.u32 %s30, 16
          %s331 = ssub.s32 %s330, 1
          %p332 = scmp.gt.s32.totalorder %s331, 0
          %s333 = scalar_select %p332, %s331, 0
          %s335 = ssub.s32 256, 256
          %336 = vsyncadd %s326, %s335
          %s337 = smul.addr %s333, 2
          %s338 = smul.addr %s31, 32
          %s339 = sadd.s32 %s337, %s338
          %s340 = smul.addr %s339, 128
          %s341 = scalar_lea.hbm %s1, %s340
          %s342 = sshll.u32 %s329, 4
          %s343 = int_to_ptr.vmem [resolvable:$true] %s342
          %348 = dma.hbm_to_vmem [thread:$0]  %s341, 256, %s343, %s326, 128, 128, 8
        $region40: #{tpu_custom_call.1} parent=31 // pred_fallthru
          _
        // Predicated region
        $region41: #{tpu_custom_call.1} parent=31 // pred_check
          %p349 = pneg %p129
        $region42: #{tpu_custom_call.1} parent=31 // pred_check_branch
          %351 = sbr.rel (%p349) target = $region44
        $region43: #{tpu_custom_call.1} parent=31 // pred_region
          %s352 = sand.u32 %s23, 1
          %s353 = scalar_lea.sflag [#allocation9], %s352
          %s354 = sand.u32 %s119, 1
          %s355 = smul.addr %s354, 16
          %s356 = scalar_lea.vmem [#allocation10], %s355
          %s357 = sadd.s32 %s30, 1
          %s358 = smul.u32 %s357, 16
          %p359 = scmp.lt.s32.totalorder %s358, 15
          %s360 = scalar_select %p359, %s358, 15
          %s362 = ssub.s32 256, 256
          %363 = vsyncadd %s353, %s362
          %s364 = smul.addr %s360, 2
          %s365 = smul.addr %s31, 32
          %s366 = sadd.s32 %s364, %s365
          %s367 = smul.addr %s366, 128
          %s368 = scalar_lea.hbm %s2, %s367
          %s369 = sshll.u32 %s356, 4
          %s370 = int_to_ptr.vmem [resolvable:$true] %s369
          %375 = dma.hbm_to_vmem [thread:$0]  %s368, 256, %s370, %s353, 128, 128, 8
        $region44: #{tpu_custom_call.1} parent=31 // pred_fallthru
          _
      $region32: #{tpu_custom_call.1} parent=5 // pred_fallthru
        _
      %p376 = scmp.le.s32.totalorder 1, %s23
      %p377 = scmp.lt.s32.totalorder %s23, 3
      %p378 = pnand %p376, %p377
      %p379 = pneg %p378
      // Predicated region
      $region45: #{tpu_custom_call.1} parent=5 // pred_check
        _
      $region46: #{tpu_custom_call.1} parent=5 // pred_check_branch
        %381 = sbr.rel (%p378) target = $region48
      $region47: #{tpu_custom_call.1} parent=5 // pred_region
        %s382 = ssub.s32 %s23, 1
        %s383 = sand.u32 %s50, 1
        %s384 = scalar_lea.sflag [#allocation6], %s383
        %s385 = sand.u32 %s50, 1
        %s386 = smul.addr %s385, 256
        %s387 = scalar_lea.vmem [#allocation5], %s386
        // Predicated region
        $region49: #{tpu_custom_call.1} parent=47 // pred_check
          %p388 = pneg %p63
        $region50: #{tpu_custom_call.1} parent=47 // pred_check_branch
          %390 = sbr.rel (%p388) target = $region52
        $region51: #{tpu_custom_call.1} parent=47 // pred_region
          %391 = dma.done %s384, 4096
        $region52: #{tpu_custom_call.1} parent=47 // pred_fallthru
          _
        %s392 = sand.u32 %s28, 1
        %s393 = scalar_lea.sflag [#allocation9], %s392
        %s394 = sand.u32 %s86, 1
        %s395 = smul.addr %s394, 16
        %s396 = scalar_lea.vmem [#allocation8], %s395
        // Predicated region
        $region53: #{tpu_custom_call.1} parent=47 // pred_check
          %p397 = pneg %p99
        $region54: #{tpu_custom_call.1} parent=47 // pred_check_branch
          %399 = sbr.rel (%p397) target = $region56
        $region55: #{tpu_custom_call.1} parent=47 // pred_region
          %400 = dma.done %s393, 256
        $region56: #{tpu_custom_call.1} parent=47 // pred_fallthru
          _
        %s401 = sand.u32 %s28, 1
        %s402 = scalar_lea.sflag [#allocation9], %s401
        %s403 = sand.u32 %s122, 1
        %s404 = smul.addr %s403, 16
        %s405 = scalar_lea.vmem [#allocation10], %s404
        // Predicated region
        $region57: #{tpu_custom_call.1} parent=47 // pred_check
          %p406 = pneg %p135
        $region58: #{tpu_custom_call.1} parent=47 // pred_check_branch
          %408 = sbr.rel (%p406) target = $region60
        $region59: #{tpu_custom_call.1} parent=47 // pred_region
          %409 = dma.done %s402, 256
        $region60: #{tpu_custom_call.1} parent=47 // pred_fallthru
          _
        // Predicated region
        $region61: #{tpu_custom_call.1} parent=47 // pred_check
          %p410 = pneg %p156
        $region62: #{tpu_custom_call.1} parent=47 // pred_check_branch
          %412 = sbr.rel (%p410) target = $region64
        $region63: #{tpu_custom_call.1} parent=47 // pred_region
          %413 = dma.done [#allocation12], 1024
        $region64: #{tpu_custom_call.1} parent=47 // pred_fallthru
          _
        // Predicated region
        $region65: #{tpu_custom_call.1} parent=47 // pred_check
          %p414 = pneg %p198
        $region66: #{tpu_custom_call.1} parent=47 // pred_check_branch
          %416 = sbr.rel (%p414) target = $region68
        $region67: #{tpu_custom_call.1} parent=47 // pred_region
          %417 = dma.done [#allocation12], 9216
        $region68: #{tpu_custom_call.1} parent=47 // pred_fallthru
          _
        %s418 = sand.u32 %s50, 1
        %s419 = scalar_lea.sflag [#allocation6], %s418
        %s420 = sand.u32 %s50, 1
        %s421 = smul.addr %s420, 256
        %s422 = scalar_lea.vmem [#allocation5], %s421
        %p423 = pneg %p63
        %p424 = pneg %p60
        %s425 = sand.u32 %s28, 1
        %s426 = scalar_lea.sflag [#allocation9], %s425
        %s427 = sand.u32 %s86, 1
        %s428 = smul.addr %s427, 16
        %s429 = scalar_lea.vmem [#allocation8], %s428
        %p430 = pneg %p99
        %p431 = pneg %p96
        %s432 = sand.u32 %s28, 1
        %s433 = scalar_lea.sflag [#allocation9], %s432
        %s434 = sand.u32 %s122, 1
        %s435 = smul.addr %s434, 16
        %s436 = scalar_lea.vmem [#allocation10], %s435
        %p437 = pneg %p135
        %p438 = pneg %p132
        %p439 = pneg %p156
        %p440 = pneg %p153
        %p441 = pneg %p177
        %p442 = pneg %p174
        %p443 = pneg %p198
        %p444 = pneg %p195
        %p445 = pneg %p219
        %p446 = pneg %p216
        %p447 = pneg %p247
        %p448 = pneg %p244
        %s449 = sand.u32 %s234, 1
        %s450 = scalar_lea.sflag [#allocation7], %s449
        %s451 = sand.u32 %s234, 1
        %s452 = smul.addr %s451, 256
        %s453 = scalar_lea.vmem [#allocation14], %s452
        %s454 = smul.u32 16, %s32
        %s455 = smul.u32 %s32, 16
        %s456 = ssub.s32 %s455, 1
        %p457 = scmp.gt.s32.totalorder %s456, 0
        %s458 = scalar_select %p457, %s456, 0
        %s459 = sadd.s32 %s32, 1
        %s460 = smul.u32 %s459, 16
        %p461 = scmp.lt.s32.totalorder %s460, 15
        %s462 = scalar_select %p461, %s460, 15
        %s463 = smul.u32 16, %s32
        %v465 = vld [vmem:[%s396] sm:$0xff]
        %v466 = vld [vmem:[%s396 + $0x8] sm:$0xff]
        %v467 = vpack.c.bf16 %v466, %v465
        %468 = vst [vmem:[#allocation2] sm:$0xff] %v467
        %v469 = vld [vmem:[%s387] sm:$0xff]
        %v470 = vld [vmem:[%s387 + $0x8] sm:$0xff]
        %v471 = vld [vmem:[%s387 + $0x10] sm:$0xff]
        %v472 = vld [vmem:[%s387 + $0x18] sm:$0xff]
        %v473 = vld [vmem:[%s387 + $0x20] sm:$0xff]
        %v474 = vld [vmem:[%s387 + $0x28] sm:$0xff]
        %v475 = vld [vmem:[%s387 + $0x30] sm:$0xff]
        %v476 = vld [vmem:[%s387 + $0x38] sm:$0xff]
        %v477 = vld [vmem:[%s387 + $0x40] sm:$0xff]
        %v478 = vld [vmem:[%s387 + $0x48] sm:$0xff]
        %v479 = vld [vmem:[%s387 + $0x50] sm:$0xff]
        %v480 = vld [vmem:[%s387 + $0x58] sm:$0xff]
        %v481 = vld [vmem:[%s387 + $0x60] sm:$0xff]
        %v482 = vld [vmem:[%s387 + $0x68] sm:$0xff]
        %v483 = vld [vmem:[%s387 + $0x70] sm:$0xff]
        %v484 = vld [vmem:[%s387 + $0x78] sm:$0xff]
        %v485 = vld [vmem:[%s387 + $0x80] sm:$0xff]
        %v486 = vld [vmem:[%s387 + $0x88] sm:$0xff]
        %v487 = vld [vmem:[%s387 + $0x90] sm:$0xff]
        %v488 = vld [vmem:[%s387 + $0x98] sm:$0xff]
        %v489 = vld [vmem:[%s387 + $0xa0] sm:$0xff]
        %v490 = vld [vmem:[%s387 + $0xa8] sm:$0xff]
        %v491 = vld [vmem:[%s387 + $0xb0] sm:$0xff]
        %v492 = vld [vmem:[%s387 + $0xb8] sm:$0xff]
        %v493 = vld [vmem:[%s387 + $0xc0] sm:$0xff]
        %v494 = vld [vmem:[%s387 + $0xc8] sm:$0xff]
        %v495 = vld [vmem:[%s387 + $0xd0] sm:$0xff]
        %v496 = vld [vmem:[%s387 + $0xd8] sm:$0xff]
        %v497 = vld [vmem:[%s387 + $0xe0] sm:$0xff]
        %v498 = vld [vmem:[%s387 + $0xe8] sm:$0xff]
        %v499 = vld [vmem:[%s387 + $0xf0] sm:$0xff]
        %v500 = vld [vmem:[%s387 + $0xf8] sm:$0xff]
        %v501 = vpack.c.bf16 %v470, %v469
        %v502 = vpack.c.bf16 %v472, %v471
        %v503 = vpack.c.bf16 %v474, %v473
        %v504 = vpack.c.bf16 %v476, %v475
        %v505 = vpack.c.bf16 %v478, %v477
        %v506 = vpack.c.bf16 %v480, %v479
        %v507 = vpack.c.bf16 %v482, %v481
        %v508 = vpack.c.bf16 %v484, %v483
        %v509 = vpack.c.bf16 %v486, %v485
        %v510 = vpack.c.bf16 %v488, %v487
        %v511 = vpack.c.bf16 %v490, %v489
        %v512 = vpack.c.bf16 %v492, %v491
        %v513 = vpack.c.bf16 %v494, %v493
        %v514 = vpack.c.bf16 %v496, %v495
        %v515 = vpack.c.bf16 %v498, %v497
        %v516 = vpack.c.bf16 %v500, %v499
        %s517 = scalar_lea.vmem [#allocation2], 8
        %518 = vst [vmem:[%s517] sm:$0xff] %v501
        %519 = vst [vmem:[%s517 + $0x8] sm:$0xff] %v502
        %520 = vst [vmem:[%s517 + $0x10] sm:$0xff] %v503
        %521 = vst [vmem:[%s517 + $0x18] sm:$0xff] %v504
        %522 = vst [vmem:[%s517 + $0x20] sm:$0xff] %v505
        %523 = vst [vmem:[%s517 + $0x28] sm:$0xff] %v506
        %524 = vst [vmem:[%s517 + $0x30] sm:$0xff] %v507
        %525 = vst [vmem:[%s517 + $0x38] sm:$0xff] %v508
        %526 = vst [vmem:[%s517 + $0x40] sm:$0xff] %v509
        %527 = vst [vmem:[%s517 + $0x48] sm:$0xff] %v510
        %528 = vst [vmem:[%s517 + $0x50] sm:$0xff] %v511
        %529 = vst [vmem:[%s517 + $0x58] sm:$0xff] %v512
        %530 = vst [vmem:[%s517 + $0x60] sm:$0xff] %v513
        %531 = vst [vmem:[%s517 + $0x68] sm:$0xff] %v514
        %532 = vst [vmem:[%s517 + $0x70] sm:$0xff] %v515
        %533 = vst [vmem:[%s517 + $0x78] sm:$0xff] %v516
        %v534 = vld [vmem:[%s405] sm:$0xff]
        %v535 = vld [vmem:[%s405 + $0x8] sm:$0xff]
        %v536 = vpack.c.bf16 %v535, %v534
        %s537 = scalar_lea.vmem [#allocation2], 136
        %538 = vst [vmem:[%s537] sm:$0xff] %v536
        %v539 = vld [vmem:[#allocation2] sm:$0xff]
        %v540 = vld [vmem:[#allocation2 + $0x8] sm:$0xff]
        %v541 = vld [vmem:[#allocation2 + $0x10] sm:$0xff]
        %v542 = vld [vmem:[#allocation2 + $0x18] sm:$0xff]
        %v543 = vld [vmem:[#allocation2 + $0x20] sm:$0xff]
        %v544 = vld [vmem:[#allocation2 + $0x28] sm:$0xff]
        %v545 = vld [vmem:[#allocation2 + $0x30] sm:$0xff]
        %v546 = vld [vmem:[#allocation2 + $0x38] sm:$0xff]
        %v547 = vld [vmem:[#allocation2 + $0x40] sm:$0xff]
        %v548 = vld [vmem:[#allocation2 + $0x48] sm:$0xff]
        %v549 = vld [vmem:[#allocation2 + $0x50] sm:$0xff]
        %v550 = vld [vmem:[#allocation2 + $0x58] sm:$0xff]
        %v551 = vld [vmem:[#allocation2 + $0x60] sm:$0xff]
        %v552 = vld [vmem:[#allocation2 + $0x68] sm:$0xff]
        %v553 = vld [vmem:[#allocation2 + $0x70] sm:$0xff]
        %v554 = vld [vmem:[#allocation2 + $0x78] sm:$0xff]
        %v555 = vld [vmem:[#allocation2 + $0x80] sm:$0xff]
        %v556 = vld [vmem:[#allocation2 + $0x88] sm:$0xff]
        %v557 = vld [vmem:[#allocation11] sm:$0xf]
        %v558 = vld [vmem:[#allocation11 + $0x4] sm:$0xf]
        %v559 = vld [vmem:[#allocation11 + $0x8] sm:$0xf]
        %v560 = vld [vmem:[#allocation11 + $0xc] sm:$0xf]
        %v561 = vld [vmem:[#allocation11 + $0x10] sm:$0xf]
        %v562 = vld [vmem:[#allocation11 + $0x14] sm:$0xf]
        %v563 = vld [vmem:[#allocation11 + $0x18] sm:$0xf]
        %v564 = vld [vmem:[#allocation11 + $0x1c] sm:$0xf]
        %v565 = vld [vmem:[#allocation11 + $0x20] sm:$0xf]
        %v566 = vld [vmem:[#allocation11 + $0x24] sm:$0xf]
        %v567 = vld [vmem:[#allocation11 + $0x28] sm:$0xf]
        %v568 = vld [vmem:[#allocation11 + $0x2c] sm:$0xf]
        %v569 = vld [vmem:[#allocation11 + $0x30] sm:$0xf]
        %v570 = vld [vmem:[#allocation11 + $0x34] sm:$0xf]
        %v571 = vld [vmem:[#allocation11 + $0x38] sm:$0xf]
        %v572 = vld [vmem:[#allocation11 + $0x3c] sm:$0xf]
        %v573 = vld [vmem:[%s4] sm:$0x1]
        %v575 = vlaneseq
        %v576 = vshrl.u32 %v575, 7
        %v577 = vsub.s32 0, %v576
        %v578 = vrot.slane %v573, %v577
        %v596 = vunpack.c.l.b16 %v557
        %v597 = vunpack.c.l.b16 %v558
        %v598 = vunpack.c.l.b16 %v559
        %v599 = vunpack.c.l.b16 %v560
        %v600 = vunpack.c.l.b16 %v561
        %v601 = vunpack.c.l.b16 %v562
        %v602 = vunpack.c.l.b16 %v563
        %v603 = vunpack.c.l.b16 %v564
        %v604 = vunpack.c.l.b16 %v565
        %v605 = vunpack.c.l.b16 %v566
        %v606 = vunpack.c.l.b16 %v567
        %v607 = vunpack.c.l.b16 %v568
        %v608 = vunpack.c.l.b16 %v569
        %v609 = vunpack.c.l.b16 %v570
        %v610 = vunpack.c.l.b16 %v571
        %v611 = vunpack.c.l.b16 %v572
        %v612 = vpack.c.b16 %v597, %v596
        %v613 = vpack.c.b16 %v599, %v598
        %v614 = vpack.c.b16 %v601, %v600
        %v615 = vpack.c.b16 %v603, %v602
        %v616 = vpack.c.b16 %v605, %v604
        %v617 = vpack.c.b16 %v607, %v606
        %v618 = vpack.c.b16 %v609, %v608
        %v619 = vpack.c.b16 %v611, %v610
        %628 = vmatprep.subr.bf16.mxu0 0
        %629 = vmatpush1.bf16.msra.mxu0 %v612
        %630 = vmatprep.subr.bf16.mxu0 0
        %631 = vmatpush1.bf16.msra.mxu0 %v613
        %632 = vmatprep.subr.bf16.mxu0 0
        %633 = vmatpush1.bf16.msra.mxu0 %v614
        %634 = vmatprep.subr.bf16.mxu0 0
        %635 = vmatpush1.bf16.msra.mxu0 %v615
        %636 = vmatprep.subr.bf16.mxu0 0
        %637 = vmatpush1.bf16.msra.mxu0 %v616
        %638 = vmatprep.subr.bf16.mxu0 0
        %639 = vmatpush1.bf16.msra.mxu0 %v617
        %640 = vmatprep.subr.bf16.mxu0 0
        %641 = vmatpush1.bf16.msra.mxu0 %v618
        %642 = vmatprep.subr.bf16.mxu0 0
        %643 = vmatpush1.bf16.msra.mxu0 %v619
        %644 = vmatprep.subr.bf16.mxu0 0
        %645 = vmatpush1.bf16.msra.mxu0 0
        %646 = vmatprep.subr.bf16.mxu0 0
        %647 = vmatpush1.bf16.msra.mxu0 0
        %648 = vmatprep.subr.bf16.mxu0 0
        %649 = vmatpush1.bf16.msra.mxu0 0
        %650 = vmatprep.subr.bf16.mxu0 0
        %651 = vmatpush1.bf16.msra.mxu0 0
        %652 = vmatprep.subr.bf16.mxu0 0
        %653 = vmatpush1.bf16.msra.mxu0 0
        %654 = vmatprep.subr.bf16.mxu0 0
        %655 = vmatpush1.bf16.msra.mxu0 0
        %656 = vmatprep.subr.bf16.mxu0 0
        %657 = vmatpush1.bf16.msra.mxu0 0
        %658 = vmatprep.subr.bf16.mxu0 0
        %659 = vmatpush1.bf16.msra.mxu0 0
        %660 = vmatprep.mubr.bf16.mxu0 0
        %661 = vmatmul.mubr.bf16.gmra.mrb[0].mxu0 %v539
        %v662 = vpop.f32.mrb[0].mxu0
        %v663 = vadd.f32 %v578, %v662
        %v664 = vpop.f32.mrb[0].mxu0
        %v665 = vpop.f32.mrb[0].mxu0
        %v666 = vadd.f32 %v578, %v665
        %v667 = vpop.f32.mrb[0].mxu0
        %668 = vmatprep.mubr.bf16.mxu0 0
        %669 = vmatmul.mubr.bf16.gmra.mrb[0].mxu0 %v540
        %v670 = vpop.f32.mrb[0].mxu0
        %v671 = vadd.f32 %v578, %v670
        %v672 = vpop.f32.mrb[0].mxu0
        %v673 = vpop.f32.mrb[0].mxu0
        %v674 = vadd.f32 %v578, %v673
        %v675 = vpop.f32.mrb[0].mxu0
        %676 = vmatprep.mubr.bf16.mxu0 0
        %677 = vmatmul.mubr.bf16.gmra.mrb[0].mxu0 %v541
        %v678 = vpop.f32.mrb[0].mxu0
        %v679 = vadd.f32 %v578, %v678
        %v680 = vpop.f32.mrb[0].mxu0
        %v681 = vpop.f32.mrb[0].mxu0
        %v682 = vadd.f32 %v578, %v681
        %v683 = vpop.f32.mrb[0].mxu0
        %684 = vmatprep.mubr.bf16.mxu0 0
        %685 = vmatmul.mubr.bf16.gmra.mrb[0].mxu0 %v542
        %v686 = vpop.f32.mrb[0].mxu0
        %v687 = vadd.f32 %v578, %v686
        %v688 = vpop.f32.mrb[0].mxu0
        %v689 = vpop.f32.mrb[0].mxu0
        %v690 = vadd.f32 %v578, %v689
        %v691 = vpop.f32.mrb[0].mxu0
        %692 = vmatprep.mubr.bf16.mxu0 0
        %693 = vmatmul.mubr.bf16.gmra.mrb[0].mxu0 %v543
        %v694 = vpop.f32.mrb[0].mxu0
        %v695 = vadd.f32 %v578, %v694
        %v696 = vpop.f32.mrb[0].mxu0
        %v697 = vpop.f32.mrb[0].mxu0
        %v698 = vadd.f32 %v578, %v697
        %v699 = vpop.f32.mrb[0].mxu0
        %700 = vmatprep.mubr.bf16.mxu0 0
        %701 = vmatmul.mubr.bf16.gmra.mrb[0].mxu0 %v544
        %v702 = vpop.f32.mrb[0].mxu0
        %v703 = vadd.f32 %v578, %v702
        %v704 = vpop.f32.mrb[0].mxu0
        %v705 = vpop.f32.mrb[0].mxu0
        %v706 = vadd.f32 %v578, %v705
        %v707 = vpop.f32.mrb[0].mxu0
        %708 = vmatprep.mubr.bf16.mxu0 0
        %709 = vmatmul.mubr.bf16.gmra.mrb[0].mxu0 %v545
        %v710 = vpop.f32.mrb[0].mxu0
        %v711 = vadd.f32 %v578, %v710
        %v712 = vpop.f32.mrb[0].mxu0
        %v713 = vpop.f32.mrb[0].mxu0
        %v714 = vadd.f32 %v578, %v713
        %v715 = vpop.f32.mrb[0].mxu0
        %716 = vmatprep.mubr.bf16.mxu0 0
        %717 = vmatmul.mubr.bf16.gmra.mrb[0].mxu0 %v546
        %v718 = vpop.f32.mrb[0].mxu0
        %v719 = vadd.f32 %v578, %v718
        %v720 = vpop.f32.mrb[0].mxu0
        %v721 = vpop.f32.mrb[0].mxu0
        %v722 = vadd.f32 %v578, %v721
        %v723 = vpop.f32.mrb[0].mxu0
        %724 = vmatprep.mubr.bf16.mxu0 0
        %725 = vmatmul.mubr.bf16.gmra.mrb[0].mxu0 %v547
        %v726 = vpop.f32.mrb[0].mxu0
        %v727 = vadd.f32 %v578, %v726
        %v728 = vpop.f32.mrb[0].mxu0
        %v729 = vpop.f32.mrb[0].mxu0
        %v730 = vadd.f32 %v578, %v729
        %v731 = vpop.f32.mrb[0].mxu0
        %732 = vmatprep.mubr.bf16.mxu0 0
        %733 = vmatmul.mubr.bf16.gmra.mrb[0].mxu0 %v548
        %v734 = vpop.f32.mrb[0].mxu0
        %v735 = vadd.f32 %v578, %v734
        %v736 = vpop.f32.mrb[0].mxu0
        %v737 = vpop.f32.mrb[0].mxu0
        %v738 = vadd.f32 %v578, %v737
        %v739 = vpop.f32.mrb[0].mxu0
        %740 = vmatprep.mubr.bf16.mxu0 0
        %741 = vmatmul.mubr.bf16.gmra.mrb[0].mxu0 %v549
        %v742 = vpop.f32.mrb[0].mxu0
        %v743 = vadd.f32 %v578, %v742
        %v744 = vpop.f32.mrb[0].mxu0
        %v745 = vpop.f32.mrb[0].mxu0
        %v746 = vadd.f32 %v578, %v745
        %v747 = vpop.f32.mrb[0].mxu0
        %748 = vmatprep.mubr.bf16.mxu0 0
        %749 = vmatmul.mubr.bf16.gmra.mrb[0].mxu0 %v550
        %v750 = vpop.f32.mrb[0].mxu0
        %v751 = vadd.f32 %v578, %v750
        %v752 = vpop.f32.mrb[0].mxu0
        %v753 = vpop.f32.mrb[0].mxu0
        %v754 = vadd.f32 %v578, %v753
        %v755 = vpop.f32.mrb[0].mxu0
        %756 = vmatprep.mubr.bf16.mxu0 0
        %757 = vmatmul.mubr.bf16.gmra.mrb[0].mxu0 %v551
        %v758 = vpop.f32.mrb[0].mxu0
        %v759 = vadd.f32 %v578, %v758
        %v760 = vpop.f32.mrb[0].mxu0
        %v761 = vpop.f32.mrb[0].mxu0
        %v762 = vadd.f32 %v578, %v761
        %v763 = vpop.f32.mrb[0].mxu0
        %764 = vmatprep.mubr.bf16.mxu0 0
        %765 = vmatmul.mubr.bf16.gmra.mrb[0].mxu0 %v552
        %v766 = vpop.f32.mrb[0].mxu0
        %v767 = vadd.f32 %v578, %v766
        %v768 = vpop.f32.mrb[0].mxu0
        %v769 = vpop.f32.mrb[0].mxu0
        %v770 = vadd.f32 %v578, %v769
        %v771 = vpop.f32.mrb[0].mxu0
        %772 = vmatprep.mubr.bf16.mxu0 0
        %773 = vmatmul.mubr.bf16.gmra.mrb[0].mxu0 %v553
        %v774 = vpop.f32.mrb[0].mxu0
        %v775 = vadd.f32 %v578, %v774
        %v776 = vpop.f32.mrb[0].mxu0
        %v777 = vpop.f32.mrb[0].mxu0
        %v778 = vadd.f32 %v578, %v777
        %v779 = vpop.f32.mrb[0].mxu0
        %780 = vmatprep.mubr.bf16.mxu0 0
        %781 = vmatmul.mubr.bf16.gmra.mrb[0].mxu0 %v554
        %v782 = vpop.f32.mrb[0].mxu0
        %v783 = vadd.f32 %v578, %v782
        %v784 = vpop.f32.mrb[0].mxu0
        %v785 = vpop.f32.mrb[0].mxu0
        %v786 = vadd.f32 %v578, %v785
        %v787 = vpop.f32.mrb[0].mxu0
        %788 = vmatprep.mubr.bf16.mxu0 0
        %789 = vmatmul.mubr.bf16.gmra.mrb[0].mxu0 %v555
        %v790 = vpop.f32.mrb[0].mxu0
        %v791 = vadd.f32 %v578, %v790
        %v792 = vpop.f32.mrb[0].mxu0
        %v793 = vpop.f32.mrb[0].mxu0
        %v794 = vadd.f32 %v578, %v793
        %v795 = vpop.f32.mrb[0].mxu0
        %796 = vmatprep.mubr.bf16.mxu0 0
        %797 = vmatmul.mubr.bf16.gmra.mrb[0].mxu0 %v556
        %v798 = vpop.f32.mrb[0].mxu0
        %v799 = vadd.f32 %v578, %v798
        %v800 = vpop.f32.mrb[0].mxu0
        %v801 = vpop.f32.mrb[0].mxu0
        %v802 = vadd.f32 %v578, %v801
        %v803 = vpop.f32.mrb[0].mxu0
        %804 = vdwg.mxu0
        %v805 = vxor.u32 %v663, 2147483648
        %v806 = vxor.u32 %v666, 2147483648
        %v807 = vxor.u32 %v671, 2147483648
        %v808 = vxor.u32 %v674, 2147483648
        %v809 = vxor.u32 %v679, 2147483648
        %v810 = vxor.u32 %v682, 2147483648
        %v811 = vxor.u32 %v687, 2147483648
        %v812 = vxor.u32 %v690, 2147483648
        %v813 = vxor.u32 %v695, 2147483648
        %v814 = vxor.u32 %v698, 2147483648
        %v815 = vxor.u32 %v703, 2147483648
        %v816 = vxor.u32 %v706, 2147483648
        %v817 = vxor.u32 %v711, 2147483648
        %v818 = vxor.u32 %v714, 2147483648
        %v819 = vxor.u32 %v719, 2147483648
        %v820 = vxor.u32 %v722, 2147483648
        %v821 = vxor.u32 %v727, 2147483648
        %v822 = vxor.u32 %v730, 2147483648
        %v823 = vxor.u32 %v735, 2147483648
        %v824 = vxor.u32 %v738, 2147483648
        %v825 = vxor.u32 %v743, 2147483648
        %v826 = vxor.u32 %v746, 2147483648
        %v827 = vxor.u32 %v751, 2147483648
        %v828 = vxor.u32 %v754, 2147483648
        %v829 = vxor.u32 %v759, 2147483648
        %v830 = vxor.u32 %v762, 2147483648
        %v831 = vxor.u32 %v767, 2147483648
        %v832 = vxor.u32 %v770, 2147483648
        %v833 = vxor.u32 %v775, 2147483648
        %v834 = vxor.u32 %v778, 2147483648
        %v835 = vxor.u32 %v783, 2147483648
        %v836 = vxor.u32 %v786, 2147483648
        %v837 = vxor.u32 %v791, 2147483648
        %v838 = vxor.u32 %v794, 2147483648
        %v839 = vxor.u32 %v799, 2147483648
        %v840 = vxor.u32 %v802, 2147483648
        %v841 = vmul.f32 %v805, 1.442695
        %v842 = vpow.pop %v841
        %v843 = vmul.f32 %v806, 1.442695
        %v844 = vpow.pop %v843
        %v845 = vmul.f32 %v807, 1.442695
        %v846 = vpow.pop %v845
        %v847 = vmul.f32 %v808, 1.442695
        %v848 = vpow.pop %v847
        %v849 = vmul.f32 %v809, 1.442695
        %v850 = vpow.pop %v849
        %v851 = vmul.f32 %v810, 1.442695
        %v852 = vpow.pop %v851
        %v853 = vmul.f32 %v811, 1.442695
        %v854 = vpow.pop %v853
        %v855 = vmul.f32 %v812, 1.442695
        %v856 = vpow.pop %v855
        %v857 = vmul.f32 %v813, 1.442695
        %v858 = vpow.pop %v857
        %v859 = vmul.f32 %v814, 1.442695
        %v860 = vpow.pop %v859
        %v861 = vmul.f32 %v815, 1.442695
        %v862 = vpow.pop %v861
        %v863 = vmul.f32 %v816, 1.442695
        %v864 = vpow.pop %v863
        %v865 = vmul.f32 %v817, 1.442695
        %v866 = vpow.pop %v865
        %v867 = vmul.f32 %v818, 1.442695
        %v868 = vpow.pop %v867
        %v869 = vmul.f32 %v819, 1.442695
        %v870 = vpow.pop %v869
        %v871 = vmul.f32 %v820, 1.442695
        %v872 = vpow.pop %v871
        %v873 = vmul.f32 %v821, 1.442695
        %v874 = vpow.pop %v873
        %v875 = vmul.f32 %v822, 1.442695
        %v876 = vpow.pop %v875
        %v877 = vmul.f32 %v823, 1.442695
        %v878 = vpow.pop %v877
        %v879 = vmul.f32 %v824, 1.442695
        %v880 = vpow.pop %v879
        %v881 = vmul.f32 %v825, 1.442695
        %v882 = vpow.pop %v881
        %v883 = vmul.f32 %v826, 1.442695
        %v884 = vpow.pop %v883
        %v885 = vmul.f32 %v827, 1.442695
        %v886 = vpow.pop %v885
        %v887 = vmul.f32 %v828, 1.442695
        %v888 = vpow.pop %v887
        %v889 = vmul.f32 %v829, 1.442695
        %v890 = vpow.pop %v889
        %v891 = vmul.f32 %v830, 1.442695
        %v892 = vpow.pop %v891
        %v893 = vmul.f32 %v831, 1.442695
        %v894 = vpow.pop %v893
        %v895 = vmul.f32 %v832, 1.442695
        %v896 = vpow.pop %v895
        %v897 = vmul.f32 %v833, 1.442695
        %v898 = vpow.pop %v897
        %v899 = vmul.f32 %v834, 1.442695
        %v900 = vpow.pop %v899
        %v901 = vmul.f32 %v835, 1.442695
        %v902 = vpow.pop %v901
        %v903 = vmul.f32 %v836, 1.442695
        %v904 = vpow.pop %v903
        %v905 = vmul.f32 %v837, 1.442695
        %v906 = vpow.pop %v905
        %v907 = vmul.f32 %v838, 1.442695
        %v908 = vpow.pop %v907
        %v909 = vmul.f32 %v839, 1.442695
        %v910 = vpow.pop %v909
        %v911 = vmul.f32 %v840, 1.442695
        %v912 = vpow.pop %v911
        %v913 = vadd.f32 %v842, 1.0
        %v914 = vadd.f32 %v844, 1.0
        %v915 = vadd.f32 %v846, 1.0
        %v916 = vadd.f32 %v848, 1.0
        %v917 = vadd.f32 %v850, 1.0
        %v918 = vadd.f32 %v852, 1.0
        %v919 = vadd.f32 %v854, 1.0
        %v920 = vadd.f32 %v856, 1.0
        %v921 = vadd.f32 %v858, 1.0
        %v922 = vadd.f32 %v860, 1.0
        %v923 = vadd.f32 %v862, 1.0
        %v924 = vadd.f32 %v864, 1.0
        %v925 = vadd.f32 %v866, 1.0
        %v926 = vadd.f32 %v868, 1.0
        %v927 = vadd.f32 %v870, 1.0
        %v928 = vadd.f32 %v872, 1.0
        %v929 = vadd.f32 %v874, 1.0
        %v930 = vadd.f32 %v876, 1.0
        %v931 = vadd.f32 %v878, 1.0
        %v932 = vadd.f32 %v880, 1.0
        %v933 = vadd.f32 %v882, 1.0
        %v934 = vadd.f32 %v884, 1.0
        %v935 = vadd.f32 %v886, 1.0
        %v936 = vadd.f32 %v888, 1.0
        %v937 = vadd.f32 %v890, 1.0
        %v938 = vadd.f32 %v892, 1.0
        %v939 = vadd.f32 %v894, 1.0
        %v940 = vadd.f32 %v896, 1.0
        %v941 = vadd.f32 %v898, 1.0
        %v942 = vadd.f32 %v900, 1.0
        %v943 = vadd.f32 %v902, 1.0
        %v944 = vadd.f32 %v904, 1.0
        %v945 = vadd.f32 %v906, 1.0
        %v946 = vadd.f32 %v908, 1.0
        %v947 = vadd.f32 %v910, 1.0
        %v948 = vadd.f32 %v912, 1.0
        %v949 = vrcp.pop %v913
        %v950 = vmul.f32 1.0, %v949
        %v951 = vrcp.pop %v914
        %v952 = vmul.f32 1.0, %v951
        %v953 = vrcp.pop %v915
        %v954 = vmul.f32 1.0, %v953
        %v955 = vrcp.pop %v916
        %v956 = vmul.f32 1.0, %v955
        %v957 = vrcp.pop %v917
        %v958 = vmul.f32 1.0, %v957
        %v959 = vrcp.pop %v918
        %v960 = vmul.f32 1.0, %v959
        %v961 = vrcp.pop %v919
        %v962 = vmul.f32 1.0, %v961
        %v963 = vrcp.pop %v920
        %v964 = vmul.f32 1.0, %v963
        %v965 = vrcp.pop %v921
        %v966 = vmul.f32 1.0, %v965
        %v967 = vrcp.pop %v922
        %v968 = vmul.f32 1.0, %v967
        %v969 = vrcp.pop %v923
        %v970 = vmul.f32 1.0, %v969
        %v971 = vrcp.pop %v924
        %v972 = vmul.f32 1.0, %v971
        %v973 = vrcp.pop %v925
        %v974 = vmul.f32 1.0, %v973
        %v975 = vrcp.pop %v926
        %v976 = vmul.f32 1.0, %v975
        %v977 = vrcp.pop %v927
        %v978 = vmul.f32 1.0, %v977
        %v979 = vrcp.pop %v928
        %v980 = vmul.f32 1.0, %v979
        %v981 = vrcp.pop %v929
        %v982 = vmul.f32 1.0, %v981
        %v983 = vrcp.pop %v930
        %v984 = vmul.f32 1.0, %v983
        %v985 = vrcp.pop %v931
        %v986 = vmul.f32 1.0, %v985
        %v987 = vrcp.pop %v932
        %v988 = vmul.f32 1.0, %v987
        %v989 = vrcp.pop %v933
        %v990 = vmul.f32 1.0, %v989
        %v991 = vrcp.pop %v934
        %v992 = vmul.f32 1.0, %v991
        %v993 = vrcp.pop %v935
        %v994 = vmul.f32 1.0, %v993
        %v995 = vrcp.pop %v936
        %v996 = vmul.f32 1.0, %v995
        %v997 = vrcp.pop %v937
        %v998 = vmul.f32 1.0, %v997
        %v999 = vrcp.pop %v938
        %v1000 = vmul.f32 1.0, %v999
        %v1001 = vrcp.pop %v939
        %v1002 = vmul.f32 1.0, %v1001
        %v1003 = vrcp.pop %v940
        %v1004 = vmul.f32 1.0, %v1003
        %v1005 = vrcp.pop %v941
        %v1006 = vmul.f32 1.0, %v1005
        %v1007 = vrcp.pop %v942
        %v1008 = vmul.f32 1.0, %v1007
        %v1009 = vrcp.pop %v943
        %v1010 = vmul.f32 1.0, %v1009
        %v1011 = vrcp.pop %v944
        %v1012 = vmul.f32 1.0, %v1011
        %v1013 = vrcp.pop %v945
        %v1014 = vmul.f32 1.0, %v1013
        %v1015 = vrcp.pop %v946
        %v1016 = vmul.f32 1.0, %v1015
        %v1017 = vrcp.pop %v947
        %v1018 = vmul.f32 1.0, %v1017
        %v1019 = vrcp.pop %v948
        %v1020 = vmul.f32 1.0, %v1019
        %v1021 = vmul.f32 %v663, %v950
        %v1022 = vmul.f32 %v666, %v952
        %v1023 = vmul.f32 %v671, %v954
        %v1024 = vmul.f32 %v674, %v956
        %v1025 = vmul.f32 %v679, %v958
        %v1026 = vmul.f32 %v682, %v960
        %v1027 = vmul.f32 %v687, %v962
        %v1028 = vmul.f32 %v690, %v964
        %v1029 = vmul.f32 %v695, %v966
        %v1030 = vmul.f32 %v698, %v968
        %v1031 = vmul.f32 %v703, %v970
        %v1032 = vmul.f32 %v706, %v972
        %v1033 = vmul.f32 %v711, %v974
        %v1034 = vmul.f32 %v714, %v976
        %v1035 = vmul.f32 %v719, %v978
        %v1036 = vmul.f32 %v722, %v980
        %v1037 = vmul.f32 %v727, %v982
        %v1038 = vmul.f32 %v730, %v984
        %v1039 = vmul.f32 %v735, %v986
        %v1040 = vmul.f32 %v738, %v988
        %v1041 = vmul.f32 %v743, %v990
        %v1042 = vmul.f32 %v746, %v992
        %v1043 = vmul.f32 %v751, %v994
        %v1044 = vmul.f32 %v754, %v996
        %v1045 = vmul.f32 %v759, %v998
        %v1046 = vmul.f32 %v762, %v1000
        %v1047 = vmul.f32 %v767, %v1002
        %v1048 = vmul.f32 %v770, %v1004
        %v1049 = vmul.f32 %v775, %v1006
        %v1050 = vmul.f32 %v778, %v1008
        %v1051 = vmul.f32 %v783, %v1010
        %v1052 = vmul.f32 %v786, %v1012
        %v1053 = vmul.f32 %v791, %v1014
        %v1054 = vmul.f32 %v794, %v1016
        %v1055 = vmul.f32 %v799, %v1018
        %v1056 = vmul.f32 %v802, %v1020
        %v1057 = vpack.c.bf16 %v1022, %v1021
        %v1058 = vpack.c.bf16 %v1024, %v1023
        %v1059 = vpack.c.bf16 %v1026, %v1025
        %v1060 = vpack.c.bf16 %v1028, %v1027
        %v1061 = vpack.c.bf16 %v1030, %v1029
        %v1062 = vpack.c.bf16 %v1032, %v1031
        %v1063 = vpack.c.bf16 %v1034, %v1033
        %v1064 = vpack.c.bf16 %v1036, %v1035
        %v1065 = vpack.c.bf16 %v1038, %v1037
        %v1066 = vpack.c.bf16 %v1040, %v1039
        %v1067 = vpack.c.bf16 %v1042, %v1041
        %v1068 = vpack.c.bf16 %v1044, %v1043
        %v1069 = vpack.c.bf16 %v1046, %v1045
        %v1070 = vpack.c.bf16 %v1048, %v1047
        %v1071 = vpack.c.bf16 %v1050, %v1049
        %v1072 = vpack.c.bf16 %v1052, %v1051
        %v1073 = vpack.c.bf16 %v1054, %v1053
        %v1074 = vpack.c.bf16 %v1056, %v1055
        %1075 = vst [vmem:[#allocation3 + $0x8] sm:$0xff] %v1057
        %1076 = vst [vmem:[#allocation3 + $0x20] sm:$0xff] %v1058
        %1077 = vst [vmem:[#allocation3 + $0x38] sm:$0xff] %v1059
        %1078 = vst [vmem:[#allocation3 + $0x50] sm:$0xff] %v1060
        %1079 = vst [vmem:[#allocation3 + $0x68] sm:$0xff] %v1061
        %1080 = vst [vmem:[#allocation3 + $0x80] sm:$0xff] %v1062
        %1081 = vst [vmem:[#allocation3 + $0x98] sm:$0xff] %v1063
        %1082 = vst [vmem:[#allocation3 + $0xb0] sm:$0xff] %v1064
        %1083 = vst [vmem:[#allocation3 + $0xc8] sm:$0xff] %v1065
        %1084 = vst [vmem:[#allocation3 + $0xe0] sm:$0xff] %v1066
        %1085 = vst [vmem:[#allocation3 + $0xf8] sm:$0xff] %v1067
        %1086 = vst [vmem:[#allocation3 + $0x110] sm:$0xff] %v1068
        %1087 = vst [vmem:[#allocation3 + $0x128] sm:$0xff] %v1069
        %1088 = vst [vmem:[#allocation3 + $0x140] sm:$0xff] %v1070
        %1089 = vst [vmem:[#allocation3 + $0x158] sm:$0xff] %v1071
        %1090 = vst [vmem:[#allocation3 + $0x170] sm:$0xff] %v1072
        %1091 = vst [vmem:[#allocation3 + $0x188] sm:$0xff] %v1073
        %1092 = vst [vmem:[#allocation3 + $0x1a0] sm:$0xff] %v1074
        %v1094 = vshrl.u32 %v1057, 16
        %v1096 = vrot.slane %v1094, 7
        %v1097 = vshll.u32 %v1057, 16
        %v1099 = vor.u32 %v1096, %v1097
        %v1101 = vshrl.u32 %v1058, 16
        %v1103 = vrot.slane %v1101, 7
        %v1104 = vshll.u32 %v1058, 16
        %v1106 = vor.u32 %v1103, %v1104
        %v1108 = vshrl.u32 %v1059, 16
        %v1110 = vrot.slane %v1108, 7
        %v1111 = vshll.u32 %v1059, 16
        %v1113 = vor.u32 %v1110, %v1111
        %v1115 = vshrl.u32 %v1060, 16
        %v1117 = vrot.slane %v1115, 7
        %v1118 = vshll.u32 %v1060, 16
        %v1120 = vor.u32 %v1117, %v1118
        %v1122 = vshrl.u32 %v1061, 16
        %v1124 = vrot.slane %v1122, 7
        %v1125 = vshll.u32 %v1061, 16
        %v1127 = vor.u32 %v1124, %v1125
        %v1129 = vshrl.u32 %v1062, 16
        %v1131 = vrot.slane %v1129, 7
        %v1132 = vshll.u32 %v1062, 16
        %v1134 = vor.u32 %v1131, %v1132
        %v1136 = vshrl.u32 %v1063, 16
        %v1138 = vrot.slane %v1136, 7
        %v1139 = vshll.u32 %v1063, 16
        %v1141 = vor.u32 %v1138, %v1139
        %v1143 = vshrl.u32 %v1064, 16
        %v1145 = vrot.slane %v1143, 7
        %v1146 = vshll.u32 %v1064, 16
        %v1148 = vor.u32 %v1145, %v1146
        %v1150 = vshrl.u32 %v1065, 16
        %v1152 = vrot.slane %v1150, 7
        %v1153 = vshll.u32 %v1065, 16
        %v1155 = vor.u32 %v1152, %v1153
        %v1157 = vshrl.u32 %v1066, 16
        %v1159 = vrot.slane %v1157, 7
        %v1160 = vshll.u32 %v1066, 16
        %v1162 = vor.u32 %v1159, %v1160
        %v1164 = vshrl.u32 %v1067, 16
        %v1166 = vrot.slane %v1164, 7
        %v1167 = vshll.u32 %v1067, 16
        %v1169 = vor.u32 %v1166, %v1167
        %v1171 = vshrl.u32 %v1068, 16
        %v1173 = vrot.slane %v1171, 7
        %v1174 = vshll.u32 %v1068, 16
        %v1176 = vor.u32 %v1173, %v1174
        %v1178 = vshrl.u32 %v1069, 16
        %v1180 = vrot.slane %v1178, 7
        %v1181 = vshll.u32 %v1069, 16
        %v1183 = vor.u32 %v1180, %v1181
        %v1185 = vshrl.u32 %v1070, 16
        %v1187 = vrot.slane %v1185, 7
        %v1188 = vshll.u32 %v1070, 16
        %v1190 = vor.u32 %v1187, %v1188
        %v1192 = vshrl.u32 %v1071, 16
        %v1194 = vrot.slane %v1192, 7
        %v1195 = vshll.u32 %v1071, 16
        %v1197 = vor.u32 %v1194, %v1195
        %v1199 = vshrl.u32 %v1072, 16
        %v1201 = vrot.slane %v1199, 7
        %v1202 = vshll.u32 %v1072, 16
        %v1204 = vor.u32 %v1201, %v1202
        %v1206 = vshrl.u32 %v1073, 16
        %v1208 = vrot.slane %v1206, 7
        %v1209 = vshll.u32 %v1073, 16
        %v1211 = vor.u32 %v1208, %v1209
        %v1213 = vshrl.u32 %v1074, 16
        %v1215 = vrot.slane %v1213, 7
        %v1216 = vshll.u32 %v1074, 16
        %v1218 = vor.u32 %v1215, %v1216
        %vm1237 = vcmask 1047552
        %vm1238 = vsmask.f32 7938
        %vm1239 = vmand %vm1237, %vm1238
        %v1240 = vld [vmem:[#allocation3] sm:$0xff]
        %v1241 = vsel %vm1239, %v1099, %v1240
        %1242 = vst [vmem:[#allocation3] sm:$0xff] %v1241
        %v1243 = vld [vmem:[#allocation3 + $0x18] sm:$0xff]
        %v1244 = vsel %vm1239, %v1106, %v1243
        %1245 = vst [vmem:[#allocation3 + $0x18] sm:$0xff] %v1244
        %v1246 = vld [vmem:[#allocation3 + $0x30] sm:$0xff]
        %v1247 = vsel %vm1239, %v1113, %v1246
        %1248 = vst [vmem:[#allocation3 + $0x30] sm:$0xff] %v1247
        %v1249 = vld [vmem:[#allocation3 + $0x48] sm:$0xff]
        %v1250 = vsel %vm1239, %v1120, %v1249
        %1251 = vst [vmem:[#allocation3 + $0x48] sm:$0xff] %v1250
        %v1252 = vld [vmem:[#allocation3 + $0x60] sm:$0xff]
        %v1253 = vsel %vm1239, %v1127, %v1252
        %1254 = vst [vmem:[#allocation3 + $0x60] sm:$0xff] %v1253
        %v1255 = vld [vmem:[#allocation3 + $0x78] sm:$0xff]
        %v1256 = vsel %vm1239, %v1134, %v1255
        %1257 = vst [vmem:[#allocation3 + $0x78] sm:$0xff] %v1256
        %v1258 = vld [vmem:[#allocation3 + $0x90] sm:$0xff]
        %v1259 = vsel %vm1239, %v1141, %v1258
        %1260 = vst [vmem:[#allocation3 + $0x90] sm:$0xff] %v1259
        %v1261 = vld [vmem:[#allocation3 + $0xa8] sm:$0xff]
        %v1262 = vsel %vm1239, %v1148, %v1261
        %1263 = vst [vmem:[#allocation3 + $0xa8] sm:$0xff] %v1262
        %v1264 = vld [vmem:[#allocation3 + $0xc0] sm:$0xff]
        %v1265 = vsel %vm1239, %v1155, %v1264
        %1266 = vst [vmem:[#allocation3 + $0xc0] sm:$0xff] %v1265
        %v1267 = vld [vmem:[#allocation3 + $0xd8] sm:$0xff]
        %v1268 = vsel %vm1239, %v1162, %v1267
        %1269 = vst [vmem:[#allocation3 + $0xd8] sm:$0xff] %v1268
        %v1270 = vld [vmem:[#allocation3 + $0xf0] sm:$0xff]
        %v1271 = vsel %vm1239, %v1169, %v1270
        %1272 = vst [vmem:[#allocation3 + $0xf0] sm:$0xff] %v1271
        %v1273 = vld [vmem:[#allocation3 + $0x108] sm:$0xff]
        %v1274 = vsel %vm1239, %v1176, %v1273
        %1275 = vst [vmem:[#allocation3 + $0x108] sm:$0xff] %v1274
        %v1276 = vld [vmem:[#allocation3 + $0x120] sm:$0xff]
        %v1277 = vsel %vm1239, %v1183, %v1276
        %1278 = vst [vmem:[#allocation3 + $0x120] sm:$0xff] %v1277
        %v1279 = vld [vmem:[#allocation3 + $0x138] sm:$0xff]
        %v1280 = vsel %vm1239, %v1190, %v1279
        %1281 = vst [vmem:[#allocation3 + $0x138] sm:$0xff] %v1280
        %v1282 = vld [vmem:[#allocation3 + $0x150] sm:$0xff]
        %v1283 = vsel %vm1239, %v1197, %v1282
        %1284 = vst [vmem:[#allocation3 + $0x150] sm:$0xff] %v1283
        %v1285 = vld [vmem:[#allocation3 + $0x168] sm:$0xff]
        %v1286 = vsel %vm1239, %v1204, %v1285
        %1287 = vst [vmem:[#allocation3 + $0x168] sm:$0xff] %v1286
        %v1288 = vld [vmem:[#allocation3 + $0x180] sm:$0xff]
        %v1289 = vsel %vm1239, %v1211, %v1288
        %1290 = vst [vmem:[#allocation3 + $0x180] sm:$0xff] %v1289
        %v1291 = vld [vmem:[#allocation3 + $0x198] sm:$0xff]
        %v1292 = vsel %vm1239, %v1218, %v1291
        %1293 = vst [vmem:[#allocation3 + $0x198] sm:$0xff] %v1292
        %vm1294 = vcmask 1040384
        %vm1295 = vsmask.f32 256
        %vm1296 = vmand %vm1294, %vm1295
        %v1297 = vld [vmem:[#allocation3] sm:$0x1]
        %v1298 = vsel %vm1296, 0, %v1297
        %1299 = vst [vmem:[#allocation3] sm:$0x1] %v1298
        %v1300 = vld [vmem:[#allocation3 + $0x18] sm:$0x1]
        %v1301 = vsel %vm1296, 0, %v1300
        %1302 = vst [vmem:[#allocation3 + $0x18] sm:$0x1] %v1301
        %v1303 = vld [vmem:[#allocation3 + $0x30] sm:$0x1]
        %v1304 = vsel %vm1296, 0, %v1303
        %1305 = vst [vmem:[#allocation3 + $0x30] sm:$0x1] %v1304
        %v1306 = vld [vmem:[#allocation3 + $0x48] sm:$0x1]
        %v1307 = vsel %vm1296, 0, %v1306
        %1308 = vst [vmem:[#allocation3 + $0x48] sm:$0x1] %v1307
        %v1309 = vld [vmem:[#allocation3 + $0x60] sm:$0x1]
        %v1310 = vsel %vm1296, 0, %v1309
        %1311 = vst [vmem:[#allocation3 + $0x60] sm:$0x1] %v1310
        %v1312 = vld [vmem:[#allocation3 + $0x78] sm:$0x1]
        %v1313 = vsel %vm1296, 0, %v1312
        %1314 = vst [vmem:[#allocation3 + $0x78] sm:$0x1] %v1313
        %v1315 = vld [vmem:[#allocation3 + $0x90] sm:$0x1]
        %v1316 = vsel %vm1296, 0, %v1315
        %1317 = vst [vmem:[#allocation3 + $0x90] sm:$0x1] %v1316
        %v1318 = vld [vmem:[#allocation3 + $0xa8] sm:$0x1]
        %v1319 = vsel %vm1296, 0, %v1318
        %1320 = vst [vmem:[#allocation3 + $0xa8] sm:$0x1] %v1319
        %v1321 = vld [vmem:[#allocation3 + $0xc0] sm:$0x1]
        %v1322 = vsel %vm1296, 0, %v1321
        %1323 = vst [vmem:[#allocation3 + $0xc0] sm:$0x1] %v1322
        %v1324 = vld [vmem:[#allocation3 + $0xd8] sm:$0x1]
        %v1325 = vsel %vm1296, 0, %v1324
        %1326 = vst [vmem:[#allocation3 + $0xd8] sm:$0x1] %v1325
        %v1327 = vld [vmem:[#allocation3 + $0xf0] sm:$0x1]
        %v1328 = vsel %vm1296, 0, %v1327
        %1329 = vst [vmem:[#allocation3 + $0xf0] sm:$0x1] %v1328
        %v1330 = vld [vmem:[#allocation3 + $0x108] sm:$0x1]
        %v1331 = vsel %vm1296, 0, %v1330
        %1332 = vst [vmem:[#allocation3 + $0x108] sm:$0x1] %v1331
        %v1333 = vld [vmem:[#allocation3 + $0x120] sm:$0x1]
        %v1334 = vsel %vm1296, 0, %v1333
        %1335 = vst [vmem:[#allocation3 + $0x120] sm:$0x1] %v1334
        %v1336 = vld [vmem:[#allocation3 + $0x138] sm:$0x1]
        %v1337 = vsel %vm1296, 0, %v1336
        %1338 = vst [vmem:[#allocation3 + $0x138] sm:$0x1] %v1337
        %v1339 = vld [vmem:[#allocation3 + $0x150] sm:$0x1]
        %v1340 = vsel %vm1296, 0, %v1339
        %1341 = vst [vmem:[#allocation3 + $0x150] sm:$0x1] %v1340
        %v1342 = vld [vmem:[#allocation3 + $0x168] sm:$0x1]
        %v1343 = vsel %vm1296, 0, %v1342
        %1344 = vst [vmem:[#allocation3 + $0x168] sm:$0x1] %v1343
        %v1345 = vld [vmem:[#allocation3 + $0x180] sm:$0x1]
        %v1346 = vsel %vm1296, 0, %v1345
        %1347 = vst [vmem:[#allocation3 + $0x180] sm:$0x1] %v1346
        %v1348 = vld [vmem:[#allocation3 + $0x198] sm:$0x1]
        %v1349 = vsel %vm1296, 0, %v1348
        %1350 = vst [vmem:[#allocation3 + $0x198] sm:$0x1] %v1349
        %v1351 = vrot.slane %v1097, 1
        %v1352 = vor.u32 %v1094, %v1351
        %v1353 = vrot.slane %v1104, 1
        %v1354 = vor.u32 %v1101, %v1353
        %v1355 = vrot.slane %v1111, 1
        %v1356 = vor.u32 %v1108, %v1355
        %v1357 = vrot.slane %v1118, 1
        %v1358 = vor.u32 %v1115, %v1357
        %v1359 = vrot.slane %v1125, 1
        %v1360 = vor.u32 %v1122, %v1359
        %v1361 = vrot.slane %v1132, 1
        %v1362 = vor.u32 %v1129, %v1361
        %v1363 = vrot.slane %v1139, 1
        %v1364 = vor.u32 %v1136, %v1363
        %v1365 = vrot.slane %v1146, 1
        %v1366 = vor.u32 %v1143, %v1365
        %v1367 = vrot.slane %v1153, 1
        %v1368 = vor.u32 %v1150, %v1367
        %v1369 = vrot.slane %v1160, 1
        %v1370 = vor.u32 %v1157, %v1369
        %v1371 = vrot.slane %v1167, 1
        %v1372 = vor.u32 %v1164, %v1371
        %v1373 = vrot.slane %v1174, 1
        %v1374 = vor.u32 %v1171, %v1373
        %v1375 = vrot.slane %v1181, 1
        %v1376 = vor.u32 %v1178, %v1375
        %v1377 = vrot.slane %v1188, 1
        %v1378 = vor.u32 %v1185, %v1377
        %v1379 = vrot.slane %v1195, 1
        %v1380 = vor.u32 %v1192, %v1379
        %v1381 = vrot.slane %v1202, 1
        %v1382 = vor.u32 %v1199, %v1381
        %v1383 = vrot.slane %v1209, 1
        %v1384 = vor.u32 %v1206, %v1383
        %v1385 = vrot.slane %v1216, 1
        %v1386 = vor.u32 %v1213, %v1385
        %vm1405 = vsmask.f32 7424
        %vm1406 = vmand %vm1237, %vm1405
        %v1407 = vld [vmem:[#allocation3 + $0x10] sm:$0xff]
        %v1408 = vsel %vm1406, %v1352, %v1407
        %1409 = vst [vmem:[#allocation3 + $0x10] sm:$0xff] %v1408
        %v1410 = vld [vmem:[#allocation3 + $0x28] sm:$0xff]
        %v1411 = vsel %vm1406, %v1354, %v1410
        %1412 = vst [vmem:[#allocation3 + $0x28] sm:$0xff] %v1411
        %v1413 = vld [vmem:[#allocation3 + $0x40] sm:$0xff]
        %v1414 = vsel %vm1406, %v1356, %v1413
        %1415 = vst [vmem:[#allocation3 + $0x40] sm:$0xff] %v1414
        %v1416 = vld [vmem:[#allocation3 + $0x58] sm:$0xff]
        %v1417 = vsel %vm1406, %v1358, %v1416
        %1418 = vst [vmem:[#allocation3 + $0x58] sm:$0xff] %v1417
        %v1419 = vld [vmem:[#allocation3 + $0x70] sm:$0xff]
        %v1420 = vsel %vm1406, %v1360, %v1419
        %1421 = vst [vmem:[#allocation3 + $0x70] sm:$0xff] %v1420
        %v1422 = vld [vmem:[#allocation3 + $0x88] sm:$0xff]
        %v1423 = vsel %vm1406, %v1362, %v1422
        %1424 = vst [vmem:[#allocation3 + $0x88] sm:$0xff] %v1423
        %v1425 = vld [vmem:[#allocation3 + $0xa0] sm:$0xff]
        %v1426 = vsel %vm1406, %v1364, %v1425
        %1427 = vst [vmem:[#allocation3 + $0xa0] sm:$0xff] %v1426
        %v1428 = vld [vmem:[#allocation3 + $0xb8] sm:$0xff]
        %v1429 = vsel %vm1406, %v1366, %v1428
        %1430 = vst [vmem:[#allocation3 + $0xb8] sm:$0xff] %v1429
        %v1431 = vld [vmem:[#allocation3 + $0xd0] sm:$0xff]
        %v1432 = vsel %vm1406, %v1368, %v1431
        %1433 = vst [vmem:[#allocation3 + $0xd0] sm:$0xff] %v1432
        %v1434 = vld [vmem:[#allocation3 + $0xe8] sm:$0xff]
        %v1435 = vsel %vm1406, %v1370, %v1434
        %1436 = vst [vmem:[#allocation3 + $0xe8] sm:$0xff] %v1435
        %v1437 = vld [vmem:[#allocation3 + $0x100] sm:$0xff]
        %v1438 = vsel %vm1406, %v1372, %v1437
        %1439 = vst [vmem:[#allocation3 + $0x100] sm:$0xff] %v1438
        %v1440 = vld [vmem:[#allocation3 + $0x118] sm:$0xff]
        %v1441 = vsel %vm1406, %v1374, %v1440
        %1442 = vst [vmem:[#allocation3 + $0x118] sm:$0xff] %v1441
        %v1443 = vld [vmem:[#allocation3 + $0x130] sm:$0xff]
        %v1444 = vsel %vm1406, %v1376, %v1443
        %1445 = vst [vmem:[#allocation3 + $0x130] sm:$0xff] %v1444
        %v1446 = vld [vmem:[#allocation3 + $0x148] sm:$0xff]
        %v1447 = vsel %vm1406, %v1378, %v1446
        %1448 = vst [vmem:[#allocation3 + $0x148] sm:$0xff] %v1447
        %v1449 = vld [vmem:[#allocation3 + $0x160] sm:$0xff]
        %v1450 = vsel %vm1406, %v1380, %v1449
        %1451 = vst [vmem:[#allocation3 + $0x160] sm:$0xff] %v1450
        %v1452 = vld [vmem:[#allocation3 + $0x178] sm:$0xff]
        %v1453 = vsel %vm1406, %v1382, %v1452
        %1454 = vst [vmem:[#allocation3 + $0x178] sm:$0xff] %v1453
        %v1455 = vld [vmem:[#allocation3 + $0x190] sm:$0xff]
        %v1456 = vsel %vm1406, %v1384, %v1455
        %1457 = vst [vmem:[#allocation3 + $0x190] sm:$0xff] %v1456
        %v1458 = vld [vmem:[#allocation3 + $0x1a8] sm:$0xff]
        %v1459 = vsel %vm1406, %v1386, %v1458
        %1460 = vst [vmem:[#allocation3 + $0x1a8] sm:$0xff] %v1459
        %vm1461 = vcmask 1047559
        %vm1462 = vsmask.f32 7966
        %vm1463 = vmand %vm1461, %vm1462
        %v1464 = vld [vmem:[#allocation3 + $0x10] sm:$0x80]
        %v1465 = vsel %vm1463, 0, %v1464
        %1466 = vst [vmem:[#allocation3 + $0x10] sm:$0x80] %v1465
        %v1467 = vld [vmem:[#allocation3 + $0x28] sm:$0x80]
        %v1468 = vsel %vm1463, 0, %v1467
        %1469 = vst [vmem:[#allocation3 + $0x28] sm:$0x80] %v1468
        %v1470 = vld [vmem:[#allocation3 + $0x40] sm:$0x80]
        %v1471 = vsel %vm1463, 0, %v1470
        %1472 = vst [vmem:[#allocation3 + $0x40] sm:$0x80] %v1471
        %v1473 = vld [vmem:[#allocation3 + $0x58] sm:$0x80]
        %v1474 = vsel %vm1463, 0, %v1473
        %1475 = vst [vmem:[#allocation3 + $0x58] sm:$0x80] %v1474
        %v1476 = vld [vmem:[#allocation3 + $0x70] sm:$0x80]
        %v1477 = vsel %vm1463, 0, %v1476
        %1478 = vst [vmem:[#allocation3 + $0x70] sm:$0x80] %v1477
        %v1479 = vld [vmem:[#allocation3 + $0x88] sm:$0x80]
        %v1480 = vsel %vm1463, 0, %v1479
        %1481 = vst [vmem:[#allocation3 + $0x88] sm:$0x80] %v1480
        %v1482 = vld [vmem:[#allocation3 + $0xa0] sm:$0x80]
        %v1483 = vsel %vm1463, 0, %v1482
        %1484 = vst [vmem:[#allocation3 + $0xa0] sm:$0x80] %v1483
        %v1485 = vld [vmem:[#allocation3 + $0xb8] sm:$0x80]
        %v1486 = vsel %vm1463, 0, %v1485
        %1487 = vst [vmem:[#allocation3 + $0xb8] sm:$0x80] %v1486
        %v1488 = vld [vmem:[#allocation3 + $0xd0] sm:$0x80]
        %v1489 = vsel %vm1463, 0, %v1488
        %1490 = vst [vmem:[#allocation3 + $0xd0] sm:$0x80] %v1489
        %v1491 = vld [vmem:[#allocation3 + $0xe8] sm:$0x80]
        %v1492 = vsel %vm1463, 0, %v1491
        %1493 = vst [vmem:[#allocation3 + $0xe8] sm:$0x80] %v1492
        %v1494 = vld [vmem:[#allocation3 + $0x100] sm:$0x80]
        %v1495 = vsel %vm1463, 0, %v1494
        %1496 = vst [vmem:[#allocation3 + $0x100] sm:$0x80] %v1495
        %v1497 = vld [vmem:[#allocation3 + $0x118] sm:$0x80]
        %v1498 = vsel %vm1463, 0, %v1497
        %1499 = vst [vmem:[#allocation3 + $0x118] sm:$0x80] %v1498
        %v1500 = vld [vmem:[#allocation3 + $0x130] sm:$0x80]
        %v1501 = vsel %vm1463, 0, %v1500
        %1502 = vst [vmem:[#allocation3 + $0x130] sm:$0x80] %v1501
        %v1503 = vld [vmem:[#allocation3 + $0x148] sm:$0x80]
        %v1504 = vsel %vm1463, 0, %v1503
        %1505 = vst [vmem:[#allocation3 + $0x148] sm:$0x80] %v1504
        %v1506 = vld [vmem:[#allocation3 + $0x160] sm:$0x80]
        %v1507 = vsel %vm1463, 0, %v1506
        %1508 = vst [vmem:[#allocation3 + $0x160] sm:$0x80] %v1507
        %v1509 = vld [vmem:[#allocation3 + $0x178] sm:$0x80]
        %v1510 = vsel %vm1463, 0, %v1509
        %1511 = vst [vmem:[#allocation3 + $0x178] sm:$0x80] %v1510
        %v1512 = vld [vmem:[#allocation3 + $0x190] sm:$0x80]
        %v1513 = vsel %vm1463, 0, %v1512
        %1514 = vst [vmem:[#allocation3 + $0x190] sm:$0x80] %v1513
        %v1515 = vld [vmem:[#allocation3 + $0x1a8] sm:$0x80]
        %v1516 = vsel %vm1463, 0, %v1515
        %1517 = vst [vmem:[#allocation3 + $0x1a8] sm:$0x80] %v1516
        %p1518 = scmp.eq.s32.totalorder %s32, 0
        // Predicated region
        $region69: #{tpu_custom_call.1} parent=47 // pred_check
          %p1519 = pneg %p1518
        $region70: #{tpu_custom_call.1} parent=47 // pred_check_branch
          %1521 = sbr.rel (%p1519) target = $region72
        $region71: #{tpu_custom_call.1} parent=47 // pred_region
          %1522 = vst [vmem:[#allocation3] sm:$0xff] 0
          %1523 = vst [vmem:[#allocation3 + $0x8] sm:$0xff] 0
          %1524 = vst [vmem:[#allocation3 + $0x10] sm:$0xff] 0
          %s1525 = scalar_lea.vmem [#allocation3], 408
          %1526 = vst [vmem:[%s1525] sm:$0xff] 0
          %1527 = vst [vmem:[%s1525 + $0x8] sm:$0xff] 0
          %1528 = vst [vmem:[%s1525 + $0x10] sm:$0xff] 0
        $region72: #{tpu_custom_call.1} parent=47 // pred_fallthru
          _
        %v1529 = vld [vmem:[#allocation3] sm:$0xff]
        %v1530 = vld [vmem:[#allocation3 + $0x8] sm:$0xff]
        %v1531 = vld [vmem:[#allocation3 + $0x10] sm:$0xff]
        %v1532 = vld [vmem:[#allocation3 + $0x18] sm:$0xff]
        %v1533 = vld [vmem:[#allocation3 + $0x20] sm:$0xff]
        %v1534 = vld [vmem:[#allocation3 + $0x28] sm:$0xff]
        %v1535 = vld [vmem:[#allocation3 + $0x30] sm:$0xff]
        %v1536 = vld [vmem:[#allocation3 + $0x38] sm:$0xff]
        %v1537 = vld [vmem:[#allocation3 + $0x40] sm:$0xff]
        %v1538 = vld [vmem:[#allocation3 + $0x48] sm:$0xff]
        %v1539 = vld [vmem:[#allocation3 + $0x50] sm:$0xff]
        %v1540 = vld [vmem:[#allocation3 + $0x58] sm:$0xff]
        %v1541 = vld [vmem:[#allocation3 + $0x60] sm:$0xff]
        %v1542 = vld [vmem:[#allocation3 + $0x68] sm:$0xff]
        %v1543 = vld [vmem:[#allocation3 + $0x70] sm:$0xff]
        %v1544 = vld [vmem:[#allocation3 + $0x78] sm:$0xff]
        %v1545 = vld [vmem:[#allocation3 + $0x80] sm:$0xff]
        %v1546 = vld [vmem:[#allocation3 + $0x88] sm:$0xff]
        %v1547 = vld [vmem:[#allocation3 + $0x90] sm:$0xff]
        %v1548 = vld [vmem:[#allocation3 + $0x98] sm:$0xff]
        %v1549 = vld [vmem:[#allocation3 + $0xa0] sm:$0xff]
        %v1550 = vld [vmem:[#allocation3 + $0xa8] sm:$0xff]
        %v1551 = vld [vmem:[#allocation3 + $0xb0] sm:$0xff]
        %v1552 = vld [vmem:[#allocation3 + $0xb8] sm:$0xff]
        %v1553 = vld [vmem:[#allocation3 + $0xc0] sm:$0xff]
        %v1554 = vld [vmem:[#allocation3 + $0xc8] sm:$0xff]
        %v1555 = vld [vmem:[#allocation3 + $0xd0] sm:$0xff]
        %v1556 = vld [vmem:[#allocation3 + $0xd8] sm:$0xff]
        %v1557 = vld [vmem:[#allocation3 + $0xe0] sm:$0xff]
        %v1558 = vld [vmem:[#allocation3 + $0xe8] sm:$0xff]
        %v1559 = vld [vmem:[#allocation3 + $0xf0] sm:$0xff]
        %v1560 = vld [vmem:[#allocation3 + $0xf8] sm:$0xff]
        %v1561 = vld [vmem:[#allocation3 + $0x100] sm:$0xff]
        %v1562 = vld [vmem:[#allocation3 + $0x108] sm:$0xff]
        %v1563 = vld [vmem:[#allocation3 + $0x110] sm:$0xff]
        %v1564 = vld [vmem:[#allocation3 + $0x118] sm:$0xff]
        %v1565 = vld [vmem:[#allocation3 + $0x120] sm:$0xff]
        %v1566 = vld [vmem:[#allocation3 + $0x128] sm:$0xff]
        %v1567 = vld [vmem:[#allocation3 + $0x130] sm:$0xff]
        %v1568 = vld [vmem:[#allocation3 + $0x138] sm:$0xff]
        %v1569 = vld [vmem:[#allocation3 + $0x140] sm:$0xff]
        %v1570 = vld [vmem:[#allocation3 + $0x148] sm:$0xff]
        %v1571 = vld [vmem:[#allocation3 + $0x150] sm:$0xff]
        %v1572 = vld [vmem:[#allocation3 + $0x158] sm:$0xff]
        %v1573 = vld [vmem:[#allocation3 + $0x160] sm:$0xff]
        %v1574 = vld [vmem:[#allocation3 + $0x168] sm:$0xff]
        %v1575 = vld [vmem:[#allocation3 + $0x170] sm:$0xff]
        %v1576 = vld [vmem:[#allocation3 + $0x178] sm:$0xff]
        %v1577 = vld [vmem:[#allocation13] sm:$0xf]
        %v1578 = vld [vmem:[#allocation13 + $0x4] sm:$0xf]
        %v1579 = vld [vmem:[#allocation13 + $0x8] sm:$0xf]
        %v1580 = vld [vmem:[#allocation13 + $0xc] sm:$0xf]
        %v1581 = vld [vmem:[#allocation13 + $0x10] sm:$0xf]
        %v1582 = vld [vmem:[#allocation13 + $0x14] sm:$0xf]
        %v1583 = vld [vmem:[#allocation13 + $0x18] sm:$0xf]
        %v1584 = vld [vmem:[#allocation13 + $0x1c] sm:$0xf]
        %v1585 = vld [vmem:[#allocation13 + $0x20] sm:$0xf]
        %v1586 = vld [vmem:[#allocation13 + $0x24] sm:$0xf]
        %v1587 = vld [vmem:[#allocation13 + $0x28] sm:$0xf]
        %v1588 = vld [vmem:[#allocation13 + $0x2c] sm:$0xf]
        %v1589 = vld [vmem:[#allocation13 + $0x30] sm:$0xf]
        %v1590 = vld [vmem:[#allocation13 + $0x34] sm:$0xf]
        %v1591 = vld [vmem:[#allocation13 + $0x38] sm:$0xf]
        %v1592 = vld [vmem:[#allocation13 + $0x3c] sm:$0xf]
        %v1593 = vld [vmem:[#allocation13 + $0x40] sm:$0xf]
        %v1594 = vld [vmem:[#allocation13 + $0x44] sm:$0xf]
        %v1595 = vld [vmem:[#allocation13 + $0x48] sm:$0xf]
        %v1596 = vld [vmem:[#allocation13 + $0x4c] sm:$0xf]
        %v1597 = vld [vmem:[#allocation13 + $0x50] sm:$0xf]
        %v1598 = vld [vmem:[#allocation13 + $0x54] sm:$0xf]
        %v1599 = vld [vmem:[#allocation13 + $0x58] sm:$0xf]
        %v1600 = vld [vmem:[#allocation13 + $0x5c] sm:$0xf]
        %v1601 = vld [vmem:[#allocation13 + $0x60] sm:$0xf]
        %v1602 = vld [vmem:[#allocation13 + $0x64] sm:$0xf]
        %v1603 = vld [vmem:[#allocation13 + $0x68] sm:$0xf]
        %v1604 = vld [vmem:[#allocation13 + $0x6c] sm:$0xf]
        %v1605 = vld [vmem:[#allocation13 + $0x70] sm:$0xf]
        %v1606 = vld [vmem:[#allocation13 + $0x74] sm:$0xf]
        %v1607 = vld [vmem:[#allocation13 + $0x78] sm:$0xf]
        %v1608 = vld [vmem:[#allocation13 + $0x7c] sm:$0xf]
        %v1609 = vld [vmem:[#allocation13 + $0x80] sm:$0xf]
        %v1610 = vld [vmem:[#allocation13 + $0x84] sm:$0xf]
        %v1611 = vld [vmem:[#allocation13 + $0x88] sm:$0xf]
        %v1612 = vld [vmem:[#allocation13 + $0x8c] sm:$0xf]
        %v1613 = vld [vmem:[#allocation13 + $0x90] sm:$0xf]
        %v1614 = vld [vmem:[#allocation13 + $0x94] sm:$0xf]
        %v1615 = vld [vmem:[#allocation13 + $0x98] sm:$0xf]
        %v1616 = vld [vmem:[#allocation13 + $0x9c] sm:$0xf]
        %v1617 = vld [vmem:[#allocation13 + $0xa0] sm:$0xf]
        %v1618 = vld [vmem:[#allocation13 + $0xa4] sm:$0xf]
        %v1619 = vld [vmem:[#allocation13 + $0xa8] sm:$0xf]
        %v1620 = vld [vmem:[#allocation13 + $0xac] sm:$0xf]
        %v1621 = vld [vmem:[#allocation13 + $0xb0] sm:$0xf]
        %v1622 = vld [vmem:[#allocation13 + $0xb4] sm:$0xf]
        %v1623 = vld [vmem:[#allocation13 + $0xb8] sm:$0xf]
        %v1624 = vld [vmem:[#allocation13 + $0xbc] sm:$0xf]
        %v1673 = vunpack.c.l.b16 %v1577
        %v1674 = vunpack.c.l.b16 %v1578
        %v1675 = vunpack.c.l.b16 %v1579
        %v1676 = vunpack.c.l.b16 %v1580
        %v1677 = vunpack.c.l.b16 %v1581
        %v1678 = vunpack.c.l.b16 %v1582
        %v1679 = vunpack.c.l.b16 %v1583
        %v1680 = vunpack.c.l.b16 %v1584
        %v1681 = vunpack.c.l.b16 %v1585
        %v1682 = vunpack.c.l.b16 %v1586
        %v1683 = vunpack.c.l.b16 %v1587
        %v1684 = vunpack.c.l.b16 %v1588
        %v1685 = vunpack.c.l.b16 %v1589
        %v1686 = vunpack.c.l.b16 %v1590
        %v1687 = vunpack.c.l.b16 %v1591
        %v1688 = vunpack.c.l.b16 %v1592
        %v1689 = vunpack.c.l.b16 %v1593
        %v1690 = vunpack.c.l.b16 %v1594
        %v1691 = vunpack.c.l.b16 %v1595
        %v1692 = vunpack.c.l.b16 %v1596
        %v1693 = vunpack.c.l.b16 %v1597
        %v1694 = vunpack.c.l.b16 %v1598
        %v1695 = vunpack.c.l.b16 %v1599
        %v1696 = vunpack.c.l.b16 %v1600
        %v1697 = vunpack.c.l.b16 %v1601
        %v1698 = vunpack.c.l.b16 %v1602
        %v1699 = vunpack.c.l.b16 %v1603
        %v1700 = vunpack.c.l.b16 %v1604
        %v1701 = vunpack.c.l.b16 %v1605
        %v1702 = vunpack.c.l.b16 %v1606
        %v1703 = vunpack.c.l.b16 %v1607
        %v1704 = vunpack.c.l.b16 %v1608
        %v1705 = vunpack.c.l.b16 %v1609
        %v1706 = vunpack.c.l.b16 %v1610
        %v1707 = vunpack.c.l.b16 %v1611
        %v1708 = vunpack.c.l.b16 %v1612
        %v1709 = vunpack.c.l.b16 %v1613
        %v1710 = vunpack.c.l.b16 %v1614
        %v1711 = vunpack.c.l.b16 %v1615
        %v1712 = vunpack.c.l.b16 %v1616
        %v1713 = vunpack.c.l.b16 %v1617
        %v1714 = vunpack.c.l.b16 %v1618
        %v1715 = vunpack.c.l.b16 %v1619
        %v1716 = vunpack.c.l.b16 %v1620
        %v1717 = vunpack.c.l.b16 %v1621
        %v1718 = vunpack.c.l.b16 %v1622
        %v1719 = vunpack.c.l.b16 %v1623
        %v1720 = vunpack.c.l.b16 %v1624
        %v1721 = vpack.c.b16 %v1674, %v1673
        %v1722 = vpack.c.b16 %v1676, %v1675
        %v1723 = vpack.c.b16 %v1678, %v1677
        %v1724 = vpack.c.b16 %v1680, %v1679
        %v1725 = vpack.c.b16 %v1682, %v1681
        %v1726 = vpack.c.b16 %v1684, %v1683
        %v1727 = vpack.c.b16 %v1686, %v1685
        %v1728 = vpack.c.b16 %v1688, %v1687
        %v1729 = vpack.c.b16 %v1690, %v1689
        %v1730 = vpack.c.b16 %v1692, %v1691
        %v1731 = vpack.c.b16 %v1694, %v1693
        %v1732 = vpack.c.b16 %v1696, %v1695
        %v1733 = vpack.c.b16 %v1698, %v1697
        %v1734 = vpack.c.b16 %v1700, %v1699
        %v1735 = vpack.c.b16 %v1702, %v1701
        %v1736 = vpack.c.b16 %v1704, %v1703
        %v1737 = vpack.c.b16 %v1706, %v1705
        %v1738 = vpack.c.b16 %v1708, %v1707
        %v1739 = vpack.c.b16 %v1710, %v1709
        %v1740 = vpack.c.b16 %v1712, %v1711
        %v1741 = vpack.c.b16 %v1714, %v1713
        %v1742 = vpack.c.b16 %v1716, %v1715
        %v1743 = vpack.c.b16 %v1718, %v1717
        %v1744 = vpack.c.b16 %v1720, %v1719
        %1769 = vmatprep.subr.bf16.mxu0 0
        %1770 = vmatpush1.bf16.msra.mxu0 %v1721
        %1771 = vmatprep.subr.bf16.mxu0 0
        %1772 = vmatpush1.bf16.msra.mxu0 %v1722
        %1773 = vmatprep.subr.bf16.mxu0 0
        %1774 = vmatpush1.bf16.msra.mxu0 %v1723
        %1775 = vmatprep.subr.bf16.mxu0 0
        %1776 = vmatpush1.bf16.msra.mxu0 %v1724
        %1777 = vmatprep.subr.bf16.mxu0 0
        %1778 = vmatpush1.bf16.msra.mxu0 %v1725
        %1779 = vmatprep.subr.bf16.mxu0 0
        %1780 = vmatpush1.bf16.msra.mxu0 %v1726
        %1781 = vmatprep.subr.bf16.mxu0 0
        %1782 = vmatpush1.bf16.msra.mxu0 %v1727
        %1783 = vmatprep.subr.bf16.mxu0 0
        %1784 = vmatpush1.bf16.msra.mxu0 %v1728
        %1785 = vmatprep.subr.bf16.mxu0 0
        %1786 = vmatpush1.bf16.msra.mxu0 %v1729
        %1787 = vmatprep.subr.bf16.mxu0 0
        %1788 = vmatpush1.bf16.msra.mxu0 %v1730
        %1789 = vmatprep.subr.bf16.mxu0 0
        %1790 = vmatpush1.bf16.msra.mxu0 %v1731
        %1791 = vmatprep.subr.bf16.mxu0 0
        %1792 = vmatpush1.bf16.msra.mxu0 %v1732
        %1793 = vmatprep.subr.bf16.mxu0 0
        %1794 = vmatpush1.bf16.msra.mxu0 %v1733
        %1795 = vmatprep.subr.bf16.mxu0 0
        %1796 = vmatpush1.bf16.msra.mxu0 %v1734
        %1797 = vmatprep.subr.bf16.mxu0 0
        %1798 = vmatpush1.bf16.msra.mxu0 %v1735
        %1799 = vmatprep.subr.bf16.mxu0 0
        %1800 = vmatpush1.bf16.msra.mxu0 %v1736
        %1801 = vmatprep.mubr.bf16.mxu0 %v1530
        %1802 = vmatmul.mubr.bf16.gmra.mrb[0].mxu0 %v1529
        %v1803 = vpop.f32.mrb[0].mxu0
        %v1804 = vadd.f32 0.0, %v1803
        %v1805 = vpop.f32.mrb[0].mxu0
        %v1806 = vpop.f32.mrb[0].mxu0
        %v1807 = vadd.f32 0.0, %v1806
        %v1808 = vpop.f32.mrb[0].mxu0
        %1809 = vmatprep.mubr.bf16.mxu0 %v1533
        %1810 = vmatmul.mubr.bf16.gmra.mrb[0].mxu0 %v1532
        %v1811 = vpop.f32.mrb[0].mxu0
        %v1812 = vadd.f32 0.0, %v1811
        %v1813 = vpop.f32.mrb[0].mxu0
        %v1814 = vpop.f32.mrb[0].mxu0
        %v1815 = vadd.f32 0.0, %v1814
        %v1816 = vpop.f32.mrb[0].mxu0
        %1817 = vmatprep.mubr.bf16.mxu0 %v1536
        %1818 = vmatmul.mubr.bf16.gmra.mrb[0].mxu0 %v1535
        %v1819 = vpop.f32.mrb[0].mxu0
        %v1820 = vadd.f32 0.0, %v1819
        %v1821 = vpop.f32.mrb[0].mxu0
        %v1822 = vpop.f32.mrb[0].mxu0
        %v1823 = vadd.f32 0.0, %v1822
        %v1824 = vpop.f32.mrb[0].mxu0
        %1825 = vmatprep.mubr.bf16.mxu0 %v1539
        %1826 = vmatmul.mubr.bf16.gmra.mrb[0].mxu0 %v1538
        %v1827 = vpop.f32.mrb[0].mxu0
        %v1828 = vadd.f32 0.0, %v1827
        %v1829 = vpop.f32.mrb[0].mxu0
        %v1830 = vpop.f32.mrb[0].mxu0
        %v1831 = vadd.f32 0.0, %v1830
        %v1832 = vpop.f32.mrb[0].mxu0
        %1833 = vmatprep.mubr.bf16.mxu0 %v1542
        %1834 = vmatmul.mubr.bf16.gmra.mrb[0].mxu0 %v1541
        %v1835 = vpop.f32.mrb[0].mxu0
        %v1836 = vadd.f32 0.0, %v1835
        %v1837 = vpop.f32.mrb[0].mxu0
        %v1838 = vpop.f32.mrb[0].mxu0
        %v1839 = vadd.f32 0.0, %v1838
        %v1840 = vpop.f32.mrb[0].mxu0
        %1841 = vmatprep.mubr.bf16.mxu0 %v1545
        %1842 = vmatmul.mubr.bf16.gmra.mrb[0].mxu0 %v1544
        %v1843 = vpop.f32.mrb[0].mxu0
        %v1844 = vadd.f32 0.0, %v1843
        %v1845 = vpop.f32.mrb[0].mxu0
        %v1846 = vpop.f32.mrb[0].mxu0
        %v1847 = vadd.f32 0.0, %v1846
        %v1848 = vpop.f32.mrb[0].mxu0
        %1849 = vmatprep.mubr.bf16.mxu0 %v1548
        %1850 = vmatmul.mubr.bf16.gmra.mrb[0].mxu0 %v1547
        %v1851 = vpop.f32.mrb[0].mxu0
        %v1852 = vadd.f32 0.0, %v1851
        %v1853 = vpop.f32.mrb[0].mxu0
        %v1854 = vpop.f32.mrb[0].mxu0
        %v1855 = vadd.f32 0.0, %v1854
        %v1856 = vpop.f32.mrb[0].mxu0
        %1857 = vmatprep.mubr.bf16.mxu0 %v1551
        %1858 = vmatmul.mubr.bf16.gmra.mrb[0].mxu0 %v1550
        %v1859 = vpop.f32.mrb[0].mxu0
        %v1860 = vadd.f32 0.0, %v1859
        %v1861 = vpop.f32.mrb[0].mxu0
        %v1862 = vpop.f32.mrb[0].mxu0
        %v1863 = vadd.f32 0.0, %v1862
        %v1864 = vpop.f32.mrb[0].mxu0
        %1865 = vmatprep.mubr.bf16.mxu0 %v1554
        %1866 = vmatmul.mubr.bf16.gmra.mrb[0].mxu0 %v1553
        %v1867 = vpop.f32.mrb[0].mxu0
        %v1868 = vadd.f32 0.0, %v1867
        %v1869 = vpop.f32.mrb[0].mxu0
        %v1870 = vpop.f32.mrb[0].mxu0
        %v1871 = vadd.f32 0.0, %v1870
        %v1872 = vpop.f32.mrb[0].mxu0
        %1873 = vmatprep.mubr.bf16.mxu0 %v1557
        %1874 = vmatmul.mubr.bf16.gmra.mrb[0].mxu0 %v1556
        %v1875 = vpop.f32.mrb[0].mxu0
        %v1876 = vadd.f32 0.0, %v1875
        %v1877 = vpop.f32.mrb[0].mxu0
        %v1878 = vpop.f32.mrb[0].mxu0
        %v1879 = vadd.f32 0.0, %v1878
        %v1880 = vpop.f32.mrb[0].mxu0
        %1881 = vmatprep.mubr.bf16.mxu0 %v1560
        %1882 = vmatmul.mubr.bf16.gmra.mrb[0].mxu0 %v1559
        %v1883 = vpop.f32.mrb[0].mxu0
        %v1884 = vadd.f32 0.0, %v1883
        %v1885 = vpop.f32.mrb[0].mxu0
        %v1886 = vpop.f32.mrb[0].mxu0
        %v1887 = vadd.f32 0.0, %v1886
        %v1888 = vpop.f32.mrb[0].mxu0
        %1889 = vmatprep.mubr.bf16.mxu0 %v1563
        %1890 = vmatmul.mubr.bf16.gmra.mrb[0].mxu0 %v1562
        %v1891 = vpop.f32.mrb[0].mxu0
        %v1892 = vadd.f32 0.0, %v1891
        %v1893 = vpop.f32.mrb[0].mxu0
        %v1894 = vpop.f32.mrb[0].mxu0
        %v1895 = vadd.f32 0.0, %v1894
        %v1896 = vpop.f32.mrb[0].mxu0
        %1897 = vmatprep.mubr.bf16.mxu0 %v1566
        %1898 = vmatmul.mubr.bf16.gmra.mrb[0].mxu0 %v1565
        %v1899 = vpop.f32.mrb[0].mxu0
        %v1900 = vadd.f32 0.0, %v1899
        %v1901 = vpop.f32.mrb[0].mxu0
        %v1902 = vpop.f32.mrb[0].mxu0
        %v1903 = vadd.f32 0.0, %v1902
        %v1904 = vpop.f32.mrb[0].mxu0
        %1905 = vmatprep.mubr.bf16.mxu0 %v1569
        %1906 = vmatmul.mubr.bf16.gmra.mrb[0].mxu0 %v1568
        %v1907 = vpop.f32.mrb[0].mxu0
        %v1908 = vadd.f32 0.0, %v1907
        %v1909 = vpop.f32.mrb[0].mxu0
        %v1910 = vpop.f32.mrb[0].mxu0
        %v1911 = vadd.f32 0.0, %v1910
        %v1912 = vpop.f32.mrb[0].mxu0
        %1913 = vmatprep.mubr.bf16.mxu0 %v1572
        %1914 = vmatmul.mubr.bf16.gmra.mrb[0].mxu0 %v1571
        %v1915 = vpop.f32.mrb[0].mxu0
        %v1916 = vadd.f32 0.0, %v1915
        %v1917 = vpop.f32.mrb[0].mxu0
        %v1918 = vpop.f32.mrb[0].mxu0
        %v1919 = vadd.f32 0.0, %v1918
        %v1920 = vpop.f32.mrb[0].mxu0
        %1921 = vmatprep.mubr.bf16.mxu0 %v1575
        %1922 = vmatmul.mubr.bf16.gmra.mrb[0].mxu0 %v1574
        %v1923 = vpop.f32.mrb[0].mxu0
        %v1924 = vadd.f32 0.0, %v1923
        %v1925 = vpop.f32.mrb[0].mxu0
        %v1926 = vpop.f32.mrb[0].mxu0
        %v1927 = vadd.f32 0.0, %v1926
        %v1928 = vpop.f32.mrb[0].mxu0
        %1929 = vdwg.mxu0
        %1930 = vmatprep.subr.bf16.mxu0 0
        %1931 = vmatpush1.bf16.msra.mxu0 %v1737
        %1932 = vmatprep.subr.bf16.mxu0 0
        %1933 = vmatpush1.bf16.msra.mxu0 %v1738
        %1934 = vmatprep.subr.bf16.mxu0 0
        %1935 = vmatpush1.bf16.msra.mxu0 %v1739
        %1936 = vmatprep.subr.bf16.mxu0 0
        %1937 = vmatpush1.bf16.msra.mxu0 %v1740
        %1938 = vmatprep.subr.bf16.mxu0 0
        %1939 = vmatpush1.bf16.msra.mxu0 %v1741
        %1940 = vmatprep.subr.bf16.mxu0 0
        %1941 = vmatpush1.bf16.msra.mxu0 %v1742
        %1942 = vmatprep.subr.bf16.mxu0 0
        %1943 = vmatpush1.bf16.msra.mxu0 %v1743
        %1944 = vmatprep.subr.bf16.mxu0 0
        %1945 = vmatpush1.bf16.msra.mxu0 %v1744
        %1946 = vmatprep.subr.bf16.mxu0 0
        %1947 = vmatpush1.bf16.msra.mxu0 0
        %1948 = vmatprep.subr.bf16.mxu0 0
        %1949 = vmatpush1.bf16.msra.mxu0 0
        %1950 = vmatprep.subr.bf16.mxu0 0
        %1951 = vmatpush1.bf16.msra.mxu0 0
        %1952 = vmatprep.subr.bf16.mxu0 0
        %1953 = vmatpush1.bf16.msra.mxu0 0
        %1954 = vmatprep.subr.bf16.mxu0 0
        %1955 = vmatpush1.bf16.msra.mxu0 0
        %1956 = vmatprep.subr.bf16.mxu0 0
        %1957 = vmatpush1.bf16.msra.mxu0 0
        %1958 = vmatprep.subr.bf16.mxu0 0
        %1959 = vmatpush1.bf16.msra.mxu0 0
        %1960 = vmatprep.subr.bf16.mxu0 0
        %1961 = vmatpush1.bf16.msra.mxu0 0
        %1962 = vmatprep.mubr.bf16.mxu0 0
        %1963 = vmatmul.mubr.bf16.gmra.mrb[0].mxu0 %v1531
        %v1964 = vpop.f32.mrb[0].mxu0
        %v1965 = vadd.f32 %v1804, %v1964
        %v1966 = vpop.f32.mrb[0].mxu0
        %v1967 = vpop.f32.mrb[0].mxu0
        %v1968 = vadd.f32 %v1807, %v1967
        %v1969 = vpop.f32.mrb[0].mxu0
        %1970 = vmatprep.mubr.bf16.mxu0 0
        %1971 = vmatmul.mubr.bf16.gmra.mrb[0].mxu0 %v1534
        %v1972 = vpop.f32.mrb[0].mxu0
        %v1973 = vadd.f32 %v1812, %v1972
        %v1974 = vpop.f32.mrb[0].mxu0
        %v1975 = vpop.f32.mrb[0].mxu0
        %v1976 = vadd.f32 %v1815, %v1975
        %v1977 = vpop.f32.mrb[0].mxu0
        %1978 = vmatprep.mubr.bf16.mxu0 0
        %1979 = vmatmul.mubr.bf16.gmra.mrb[0].mxu0 %v1537
        %v1980 = vpop.f32.mrb[0].mxu0
        %v1981 = vadd.f32 %v1820, %v1980
        %v1982 = vpop.f32.mrb[0].mxu0
        %v1983 = vpop.f32.mrb[0].mxu0
        %v1984 = vadd.f32 %v1823, %v1983
        %v1985 = vpop.f32.mrb[0].mxu0
        %1986 = vmatprep.mubr.bf16.mxu0 0
        %1987 = vmatmul.mubr.bf16.gmra.mrb[0].mxu0 %v1540
        %v1988 = vpop.f32.mrb[0].mxu0
        %v1989 = vadd.f32 %v1828, %v1988
        %v1990 = vpop.f32.mrb[0].mxu0
        %v1991 = vpop.f32.mrb[0].mxu0
        %v1992 = vadd.f32 %v1831, %v1991
        %v1993 = vpop.f32.mrb[0].mxu0
        %1994 = vmatprep.mubr.bf16.mxu0 0
        %1995 = vmatmul.mubr.bf16.gmra.mrb[0].mxu0 %v1543
        %v1996 = vpop.f32.mrb[0].mxu0
        %v1997 = vadd.f32 %v1836, %v1996
        %v1998 = vpop.f32.mrb[0].mxu0
        %v1999 = vpop.f32.mrb[0].mxu0
        %v2000 = vadd.f32 %v1839, %v1999
        %v2001 = vpop.f32.mrb[0].mxu0
        %2002 = vmatprep.mubr.bf16.mxu0 0
        %2003 = vmatmul.mubr.bf16.gmra.mrb[0].mxu0 %v1546
        %v2004 = vpop.f32.mrb[0].mxu0
        %v2005 = vadd.f32 %v1844, %v2004
        %v2006 = vpop.f32.mrb[0].mxu0
        %v2007 = vpop.f32.mrb[0].mxu0
        %v2008 = vadd.f32 %v1847, %v2007
        %v2009 = vpop.f32.mrb[0].mxu0
        %2010 = vmatprep.mubr.bf16.mxu0 0
        %2011 = vmatmul.mubr.bf16.gmra.mrb[0].mxu0 %v1549
        %v2012 = vpop.f32.mrb[0].mxu0
        %v2013 = vadd.f32 %v1852, %v2012
        %v2014 = vpop.f32.mrb[0].mxu0
        %v2015 = vpop.f32.mrb[0].mxu0
        %v2016 = vadd.f32 %v1855, %v2015
        %v2017 = vpop.f32.mrb[0].mxu0
        %2018 = vmatprep.mubr.bf16.mxu0 0
        %2019 = vmatmul.mubr.bf16.gmra.mrb[0].mxu0 %v1552
        %v2020 = vpop.f32.mrb[0].mxu0
        %v2021 = vadd.f32 %v1860, %v2020
        %v2022 = vpop.f32.mrb[0].mxu0
        %v2023 = vpop.f32.mrb[0].mxu0
        %v2024 = vadd.f32 %v1863, %v2023
        %v2025 = vpop.f32.mrb[0].mxu0
        %2026 = vmatprep.mubr.bf16.mxu0 0
        %2027 = vmatmul.mubr.bf16.gmra.mrb[0].mxu0 %v1555
        %v2028 = vpop.f32.mrb[0].mxu0
        %v2029 = vadd.f32 %v1868, %v2028
        %v2030 = vpop.f32.mrb[0].mxu0
        %v2031 = vpop.f32.mrb[0].mxu0
        %v2032 = vadd.f32 %v1871, %v2031
        %v2033 = vpop.f32.mrb[0].mxu0
        %2034 = vmatprep.mubr.bf16.mxu0 0
        %2035 = vmatmul.mubr.bf16.gmra.mrb[0].mxu0 %v1558
        %v2036 = vpop.f32.mrb[0].mxu0
        %v2037 = vadd.f32 %v1876, %v2036
        %v2038 = vpop.f32.mrb[0].mxu0
        %v2039 = vpop.f32.mrb[0].mxu0
        %v2040 = vadd.f32 %v1879, %v2039
        %v2041 = vpop.f32.mrb[0].mxu0
        %2042 = vmatprep.mubr.bf16.mxu0 0
        %2043 = vmatmul.mubr.bf16.gmra.mrb[0].mxu0 %v1561
        %v2044 = vpop.f32.mrb[0].mxu0
        %v2045 = vadd.f32 %v1884, %v2044
        %v2046 = vpop.f32.mrb[0].mxu0
        %v2047 = vpop.f32.mrb[0].mxu0
        %v2048 = vadd.f32 %v1887, %v2047
        %v2049 = vpop.f32.mrb[0].mxu0
        %2050 = vmatprep.mubr.bf16.mxu0 0
        %2051 = vmatmul.mubr.bf16.gmra.mrb[0].mxu0 %v1564
        %v2052 = vpop.f32.mrb[0].mxu0
        %v2053 = vadd.f32 %v1892, %v2052
        %v2054 = vpop.f32.mrb[0].mxu0
        %v2055 = vpop.f32.mrb[0].mxu0
        %v2056 = vadd.f32 %v1895, %v2055
        %v2057 = vpop.f32.mrb[0].mxu0
        %2058 = vmatprep.mubr.bf16.mxu0 0
        %2059 = vmatmul.mubr.bf16.gmra.mrb[0].mxu0 %v1567
        %v2060 = vpop.f32.mrb[0].mxu0
        %v2061 = vadd.f32 %v1900, %v2060
        %v2062 = vpop.f32.mrb[0].mxu0
        %v2063 = vpop.f32.mrb[0].mxu0
        %v2064 = vadd.f32 %v1903, %v2063
        %v2065 = vpop.f32.mrb[0].mxu0
        %2066 = vmatprep.mubr.bf16.mxu0 0
        %2067 = vmatmul.mubr.bf16.gmra.mrb[0].mxu0 %v1570
        %v2068 = vpop.f32.mrb[0].mxu0
        %v2069 = vadd.f32 %v1908, %v2068
        %v2070 = vpop.f32.mrb[0].mxu0
        %v2071 = vpop.f32.mrb[0].mxu0
        %v2072 = vadd.f32 %v1911, %v2071
        %v2073 = vpop.f32.mrb[0].mxu0
        %2074 = vmatprep.mubr.bf16.mxu0 0
        %2075 = vmatmul.mubr.bf16.gmra.mrb[0].mxu0 %v1573
        %v2076 = vpop.f32.mrb[0].mxu0
        %v2077 = vadd.f32 %v1916, %v2076
        %v2078 = vpop.f32.mrb[0].mxu0
        %v2079 = vpop.f32.mrb[0].mxu0
        %v2080 = vadd.f32 %v1919, %v2079
        %v2081 = vpop.f32.mrb[0].mxu0
        %2082 = vmatprep.mubr.bf16.mxu0 0
        %2083 = vmatmul.mubr.bf16.gmra.mrb[0].mxu0 %v1576
        %v2084 = vpop.f32.mrb[0].mxu0
        %v2085 = vadd.f32 %v1924, %v2084
        %v2086 = vpop.f32.mrb[0].mxu0
        %v2087 = vpop.f32.mrb[0].mxu0
        %v2088 = vadd.f32 %v1927, %v2087
        %v2089 = vpop.f32.mrb[0].mxu0
        %2090 = vdwg.mxu0
        %2091 = vst [vmem:[#allocation4] sm:$0xff] %v1965
        %2092 = vst [vmem:[#allocation4 + $0x8] sm:$0xff] %v1968
        %2093 = vst [vmem:[#allocation4 + $0x10] sm:$0xff] %v1973
        %2094 = vst [vmem:[#allocation4 + $0x18] sm:$0xff] %v1976
        %2095 = vst [vmem:[#allocation4 + $0x20] sm:$0xff] %v1981
        %2096 = vst [vmem:[#allocation4 + $0x28] sm:$0xff] %v1984
        %2097 = vst [vmem:[#allocation4 + $0x30] sm:$0xff] %v1989
        %2098 = vst [vmem:[#allocation4 + $0x38] sm:$0xff] %v1992
        %2099 = vst [vmem:[#allocation4 + $0x40] sm:$0xff] %v1997
        %2100 = vst [vmem:[#allocation4 + $0x48] sm:$0xff] %v2000
        %2101 = vst [vmem:[#allocation4 + $0x50] sm:$0xff] %v2005
        %2102 = vst [vmem:[#allocation4 + $0x58] sm:$0xff] %v2008
        %2103 = vst [vmem:[#allocation4 + $0x60] sm:$0xff] %v2013
        %2104 = vst [vmem:[#allocation4 + $0x68] sm:$0xff] %v2016
        %2105 = vst [vmem:[#allocation4 + $0x70] sm:$0xff] %v2021
        %2106 = vst [vmem:[#allocation4 + $0x78] sm:$0xff] %v2024
        %2107 = vst [vmem:[#allocation4 + $0x80] sm:$0xff] %v2029
        %2108 = vst [vmem:[#allocation4 + $0x88] sm:$0xff] %v2032
        %2109 = vst [vmem:[#allocation4 + $0x90] sm:$0xff] %v2037
        %2110 = vst [vmem:[#allocation4 + $0x98] sm:$0xff] %v2040
        %2111 = vst [vmem:[#allocation4 + $0xa0] sm:$0xff] %v2045
        %2112 = vst [vmem:[#allocation4 + $0xa8] sm:$0xff] %v2048
        %2113 = vst [vmem:[#allocation4 + $0xb0] sm:$0xff] %v2053
        %2114 = vst [vmem:[#allocation4 + $0xb8] sm:$0xff] %v2056
        %2115 = vst [vmem:[#allocation4 + $0xc0] sm:$0xff] %v2061
        %2116 = vst [vmem:[#allocation4 + $0xc8] sm:$0xff] %v2064
        %2117 = vst [vmem:[#allocation4 + $0xd0] sm:$0xff] %v2069
        %2118 = vst [vmem:[#allocation4 + $0xd8] sm:$0xff] %v2072
        %2119 = vst [vmem:[#allocation4 + $0xe0] sm:$0xff] %v2077
        %2120 = vst [vmem:[#allocation4 + $0xe8] sm:$0xff] %v2080
        %2121 = vst [vmem:[#allocation4 + $0xf0] sm:$0xff] %v2085
        %2122 = vst [vmem:[#allocation4 + $0xf8] sm:$0xff] %v2088
        %v2123 = vld [vmem:[#allocation4] sm:$0xff]
        %v2124 = vld [vmem:[#allocation4 + $0x8] sm:$0xff]
        %v2125 = vld [vmem:[#allocation4 + $0x10] sm:$0xff]
        %v2126 = vld [vmem:[#allocation4 + $0x18] sm:$0xff]
        %v2127 = vld [vmem:[#allocation4 + $0x20] sm:$0xff]
        %v2128 = vld [vmem:[#allocation4 + $0x28] sm:$0xff]
        %v2129 = vld [vmem:[#allocation4 + $0x30] sm:$0xff]
        %v2130 = vld [vmem:[#allocation4 + $0x38] sm:$0xff]
        %v2131 = vld [vmem:[#allocation4 + $0x40] sm:$0xff]
        %v2132 = vld [vmem:[#allocation4 + $0x48] sm:$0xff]
        %v2133 = vld [vmem:[#allocation4 + $0x50] sm:$0xff]
        %v2134 = vld [vmem:[#allocation4 + $0x58] sm:$0xff]
        %v2135 = vld [vmem:[#allocation4 + $0x60] sm:$0xff]
        %v2136 = vld [vmem:[#allocation4 + $0x68] sm:$0xff]
        %v2137 = vld [vmem:[#allocation4 + $0x70] sm:$0xff]
        %v2138 = vld [vmem:[#allocation4 + $0x78] sm:$0xff]
        %v2139 = vld [vmem:[#allocation4 + $0x80] sm:$0xff]
        %v2140 = vld [vmem:[#allocation4 + $0x88] sm:$0xff]
        %v2141 = vld [vmem:[#allocation4 + $0x90] sm:$0xff]
        %v2142 = vld [vmem:[#allocation4 + $0x98] sm:$0xff]
        %v2143 = vld [vmem:[#allocation4 + $0xa0] sm:$0xff]
        %v2144 = vld [vmem:[#allocation4 + $0xa8] sm:$0xff]
        %v2145 = vld [vmem:[#allocation4 + $0xb0] sm:$0xff]
        %v2146 = vld [vmem:[#allocation4 + $0xb8] sm:$0xff]
        %v2147 = vld [vmem:[#allocation4 + $0xc0] sm:$0xff]
        %v2148 = vld [vmem:[#allocation4 + $0xc8] sm:$0xff]
        %v2149 = vld [vmem:[#allocation4 + $0xd0] sm:$0xff]
        %v2150 = vld [vmem:[#allocation4 + $0xd8] sm:$0xff]
        %v2151 = vld [vmem:[#allocation4 + $0xe0] sm:$0xff]
        %v2152 = vld [vmem:[#allocation4 + $0xe8] sm:$0xff]
        %v2153 = vld [vmem:[#allocation4 + $0xf0] sm:$0xff]
        %v2154 = vld [vmem:[#allocation4 + $0xf8] sm:$0xff]
        %s2155 = scalar_lea.vmem [#allocation3], 24
        %v2156 = vld [vmem:[%s2155] sm:$0xff]
        %v2157 = vld [vmem:[%s2155 + $0x8] sm:$0xff]
        %v2158 = vld [vmem:[%s2155 + $0x10] sm:$0xff]
        %v2159 = vld [vmem:[%s2155 + $0x18] sm:$0xff]
        %v2160 = vld [vmem:[%s2155 + $0x20] sm:$0xff]
        %v2161 = vld [vmem:[%s2155 + $0x28] sm:$0xff]
        %v2162 = vld [vmem:[%s2155 + $0x30] sm:$0xff]
        %v2163 = vld [vmem:[%s2155 + $0x38] sm:$0xff]
        %v2164 = vld [vmem:[%s2155 + $0x40] sm:$0xff]
        %v2165 = vld [vmem:[%s2155 + $0x48] sm:$0xff]
        %v2166 = vld [vmem:[%s2155 + $0x50] sm:$0xff]
        %v2167 = vld [vmem:[%s2155 + $0x58] sm:$0xff]
        %v2168 = vld [vmem:[%s2155 + $0x60] sm:$0xff]
        %v2169 = vld [vmem:[%s2155 + $0x68] sm:$0xff]
        %v2170 = vld [vmem:[%s2155 + $0x70] sm:$0xff]
        %v2171 = vld [vmem:[%s2155 + $0x78] sm:$0xff]
        %v2172 = vld [vmem:[%s2155 + $0x80] sm:$0xff]
        %v2173 = vld [vmem:[%s2155 + $0x88] sm:$0xff]
        %v2174 = vld [vmem:[%s2155 + $0x90] sm:$0xff]
        %v2175 = vld [vmem:[%s2155 + $0x98] sm:$0xff]
        %v2176 = vld [vmem:[%s2155 + $0xa0] sm:$0xff]
        %v2177 = vld [vmem:[%s2155 + $0xa8] sm:$0xff]
        %v2178 = vld [vmem:[%s2155 + $0xb0] sm:$0xff]
        %v2179 = vld [vmem:[%s2155 + $0xb8] sm:$0xff]
        %v2180 = vld [vmem:[%s2155 + $0xc0] sm:$0xff]
        %v2181 = vld [vmem:[%s2155 + $0xc8] sm:$0xff]
        %v2182 = vld [vmem:[%s2155 + $0xd0] sm:$0xff]
        %v2183 = vld [vmem:[%s2155 + $0xd8] sm:$0xff]
        %v2184 = vld [vmem:[%s2155 + $0xe0] sm:$0xff]
        %v2185 = vld [vmem:[%s2155 + $0xe8] sm:$0xff]
        %v2186 = vld [vmem:[%s2155 + $0xf0] sm:$0xff]
        %v2187 = vld [vmem:[%s2155 + $0xf8] sm:$0xff]
        %v2188 = vld [vmem:[%s2155 + $0x100] sm:$0xff]
        %v2189 = vld [vmem:[%s2155 + $0x108] sm:$0xff]
        %v2190 = vld [vmem:[%s2155 + $0x110] sm:$0xff]
        %v2191 = vld [vmem:[%s2155 + $0x118] sm:$0xff]
        %v2192 = vld [vmem:[%s2155 + $0x120] sm:$0xff]
        %v2193 = vld [vmem:[%s2155 + $0x128] sm:$0xff]
        %v2194 = vld [vmem:[%s2155 + $0x130] sm:$0xff]
        %v2195 = vld [vmem:[%s2155 + $0x138] sm:$0xff]
        %v2196 = vld [vmem:[%s2155 + $0x140] sm:$0xff]
        %v2197 = vld [vmem:[%s2155 + $0x148] sm:$0xff]
        %v2198 = vld [vmem:[%s2155 + $0x150] sm:$0xff]
        %v2199 = vld [vmem:[%s2155 + $0x158] sm:$0xff]
        %v2200 = vld [vmem:[%s2155 + $0x160] sm:$0xff]
        %v2201 = vld [vmem:[%s2155 + $0x168] sm:$0xff]
        %v2202 = vld [vmem:[%s2155 + $0x170] sm:$0xff]
        %v2203 = vld [vmem:[%s2155 + $0x178] sm:$0xff]
        %s2204 = scalar_lea.vmem [#allocation13], 192
        %v2205 = vld [vmem:[%s2204] sm:$0xf]
        %v2206 = vld [vmem:[%s2204 + $0x4] sm:$0xf]
        %v2207 = vld [vmem:[%s2204 + $0x8] sm:$0xf]
        %v2208 = vld [vmem:[%s2204 + $0xc] sm:$0xf]
        %v2209 = vld [vmem:[%s2204 + $0x10] sm:$0xf]
        %v2210 = vld [vmem:[%s2204 + $0x14] sm:$0xf]
        %v2211 = vld [vmem:[%s2204 + $0x18] sm:$0xf]
        %v2212 = vld [vmem:[%s2204 + $0x1c] sm:$0xf]
        %v2213 = vld [vmem:[%s2204 + $0x20] sm:$0xf]
        %v2214 = vld [vmem:[%s2204 + $0x24] sm:$0xf]
        %v2215 = vld [vmem:[%s2204 + $0x28] sm:$0xf]
        %v2216 = vld [vmem:[%s2204 + $0x2c] sm:$0xf]
        %v2217 = vld [vmem:[%s2204 + $0x30] sm:$0xf]
        %v2218 = vld [vmem:[%s2204 + $0x34] sm:$0xf]
        %v2219 = vld [vmem:[%s2204 + $0x38] sm:$0xf]
        %v2220 = vld [vmem:[%s2204 + $0x3c] sm:$0xf]
        %v2221 = vld [vmem:[%s2204 + $0x40] sm:$0xf]
        %v2222 = vld [vmem:[%s2204 + $0x44] sm:$0xf]
        %v2223 = vld [vmem:[%s2204 + $0x48] sm:$0xf]
        %v2224 = vld [vmem:[%s2204 + $0x4c] sm:$0xf]
        %v2225 = vld [vmem:[%s2204 + $0x50] sm:$0xf]
        %v2226 = vld [vmem:[%s2204 + $0x54] sm:$0xf]
        %v2227 = vld [vmem:[%s2204 + $0x58] sm:$0xf]
        %v2228 = vld [vmem:[%s2204 + $0x5c] sm:$0xf]
        %v2229 = vld [vmem:[%s2204 + $0x60] sm:$0xf]
        %v2230 = vld [vmem:[%s2204 + $0x64] sm:$0xf]
        %v2231 = vld [vmem:[%s2204 + $0x68] sm:$0xf]
        %v2232 = vld [vmem:[%s2204 + $0x6c] sm:$0xf]
        %v2233 = vld [vmem:[%s2204 + $0x70] sm:$0xf]
        %v2234 = vld [vmem:[%s2204 + $0x74] sm:$0xf]
        %v2235 = vld [vmem:[%s2204 + $0x78] sm:$0xf]
        %v2236 = vld [vmem:[%s2204 + $0x7c] sm:$0xf]
        %v2237 = vld [vmem:[%s2204 + $0x80] sm:$0xf]
        %v2238 = vld [vmem:[%s2204 + $0x84] sm:$0xf]
        %v2239 = vld [vmem:[%s2204 + $0x88] sm:$0xf]
        %v2240 = vld [vmem:[%s2204 + $0x8c] sm:$0xf]
        %v2241 = vld [vmem:[%s2204 + $0x90] sm:$0xf]
        %v2242 = vld [vmem:[%s2204 + $0x94] sm:$0xf]
        %v2243 = vld [vmem:[%s2204 + $0x98] sm:$0xf]
        %v2244 = vld [vmem:[%s2204 + $0x9c] sm:$0xf]
        %v2245 = vld [vmem:[%s2204 + $0xa0] sm:$0xf]
        %v2246 = vld [vmem:[%s2204 + $0xa4] sm:$0xf]
        %v2247 = vld [vmem:[%s2204 + $0xa8] sm:$0xf]
        %v2248 = vld [vmem:[%s2204 + $0xac] sm:$0xf]
        %v2249 = vld [vmem:[%s2204 + $0xb0] sm:$0xf]
        %v2250 = vld [vmem:[%s2204 + $0xb4] sm:$0xf]
        %v2251 = vld [vmem:[%s2204 + $0xb8] sm:$0xf]
        %v2252 = vld [vmem:[%s2204 + $0xbc] sm:$0xf]
        %v2301 = vunpack.c.l.b16 %v2205
        %v2302 = vunpack.c.l.b16 %v2206
        %v2303 = vunpack.c.l.b16 %v2207
        %v2304 = vunpack.c.l.b16 %v2208
        %v2305 = vunpack.c.l.b16 %v2209
        %v2306 = vunpack.c.l.b16 %v2210
        %v2307 = vunpack.c.l.b16 %v2211
        %v2308 = vunpack.c.l.b16 %v2212
        %v2309 = vunpack.c.l.b16 %v2213
        %v2310 = vunpack.c.l.b16 %v2214
        %v2311 = vunpack.c.l.b16 %v2215
        %v2312 = vunpack.c.l.b16 %v2216
        %v2313 = vunpack.c.l.b16 %v2217
        %v2314 = vunpack.c.l.b16 %v2218
        %v2315 = vunpack.c.l.b16 %v2219
        %v2316 = vunpack.c.l.b16 %v2220
        %v2317 = vunpack.c.l.b16 %v2221
        %v2318 = vunpack.c.l.b16 %v2222
        %v2319 = vunpack.c.l.b16 %v2223
        %v2320 = vunpack.c.l.b16 %v2224
        %v2321 = vunpack.c.l.b16 %v2225
        %v2322 = vunpack.c.l.b16 %v2226
        %v2323 = vunpack.c.l.b16 %v2227
        %v2324 = vunpack.c.l.b16 %v2228
        %v2325 = vunpack.c.l.b16 %v2229
        %v2326 = vunpack.c.l.b16 %v2230
        %v2327 = vunpack.c.l.b16 %v2231
        %v2328 = vunpack.c.l.b16 %v2232
        %v2329 = vunpack.c.l.b16 %v2233
        %v2330 = vunpack.c.l.b16 %v2234
        %v2331 = vunpack.c.l.b16 %v2235
        %v2332 = vunpack.c.l.b16 %v2236
        %v2333 = vunpack.c.l.b16 %v2237
        %v2334 = vunpack.c.l.b16 %v2238
        %v2335 = vunpack.c.l.b16 %v2239
        %v2336 = vunpack.c.l.b16 %v2240
        %v2337 = vunpack.c.l.b16 %v2241
        %v2338 = vunpack.c.l.b16 %v2242
        %v2339 = vunpack.c.l.b16 %v2243
        %v2340 = vunpack.c.l.b16 %v2244
        %v2341 = vunpack.c.l.b16 %v2245
        %v2342 = vunpack.c.l.b16 %v2246
        %v2343 = vunpack.c.l.b16 %v2247
        %v2344 = vunpack.c.l.b16 %v2248
        %v2345 = vunpack.c.l.b16 %v2249
        %v2346 = vunpack.c.l.b16 %v2250
        %v2347 = vunpack.c.l.b16 %v2251
        %v2348 = vunpack.c.l.b16 %v2252
        %v2349 = vpack.c.b16 %v2302, %v2301
        %v2350 = vpack.c.b16 %v2304, %v2303
        %v2351 = vpack.c.b16 %v2306, %v2305
        %v2352 = vpack.c.b16 %v2308, %v2307
        %v2353 = vpack.c.b16 %v2310, %v2309
        %v2354 = vpack.c.b16 %v2312, %v2311
        %v2355 = vpack.c.b16 %v2314, %v2313
        %v2356 = vpack.c.b16 %v2316, %v2315
        %v2357 = vpack.c.b16 %v2318, %v2317
        %v2358 = vpack.c.b16 %v2320, %v2319
        %v2359 = vpack.c.b16 %v2322, %v2321
        %v2360 = vpack.c.b16 %v2324, %v2323
        %v2361 = vpack.c.b16 %v2326, %v2325
        %v2362 = vpack.c.b16 %v2328, %v2327
        %v2363 = vpack.c.b16 %v2330, %v2329
        %v2364 = vpack.c.b16 %v2332, %v2331
        %v2365 = vpack.c.b16 %v2334, %v2333
        %v2366 = vpack.c.b16 %v2336, %v2335
        %v2367 = vpack.c.b16 %v2338, %v2337
        %v2368 = vpack.c.b16 %v2340, %v2339
        %v2369 = vpack.c.b16 %v2342, %v2341
        %v2370 = vpack.c.b16 %v2344, %v2343
        %v2371 = vpack.c.b16 %v2346, %v2345
        %v2372 = vpack.c.b16 %v2348, %v2347
        %2397 = vmatprep.subr.bf16.mxu0 0
        %2398 = vmatpush1.bf16.msra.mxu0 %v2349
        %2399 = vmatprep.subr.bf16.mxu0 0
        %2400 = vmatpush1.bf16.msra.mxu0 %v2350
        %2401 = vmatprep.subr.bf16.mxu0 0
        %2402 = vmatpush1.bf16.msra.mxu0 %v2351
        %2403 = vmatprep.subr.bf16.mxu0 0
        %2404 = vmatpush1.bf16.msra.mxu0 %v2352
        %2405 = vmatprep.subr.bf16.mxu0 0
        %2406 = vmatpush1.bf16.msra.mxu0 %v2353
        %2407 = vmatprep.subr.bf16.mxu0 0
        %2408 = vmatpush1.bf16.msra.mxu0 %v2354
        %2409 = vmatprep.subr.bf16.mxu0 0
        %2410 = vmatpush1.bf16.msra.mxu0 %v2355
        %2411 = vmatprep.subr.bf16.mxu0 0
        %2412 = vmatpush1.bf16.msra.mxu0 %v2356
        %2413 = vmatprep.subr.bf16.mxu0 0
        %2414 = vmatpush1.bf16.msra.mxu0 %v2357
        %2415 = vmatprep.subr.bf16.mxu0 0
        %2416 = vmatpush1.bf16.msra.mxu0 %v2358
        %2417 = vmatprep.subr.bf16.mxu0 0
        %2418 = vmatpush1.bf16.msra.mxu0 %v2359
        %2419 = vmatprep.subr.bf16.mxu0 0
        %2420 = vmatpush1.bf16.msra.mxu0 %v2360
        %2421 = vmatprep.subr.bf16.mxu0 0
        %2422 = vmatpush1.bf16.msra.mxu0 %v2361
        %2423 = vmatprep.subr.bf16.mxu0 0
        %2424 = vmatpush1.bf16.msra.mxu0 %v2362
        %2425 = vmatprep.subr.bf16.mxu0 0
        %2426 = vmatpush1.bf16.msra.mxu0 %v2363
        %2427 = vmatprep.subr.bf16.mxu0 0
        %2428 = vmatpush1.bf16.msra.mxu0 %v2364
        %2429 = vmatprep.mubr.bf16.mxu0 %v2157
        %2430 = vmatmul.mubr.bf16.gmra.mrb[0].mxu0 %v2156
        %v2431 = vpop.f32.mrb[0].mxu0
        %v2432 = vadd.f32 0.0, %v2431
        %v2433 = vpop.f32.mrb[0].mxu0
        %v2434 = vpop.f32.mrb[0].mxu0
        %v2435 = vadd.f32 0.0, %v2434
        %v2436 = vpop.f32.mrb[0].mxu0
        %2437 = vmatprep.mubr.bf16.mxu0 %v2160
        %2438 = vmatmul.mubr.bf16.gmra.mrb[0].mxu0 %v2159
        %v2439 = vpop.f32.mrb[0].mxu0
        %v2440 = vadd.f32 0.0, %v2439
        %v2441 = vpop.f32.mrb[0].mxu0
        %v2442 = vpop.f32.mrb[0].mxu0
        %v2443 = vadd.f32 0.0, %v2442
        %v2444 = vpop.f32.mrb[0].mxu0
        %2445 = vmatprep.mubr.bf16.mxu0 %v2163
        %2446 = vmatmul.mubr.bf16.gmra.mrb[0].mxu0 %v2162
        %v2447 = vpop.f32.mrb[0].mxu0
        %v2448 = vadd.f32 0.0, %v2447
        %v2449 = vpop.f32.mrb[0].mxu0
        %v2450 = vpop.f32.mrb[0].mxu0
        %v2451 = vadd.f32 0.0, %v2450
        %v2452 = vpop.f32.mrb[0].mxu0
        %2453 = vmatprep.mubr.bf16.mxu0 %v2166
        %2454 = vmatmul.mubr.bf16.gmra.mrb[0].mxu0 %v2165
        %v2455 = vpop.f32.mrb[0].mxu0
        %v2456 = vadd.f32 0.0, %v2455
        %v2457 = vpop.f32.mrb[0].mxu0
        %v2458 = vpop.f32.mrb[0].mxu0
        %v2459 = vadd.f32 0.0, %v2458
        %v2460 = vpop.f32.mrb[0].mxu0
        %2461 = vmatprep.mubr.bf16.mxu0 %v2169
        %2462 = vmatmul.mubr.bf16.gmra.mrb[0].mxu0 %v2168
        %v2463 = vpop.f32.mrb[0].mxu0
        %v2464 = vadd.f32 0.0, %v2463
        %v2465 = vpop.f32.mrb[0].mxu0
        %v2466 = vpop.f32.mrb[0].mxu0
        %v2467 = vadd.f32 0.0, %v2466
        %v2468 = vpop.f32.mrb[0].mxu0
        %2469 = vmatprep.mubr.bf16.mxu0 %v2172
        %2470 = vmatmul.mubr.bf16.gmra.mrb[0].mxu0 %v2171
        %v2471 = vpop.f32.mrb[0].mxu0
        %v2472 = vadd.f32 0.0, %v2471
        %v2473 = vpop.f32.mrb[0].mxu0
        %v2474 = vpop.f32.mrb[0].mxu0
        %v2475 = vadd.f32 0.0, %v2474
        %v2476 = vpop.f32.mrb[0].mxu0
        %2477 = vmatprep.mubr.bf16.mxu0 %v2175
        %2478 = vmatmul.mubr.bf16.gmra.mrb[0].mxu0 %v2174
        %v2479 = vpop.f32.mrb[0].mxu0
        %v2480 = vadd.f32 0.0, %v2479
        %v2481 = vpop.f32.mrb[0].mxu0
        %v2482 = vpop.f32.mrb[0].mxu0
        %v2483 = vadd.f32 0.0, %v2482
        %v2484 = vpop.f32.mrb[0].mxu0
        %2485 = vmatprep.mubr.bf16.mxu0 %v2178
        %2486 = vmatmul.mubr.bf16.gmra.mrb[0].mxu0 %v2177
        %v2487 = vpop.f32.mrb[0].mxu0
        %v2488 = vadd.f32 0.0, %v2487
        %v2489 = vpop.f32.mrb[0].mxu0
        %v2490 = vpop.f32.mrb[0].mxu0
        %v2491 = vadd.f32 0.0, %v2490
        %v2492 = vpop.f32.mrb[0].mxu0
        %2493 = vmatprep.mubr.bf16.mxu0 %v2181
        %2494 = vmatmul.mubr.bf16.gmra.mrb[0].mxu0 %v2180
        %v2495 = vpop.f32.mrb[0].mxu0
        %v2496 = vadd.f32 0.0, %v2495
        %v2497 = vpop.f32.mrb[0].mxu0
        %v2498 = vpop.f32.mrb[0].mxu0
        %v2499 = vadd.f32 0.0, %v2498
        %v2500 = vpop.f32.mrb[0].mxu0
        %2501 = vmatprep.mubr.bf16.mxu0 %v2184
        %2502 = vmatmul.mubr.bf16.gmra.mrb[0].mxu0 %v2183
        %v2503 = vpop.f32.mrb[0].mxu0
        %v2504 = vadd.f32 0.0, %v2503
        %v2505 = vpop.f32.mrb[0].mxu0
        %v2506 = vpop.f32.mrb[0].mxu0
        %v2507 = vadd.f32 0.0, %v2506
        %v2508 = vpop.f32.mrb[0].mxu0
        %2509 = vmatprep.mubr.bf16.mxu0 %v2187
        %2510 = vmatmul.mubr.bf16.gmra.mrb[0].mxu0 %v2186
        %v2511 = vpop.f32.mrb[0].mxu0
        %v2512 = vadd.f32 0.0, %v2511
        %v2513 = vpop.f32.mrb[0].mxu0
        %v2514 = vpop.f32.mrb[0].mxu0
        %v2515 = vadd.f32 0.0, %v2514
        %v2516 = vpop.f32.mrb[0].mxu0
        %2517 = vmatprep.mubr.bf16.mxu0 %v2190
        %2518 = vmatmul.mubr.bf16.gmra.mrb[0].mxu0 %v2189
        %v2519 = vpop.f32.mrb[0].mxu0
        %v2520 = vadd.f32 0.0, %v2519
        %v2521 = vpop.f32.mrb[0].mxu0
        %v2522 = vpop.f32.mrb[0].mxu0
        %v2523 = vadd.f32 0.0, %v2522
        %v2524 = vpop.f32.mrb[0].mxu0
        %2525 = vmatprep.mubr.bf16.mxu0 %v2193
        %2526 = vmatmul.mubr.bf16.gmra.mrb[0].mxu0 %v2192
        %v2527 = vpop.f32.mrb[0].mxu0
        %v2528 = vadd.f32 0.0, %v2527
        %v2529 = vpop.f32.mrb[0].mxu0
        %v2530 = vpop.f32.mrb[0].mxu0
        %v2531 = vadd.f32 0.0, %v2530
        %v2532 = vpop.f32.mrb[0].mxu0
        %2533 = vmatprep.mubr.bf16.mxu0 %v2196
        %2534 = vmatmul.mubr.bf16.gmra.mrb[0].mxu0 %v2195
        %v2535 = vpop.f32.mrb[0].mxu0
        %v2536 = vadd.f32 0.0, %v2535
        %v2537 = vpop.f32.mrb[0].mxu0
        %v2538 = vpop.f32.mrb[0].mxu0
        %v2539 = vadd.f32 0.0, %v2538
        %v2540 = vpop.f32.mrb[0].mxu0
        %2541 = vmatprep.mubr.bf16.mxu0 %v2199
        %2542 = vmatmul.mubr.bf16.gmra.mrb[0].mxu0 %v2198
        %v2543 = vpop.f32.mrb[0].mxu0
        %v2544 = vadd.f32 0.0, %v2543
        %v2545 = vpop.f32.mrb[0].mxu0
        %v2546 = vpop.f32.mrb[0].mxu0
        %v2547 = vadd.f32 0.0, %v2546
        %v2548 = vpop.f32.mrb[0].mxu0
        %2549 = vmatprep.mubr.bf16.mxu0 %v2202
        %2550 = vmatmul.mubr.bf16.gmra.mrb[0].mxu0 %v2201
        %v2551 = vpop.f32.mrb[0].mxu0
        %v2552 = vadd.f32 0.0, %v2551
        %v2553 = vpop.f32.mrb[0].mxu0
        %v2554 = vpop.f32.mrb[0].mxu0
        %v2555 = vadd.f32 0.0, %v2554
        %v2556 = vpop.f32.mrb[0].mxu0
        %2557 = vdwg.mxu0
        %2558 = vmatprep.subr.bf16.mxu0 0
        %2559 = vmatpush1.bf16.msra.mxu0 %v2365
        %2560 = vmatprep.subr.bf16.mxu0 0
        %2561 = vmatpush1.bf16.msra.mxu0 %v2366
        %2562 = vmatprep.subr.bf16.mxu0 0
        %2563 = vmatpush1.bf16.msra.mxu0 %v2367
        %2564 = vmatprep.subr.bf16.mxu0 0
        %2565 = vmatpush1.bf16.msra.mxu0 %v2368
        %2566 = vmatprep.subr.bf16.mxu0 0
        %2567 = vmatpush1.bf16.msra.mxu0 %v2369
        %2568 = vmatprep.subr.bf16.mxu0 0
        %2569 = vmatpush1.bf16.msra.mxu0 %v2370
        %2570 = vmatprep.subr.bf16.mxu0 0
        %2571 = vmatpush1.bf16.msra.mxu0 %v2371
        %2572 = vmatprep.subr.bf16.mxu0 0
        %2573 = vmatpush1.bf16.msra.mxu0 %v2372
        %2574 = vmatprep.subr.bf16.mxu0 0
        %2575 = vmatpush1.bf16.msra.mxu0 0
        %2576 = vmatprep.subr.bf16.mxu0 0
        %2577 = vmatpush1.bf16.msra.mxu0 0
        %2578 = vmatprep.subr.bf16.mxu0 0
        %2579 = vmatpush1.bf16.msra.mxu0 0
        %2580 = vmatprep.subr.bf16.mxu0 0
        %2581 = vmatpush1.bf16.msra.mxu0 0
        %2582 = vmatprep.subr.bf16.mxu0 0
        %2583 = vmatpush1.bf16.msra.mxu0 0
        %2584 = vmatprep.subr.bf16.mxu0 0
        %2585 = vmatpush1.bf16.msra.mxu0 0
        %2586 = vmatprep.subr.bf16.mxu0 0
        %2587 = vmatpush1.bf16.msra.mxu0 0
        %2588 = vmatprep.subr.bf16.mxu0 0
        %2589 = vmatpush1.bf16.msra.mxu0 0
        %2590 = vmatprep.mubr.bf16.mxu0 0
        %2591 = vmatmul.mubr.bf16.gmra.mrb[0].mxu0 %v2158
        %v2592 = vpop.f32.mrb[0].mxu0
        %v2593 = vadd.f32 %v2432, %v2592
        %v2594 = vpop.f32.mrb[0].mxu0
        %v2595 = vpop.f32.mrb[0].mxu0
        %v2596 = vadd.f32 %v2435, %v2595
        %v2597 = vpop.f32.mrb[0].mxu0
        %2598 = vmatprep.mubr.bf16.mxu0 0
        %2599 = vmatmul.mubr.bf16.gmra.mrb[0].mxu0 %v2161
        %v2600 = vpop.f32.mrb[0].mxu0
        %v2601 = vadd.f32 %v2440, %v2600
        %v2602 = vpop.f32.mrb[0].mxu0
        %v2603 = vpop.f32.mrb[0].mxu0
        %v2604 = vadd.f32 %v2443, %v2603
        %v2605 = vpop.f32.mrb[0].mxu0
        %2606 = vmatprep.mubr.bf16.mxu0 0
        %2607 = vmatmul.mubr.bf16.gmra.mrb[0].mxu0 %v2164
        %v2608 = vpop.f32.mrb[0].mxu0
        %v2609 = vadd.f32 %v2448, %v2608
        %v2610 = vpop.f32.mrb[0].mxu0
        %v2611 = vpop.f32.mrb[0].mxu0
        %v2612 = vadd.f32 %v2451, %v2611
        %v2613 = vpop.f32.mrb[0].mxu0
        %2614 = vmatprep.mubr.bf16.mxu0 0
        %2615 = vmatmul.mubr.bf16.gmra.mrb[0].mxu0 %v2167
        %v2616 = vpop.f32.mrb[0].mxu0
        %v2617 = vadd.f32 %v2456, %v2616
        %v2618 = vpop.f32.mrb[0].mxu0
        %v2619 = vpop.f32.mrb[0].mxu0
        %v2620 = vadd.f32 %v2459, %v2619
        %v2621 = vpop.f32.mrb[0].mxu0
        %2622 = vmatprep.mubr.bf16.mxu0 0
        %2623 = vmatmul.mubr.bf16.gmra.mrb[0].mxu0 %v2170
        %v2624 = vpop.f32.mrb[0].mxu0
        %v2625 = vadd.f32 %v2464, %v2624
        %v2626 = vpop.f32.mrb[0].mxu0
        %v2627 = vpop.f32.mrb[0].mxu0
        %v2628 = vadd.f32 %v2467, %v2627
        %v2629 = vpop.f32.mrb[0].mxu0
        %2630 = vmatprep.mubr.bf16.mxu0 0
        %2631 = vmatmul.mubr.bf16.gmra.mrb[0].mxu0 %v2173
        %v2632 = vpop.f32.mrb[0].mxu0
        %v2633 = vadd.f32 %v2472, %v2632
        %v2634 = vpop.f32.mrb[0].mxu0
        %v2635 = vpop.f32.mrb[0].mxu0
        %v2636 = vadd.f32 %v2475, %v2635
        %v2637 = vpop.f32.mrb[0].mxu0
        %2638 = vmatprep.mubr.bf16.mxu0 0
        %2639 = vmatmul.mubr.bf16.gmra.mrb[0].mxu0 %v2176
        %v2640 = vpop.f32.mrb[0].mxu0
        %v2641 = vadd.f32 %v2480, %v2640
        %v2642 = vpop.f32.mrb[0].mxu0
        %v2643 = vpop.f32.mrb[0].mxu0
        %v2644 = vadd.f32 %v2483, %v2643
        %v2645 = vpop.f32.mrb[0].mxu0
        %2646 = vmatprep.mubr.bf16.mxu0 0
        %2647 = vmatmul.mubr.bf16.gmra.mrb[0].mxu0 %v2179
        %v2648 = vpop.f32.mrb[0].mxu0
        %v2649 = vadd.f32 %v2488, %v2648
        %v2650 = vpop.f32.mrb[0].mxu0
        %v2651 = vpop.f32.mrb[0].mxu0
        %v2652 = vadd.f32 %v2491, %v2651
        %v2653 = vpop.f32.mrb[0].mxu0
        %2654 = vmatprep.mubr.bf16.mxu0 0
        %2655 = vmatmul.mubr.bf16.gmra.mrb[0].mxu0 %v2182
        %v2656 = vpop.f32.mrb[0].mxu0
        %v2657 = vadd.f32 %v2496, %v2656
        %v2658 = vpop.f32.mrb[0].mxu0
        %v2659 = vpop.f32.mrb[0].mxu0
        %v2660 = vadd.f32 %v2499, %v2659
        %v2661 = vpop.f32.mrb[0].mxu0
        %2662 = vmatprep.mubr.bf16.mxu0 0
        %2663 = vmatmul.mubr.bf16.gmra.mrb[0].mxu0 %v2185
        %v2664 = vpop.f32.mrb[0].mxu0
        %v2665 = vadd.f32 %v2504, %v2664
        %v2666 = vpop.f32.mrb[0].mxu0
        %v2667 = vpop.f32.mrb[0].mxu0
        %v2668 = vadd.f32 %v2507, %v2667
        %v2669 = vpop.f32.mrb[0].mxu0
        %2670 = vmatprep.mubr.bf16.mxu0 0
        %2671 = vmatmul.mubr.bf16.gmra.mrb[0].mxu0 %v2188
        %v2672 = vpop.f32.mrb[0].mxu0
        %v2673 = vadd.f32 %v2512, %v2672
        %v2674 = vpop.f32.mrb[0].mxu0
        %v2675 = vpop.f32.mrb[0].mxu0
        %v2676 = vadd.f32 %v2515, %v2675
        %v2677 = vpop.f32.mrb[0].mxu0
        %2678 = vmatprep.mubr.bf16.mxu0 0
        %2679 = vmatmul.mubr.bf16.gmra.mrb[0].mxu0 %v2191
        %v2680 = vpop.f32.mrb[0].mxu0
        %v2681 = vadd.f32 %v2520, %v2680
        %v2682 = vpop.f32.mrb[0].mxu0
        %v2683 = vpop.f32.mrb[0].mxu0
        %v2684 = vadd.f32 %v2523, %v2683
        %v2685 = vpop.f32.mrb[0].mxu0
        %2686 = vmatprep.mubr.bf16.mxu0 0
        %2687 = vmatmul.mubr.bf16.gmra.mrb[0].mxu0 %v2194
        %v2688 = vpop.f32.mrb[0].mxu0
        %v2689 = vadd.f32 %v2528, %v2688
        %v2690 = vpop.f32.mrb[0].mxu0
        %v2691 = vpop.f32.mrb[0].mxu0
        %v2692 = vadd.f32 %v2531, %v2691
        %v2693 = vpop.f32.mrb[0].mxu0
        %2694 = vmatprep.mubr.bf16.mxu0 0
        %2695 = vmatmul.mubr.bf16.gmra.mrb[0].mxu0 %v2197
        %v2696 = vpop.f32.mrb[0].mxu0
        %v2697 = vadd.f32 %v2536, %v2696
        %v2698 = vpop.f32.mrb[0].mxu0
        %v2699 = vpop.f32.mrb[0].mxu0
        %v2700 = vadd.f32 %v2539, %v2699
        %v2701 = vpop.f32.mrb[0].mxu0
        %2702 = vmatprep.mubr.bf16.mxu0 0
        %2703 = vmatmul.mubr.bf16.gmra.mrb[0].mxu0 %v2200
        %v2704 = vpop.f32.mrb[0].mxu0
        %v2705 = vadd.f32 %v2544, %v2704
        %v2706 = vpop.f32.mrb[0].mxu0
        %v2707 = vpop.f32.mrb[0].mxu0
        %v2708 = vadd.f32 %v2547, %v2707
        %v2709 = vpop.f32.mrb[0].mxu0
        %2710 = vmatprep.mubr.bf16.mxu0 0
        %2711 = vmatmul.mubr.bf16.gmra.mrb[0].mxu0 %v2203
        %v2712 = vpop.f32.mrb[0].mxu0
        %v2713 = vadd.f32 %v2552, %v2712
        %v2714 = vpop.f32.mrb[0].mxu0
        %v2715 = vpop.f32.mrb[0].mxu0
        %v2716 = vadd.f32 %v2555, %v2715
        %v2717 = vpop.f32.mrb[0].mxu0
        %2718 = vdwg.mxu0
        %v2719 = vadd.f32 %v2123, %v2593
        %v2720 = vadd.f32 %v2124, %v2596
        %v2721 = vadd.f32 %v2125, %v2601
        %v2722 = vadd.f32 %v2126, %v2604
        %v2723 = vadd.f32 %v2127, %v2609
        %v2724 = vadd.f32 %v2128, %v2612
        %v2725 = vadd.f32 %v2129, %v2617
        %v2726 = vadd.f32 %v2130, %v2620
        %v2727 = vadd.f32 %v2131, %v2625
        %v2728 = vadd.f32 %v2132, %v2628
        %v2729 = vadd.f32 %v2133, %v2633
        %v2730 = vadd.f32 %v2134, %v2636
        %v2731 = vadd.f32 %v2135, %v2641
        %v2732 = vadd.f32 %v2136, %v2644
        %v2733 = vadd.f32 %v2137, %v2649
        %v2734 = vadd.f32 %v2138, %v2652
        %v2735 = vadd.f32 %v2139, %v2657
        %v2736 = vadd.f32 %v2140, %v2660
        %v2737 = vadd.f32 %v2141, %v2665
        %v2738 = vadd.f32 %v2142, %v2668
        %v2739 = vadd.f32 %v2143, %v2673
        %v2740 = vadd.f32 %v2144, %v2676
        %v2741 = vadd.f32 %v2145, %v2681
        %v2742 = vadd.f32 %v2146, %v2684
        %v2743 = vadd.f32 %v2147, %v2689
        %v2744 = vadd.f32 %v2148, %v2692
        %v2745 = vadd.f32 %v2149, %v2697
        %v2746 = vadd.f32 %v2150, %v2700
        %v2747 = vadd.f32 %v2151, %v2705
        %v2748 = vadd.f32 %v2152, %v2708
        %v2749 = vadd.f32 %v2153, %v2713
        %v2750 = vadd.f32 %v2154, %v2716
        %2751 = vst [vmem:[#allocation4] sm:$0xff] %v2719
        %2752 = vst [vmem:[#allocation4 + $0x8] sm:$0xff] %v2720
        %2753 = vst [vmem:[#allocation4 + $0x10] sm:$0xff] %v2721
        %2754 = vst [vmem:[#allocation4 + $0x18] sm:$0xff] %v2722
        %2755 = vst [vmem:[#allocation4 + $0x20] sm:$0xff] %v2723
        %2756 = vst [vmem:[#allocation4 + $0x28] sm:$0xff] %v2724
        %2757 = vst [vmem:[#allocation4 + $0x30] sm:$0xff] %v2725
        %2758 = vst [vmem:[#allocation4 + $0x38] sm:$0xff] %v2726
        %2759 = vst [vmem:[#allocation4 + $0x40] sm:$0xff] %v2727
        %2760 = vst [vmem:[#allocation4 + $0x48] sm:$0xff] %v2728
        %2761 = vst [vmem:[#allocation4 + $0x50] sm:$0xff] %v2729
        %2762 = vst [vmem:[#allocation4 + $0x58] sm:$0xff] %v2730
        %2763 = vst [vmem:[#allocation4 + $0x60] sm:$0xff] %v2731
        %2764 = vst [vmem:[#allocation4 + $0x68] sm:$0xff] %v2732
        %2765 = vst [vmem:[#allocation4 + $0x70] sm:$0xff] %v2733
        %2766 = vst [vmem:[#allocation4 + $0x78] sm:$0xff] %v2734
        %2767 = vst [vmem:[#allocation4 + $0x80] sm:$0xff] %v2735
        %2768 = vst [vmem:[#allocation4 + $0x88] sm:$0xff] %v2736
        %2769 = vst [vmem:[#allocation4 + $0x90] sm:$0xff] %v2737
        %2770 = vst [vmem:[#allocation4 + $0x98] sm:$0xff] %v2738
        %2771 = vst [vmem:[#allocation4 + $0xa0] sm:$0xff] %v2739
        %2772 = vst [vmem:[#allocation4 + $0xa8] sm:$0xff] %v2740
        %2773 = vst [vmem:[#allocation4 + $0xb0] sm:$0xff] %v2741
        %2774 = vst [vmem:[#allocation4 + $0xb8] sm:$0xff] %v2742
        %2775 = vst [vmem:[#allocation4 + $0xc0] sm:$0xff] %v2743
        %2776 = vst [vmem:[#allocation4 + $0xc8] sm:$0xff] %v2744
        %2777 = vst [vmem:[#allocation4 + $0xd0] sm:$0xff] %v2745
        %2778 = vst [vmem:[#allocation4 + $0xd8] sm:$0xff] %v2746
        %2779 = vst [vmem:[#allocation4 + $0xe0] sm:$0xff] %v2747
        %2780 = vst [vmem:[#allocation4 + $0xe8] sm:$0xff] %v2748
        %2781 = vst [vmem:[#allocation4 + $0xf0] sm:$0xff] %v2749
        %2782 = vst [vmem:[#allocation4 + $0xf8] sm:$0xff] %v2750
        %v2783 = vld [vmem:[#allocation4] sm:$0xff]
        %v2784 = vld [vmem:[#allocation4 + $0x8] sm:$0xff]
        %v2785 = vld [vmem:[#allocation4 + $0x10] sm:$0xff]
        %v2786 = vld [vmem:[#allocation4 + $0x18] sm:$0xff]
        %v2787 = vld [vmem:[#allocation4 + $0x20] sm:$0xff]
        %v2788 = vld [vmem:[#allocation4 + $0x28] sm:$0xff]
        %v2789 = vld [vmem:[#allocation4 + $0x30] sm:$0xff]
        %v2790 = vld [vmem:[#allocation4 + $0x38] sm:$0xff]
        %v2791 = vld [vmem:[#allocation4 + $0x40] sm:$0xff]
        %v2792 = vld [vmem:[#allocation4 + $0x48] sm:$0xff]
        %v2793 = vld [vmem:[#allocation4 + $0x50] sm:$0xff]
        %v2794 = vld [vmem:[#allocation4 + $0x58] sm:$0xff]
        %v2795 = vld [vmem:[#allocation4 + $0x60] sm:$0xff]
        %v2796 = vld [vmem:[#allocation4 + $0x68] sm:$0xff]
        %v2797 = vld [vmem:[#allocation4 + $0x70] sm:$0xff]
        %v2798 = vld [vmem:[#allocation4 + $0x78] sm:$0xff]
        %v2799 = vld [vmem:[#allocation4 + $0x80] sm:$0xff]
        %v2800 = vld [vmem:[#allocation4 + $0x88] sm:$0xff]
        %v2801 = vld [vmem:[#allocation4 + $0x90] sm:$0xff]
        %v2802 = vld [vmem:[#allocation4 + $0x98] sm:$0xff]
        %v2803 = vld [vmem:[#allocation4 + $0xa0] sm:$0xff]
        %v2804 = vld [vmem:[#allocation4 + $0xa8] sm:$0xff]
        %v2805 = vld [vmem:[#allocation4 + $0xb0] sm:$0xff]
        %v2806 = vld [vmem:[#allocation4 + $0xb8] sm:$0xff]
        %v2807 = vld [vmem:[#allocation4 + $0xc0] sm:$0xff]
        %v2808 = vld [vmem:[#allocation4 + $0xc8] sm:$0xff]
        %v2809 = vld [vmem:[#allocation4 + $0xd0] sm:$0xff]
        %v2810 = vld [vmem:[#allocation4 + $0xd8] sm:$0xff]
        %v2811 = vld [vmem:[#allocation4 + $0xe0] sm:$0xff]
        %v2812 = vld [vmem:[#allocation4 + $0xe8] sm:$0xff]
        %v2813 = vld [vmem:[#allocation4 + $0xf0] sm:$0xff]
        %v2814 = vld [vmem:[#allocation4 + $0xf8] sm:$0xff]
        %s2815 = scalar_lea.vmem [#allocation3], 48
        %v2816 = vld [vmem:[%s2815] sm:$0xff]
        %v2817 = vld [vmem:[%s2815 + $0x8] sm:$0xff]
        %v2818 = vld [vmem:[%s2815 + $0x10] sm:$0xff]
        %v2819 = vld [vmem:[%s2815 + $0x18] sm:$0xff]
        %v2820 = vld [vmem:[%s2815 + $0x20] sm:$0xff]
        %v2821 = vld [vmem:[%s2815 + $0x28] sm:$0xff]
        %v2822 = vld [vmem:[%s2815 + $0x30] sm:$0xff]
        %v2823 = vld [vmem:[%s2815 + $0x38] sm:$0xff]
        %v2824 = vld [vmem:[%s2815 + $0x40] sm:$0xff]
        %v2825 = vld [vmem:[%s2815 + $0x48] sm:$0xff]
        %v2826 = vld [vmem:[%s2815 + $0x50] sm:$0xff]
        %v2827 = vld [vmem:[%s2815 + $0x58] sm:$0xff]
        %v2828 = vld [vmem:[%s2815 + $0x60] sm:$0xff]
        %v2829 = vld [vmem:[%s2815 + $0x68] sm:$0xff]
        %v2830 = vld [vmem:[%s2815 + $0x70] sm:$0xff]
        %v2831 = vld [vmem:[%s2815 + $0x78] sm:$0xff]
        %v2832 = vld [vmem:[%s2815 + $0x80] sm:$0xff]
        %v2833 = vld [vmem:[%s2815 + $0x88] sm:$0xff]
        %v2834 = vld [vmem:[%s2815 + $0x90] sm:$0xff]
        %v2835 = vld [vmem:[%s2815 + $0x98] sm:$0xff]
        %v2836 = vld [vmem:[%s2815 + $0xa0] sm:$0xff]
        %v2837 = vld [vmem:[%s2815 + $0xa8] sm:$0xff]
        %v2838 = vld [vmem:[%s2815 + $0xb0] sm:$0xff]
        %v2839 = vld [vmem:[%s2815 + $0xb8] sm:$0xff]
        %v2840 = vld [vmem:[%s2815 + $0xc0] sm:$0xff]
        %v2841 = vld [vmem:[%s2815 + $0xc8] sm:$0xff]
        %v2842 = vld [vmem:[%s2815 + $0xd0] sm:$0xff]
        %v2843 = vld [vmem:[%s2815 + $0xd8] sm:$0xff]
        %v2844 = vld [vmem:[%s2815 + $0xe0] sm:$0xff]
        %v2845 = vld [vmem:[%s2815 + $0xe8] sm:$0xff]
        %v2846 = vld [vmem:[%s2815 + $0xf0] sm:$0xff]
        %v2847 = vld [vmem:[%s2815 + $0xf8] sm:$0xff]
        %v2848 = vld [vmem:[%s2815 + $0x100] sm:$0xff]
        %v2849 = vld [vmem:[%s2815 + $0x108] sm:$0xff]
        %v2850 = vld [vmem:[%s2815 + $0x110] sm:$0xff]
        %v2851 = vld [vmem:[%s2815 + $0x118] sm:$0xff]
        %v2852 = vld [vmem:[%s2815 + $0x120] sm:$0xff]
        %v2853 = vld [vmem:[%s2815 + $0x128] sm:$0xff]
        %v2854 = vld [vmem:[%s2815 + $0x130] sm:$0xff]
        %v2855 = vld [vmem:[%s2815 + $0x138] sm:$0xff]
        %v2856 = vld [vmem:[%s2815 + $0x140] sm:$0xff]
        %v2857 = vld [vmem:[%s2815 + $0x148] sm:$0xff]
        %v2858 = vld [vmem:[%s2815 + $0x150] sm:$0xff]
        %v2859 = vld [vmem:[%s2815 + $0x158] sm:$0xff]
        %v2860 = vld [vmem:[%s2815 + $0x160] sm:$0xff]
        %v2861 = vld [vmem:[%s2815 + $0x168] sm:$0xff]
        %v2862 = vld [vmem:[%s2815 + $0x170] sm:$0xff]
        %v2863 = vld [vmem:[%s2815 + $0x178] sm:$0xff]
        %s2864 = scalar_lea.vmem [#allocation13], 384
        %v2865 = vld [vmem:[%s2864] sm:$0xf]
        %v2866 = vld [vmem:[%s2864 + $0x4] sm:$0xf]
        %v2867 = vld [vmem:[%s2864 + $0x8] sm:$0xf]
        %v2868 = vld [vmem:[%s2864 + $0xc] sm:$0xf]
        %v2869 = vld [vmem:[%s2864 + $0x10] sm:$0xf]
        %v2870 = vld [vmem:[%s2864 + $0x14] sm:$0xf]
        %v2871 = vld [vmem:[%s2864 + $0x18] sm:$0xf]
        %v2872 = vld [vmem:[%s2864 + $0x1c] sm:$0xf]
        %v2873 = vld [vmem:[%s2864 + $0x20] sm:$0xf]
        %v2874 = vld [vmem:[%s2864 + $0x24] sm:$0xf]
        %v2875 = vld [vmem:[%s2864 + $0x28] sm:$0xf]
        %v2876 = vld [vmem:[%s2864 + $0x2c] sm:$0xf]
        %v2877 = vld [vmem:[%s2864 + $0x30] sm:$0xf]
        %v2878 = vld [vmem:[%s2864 + $0x34] sm:$0xf]
        %v2879 = vld [vmem:[%s2864 + $0x38] sm:$0xf]
        %v2880 = vld [vmem:[%s2864 + $0x3c] sm:$0xf]
        %v2881 = vld [vmem:[%s2864 + $0x40] sm:$0xf]
        %v2882 = vld [vmem:[%s2864 + $0x44] sm:$0xf]
        %v2883 = vld [vmem:[%s2864 + $0x48] sm:$0xf]
        %v2884 = vld [vmem:[%s2864 + $0x4c] sm:$0xf]
        %v2885 = vld [vmem:[%s2864 + $0x50] sm:$0xf]
        %v2886 = vld [vmem:[%s2864 + $0x54] sm:$0xf]
        %v2887 = vld [vmem:[%s2864 + $0x58] sm:$0xf]
        %v2888 = vld [vmem:[%s2864 + $0x5c] sm:$0xf]
        %v2889 = vld [vmem:[%s2864 + $0x60] sm:$0xf]
        %v2890 = vld [vmem:[%s2864 + $0x64] sm:$0xf]
        %v2891 = vld [vmem:[%s2864 + $0x68] sm:$0xf]
        %v2892 = vld [vmem:[%s2864 + $0x6c] sm:$0xf]
        %v2893 = vld [vmem:[%s2864 + $0x70] sm:$0xf]
        %v2894 = vld [vmem:[%s2864 + $0x74] sm:$0xf]
        %v2895 = vld [vmem:[%s2864 + $0x78] sm:$0xf]
        %v2896 = vld [vmem:[%s2864 + $0x7c] sm:$0xf]
        %v2897 = vld [vmem:[%s2864 + $0x80] sm:$0xf]
        %v2898 = vld [vmem:[%s2864 + $0x84] sm:$0xf]
        %v2899 = vld [vmem:[%s2864 + $0x88] sm:$0xf]
        %v2900 = vld [vmem:[%s2864 + $0x8c] sm:$0xf]
        %v2901 = vld [vmem:[%s2864 + $0x90] sm:$0xf]
        %v2902 = vld [vmem:[%s2864 + $0x94] sm:$0xf]
        %v2903 = vld [vmem:[%s2864 + $0x98] sm:$0xf]
        %v2904 = vld [vmem:[%s2864 + $0x9c] sm:$0xf]
        %v2905 = vld [vmem:[%s2864 + $0xa0] sm:$0xf]
        %v2906 = vld [vmem:[%s2864 + $0xa4] sm:$0xf]
        %v2907 = vld [vmem:[%s2864 + $0xa8] sm:$0xf]
        %v2908 = vld [vmem:[%s2864 + $0xac] sm:$0xf]
        %v2909 = vld [vmem:[%s2864 + $0xb0] sm:$0xf]
        %v2910 = vld [vmem:[%s2864 + $0xb4] sm:$0xf]
        %v2911 = vld [vmem:[%s2864 + $0xb8] sm:$0xf]
        %v2912 = vld [vmem:[%s2864 + $0xbc] sm:$0xf]
        %v2961 = vunpack.c.l.b16 %v2865
        %v2962 = vunpack.c.l.b16 %v2866
        %v2963 = vunpack.c.l.b16 %v2867
        %v2964 = vunpack.c.l.b16 %v2868
        %v2965 = vunpack.c.l.b16 %v2869
        %v2966 = vunpack.c.l.b16 %v2870
        %v2967 = vunpack.c.l.b16 %v2871
        %v2968 = vunpack.c.l.b16 %v2872
        %v2969 = vunpack.c.l.b16 %v2873
        %v2970 = vunpack.c.l.b16 %v2874
        %v2971 = vunpack.c.l.b16 %v2875
        %v2972 = vunpack.c.l.b16 %v2876
        %v2973 = vunpack.c.l.b16 %v2877
        %v2974 = vunpack.c.l.b16 %v2878
        %v2975 = vunpack.c.l.b16 %v2879
        %v2976 = vunpack.c.l.b16 %v2880
        %v2977 = vunpack.c.l.b16 %v2881
        %v2978 = vunpack.c.l.b16 %v2882
        %v2979 = vunpack.c.l.b16 %v2883
        %v2980 = vunpack.c.l.b16 %v2884
        %v2981 = vunpack.c.l.b16 %v2885
        %v2982 = vunpack.c.l.b16 %v2886
        %v2983 = vunpack.c.l.b16 %v2887
        %v2984 = vunpack.c.l.b16 %v2888
        %v2985 = vunpack.c.l.b16 %v2889
        %v2986 = vunpack.c.l.b16 %v2890
        %v2987 = vunpack.c.l.b16 %v2891
        %v2988 = vunpack.c.l.b16 %v2892
        %v2989 = vunpack.c.l.b16 %v2893
        %v2990 = vunpack.c.l.b16 %v2894
        %v2991 = vunpack.c.l.b16 %v2895
        %v2992 = vunpack.c.l.b16 %v2896
        %v2993 = vunpack.c.l.b16 %v2897
        %v2994 = vunpack.c.l.b16 %v2898
        %v2995 = vunpack.c.l.b16 %v2899
        %v2996 = vunpack.c.l.b16 %v2900
        %v2997 = vunpack.c.l.b16 %v2901
        %v2998 = vunpack.c.l.b16 %v2902
        %v2999 = vunpack.c.l.b16 %v2903
        %v3000 = vunpack.c.l.b16 %v2904
        %v3001 = vunpack.c.l.b16 %v2905
        %v3002 = vunpack.c.l.b16 %v2906
        %v3003 = vunpack.c.l.b16 %v2907
        %v3004 = vunpack.c.l.b16 %v2908
        %v3005 = vunpack.c.l.b16 %v2909
        %v3006 = vunpack.c.l.b16 %v2910
        %v3007 = vunpack.c.l.b16 %v2911
        %v3008 = vunpack.c.l.b16 %v2912
        %v3009 = vpack.c.b16 %v2962, %v2961
        %v3010 = vpack.c.b16 %v2964, %v2963
        %v3011 = vpack.c.b16 %v2966, %v2965
        %v3012 = vpack.c.b16 %v2968, %v2967
        %v3013 = vpack.c.b16 %v2970, %v2969
        %v3014 = vpack.c.b16 %v2972, %v2971
        %v3015 = vpack.c.b16 %v2974, %v2973
        %v3016 = vpack.c.b16 %v2976, %v2975
        %v3017 = vpack.c.b16 %v2978, %v2977
        %v3018 = vpack.c.b16 %v2980, %v2979
        %v3019 = vpack.c.b16 %v2982, %v2981
        %v3020 = vpack.c.b16 %v2984, %v2983
        %v3021 = vpack.c.b16 %v2986, %v2985
        %v3022 = vpack.c.b16 %v2988, %v2987
        %v3023 = vpack.c.b16 %v2990, %v2989
        %v3024 = vpack.c.b16 %v2992, %v2991
        %v3025 = vpack.c.b16 %v2994, %v2993
        %v3026 = vpack.c.b16 %v2996, %v2995
        %v3027 = vpack.c.b16 %v2998, %v2997
        %v3028 = vpack.c.b16 %v3000, %v2999
        %v3029 = vpack.c.b16 %v3002, %v3001
        %v3030 = vpack.c.b16 %v3004, %v3003
        %v3031 = vpack.c.b16 %v3006, %v3005
        %v3032 = vpack.c.b16 %v3008, %v3007
        %3057 = vmatprep.subr.bf16.mxu0 0
        %3058 = vmatpush1.bf16.msra.mxu0 %v3009
        %3059 = vmatprep.subr.bf16.mxu0 0
        %3060 = vmatpush1.bf16.msra.mxu0 %v3010
        %3061 = vmatprep.subr.bf16.mxu0 0
        %3062 = vmatpush1.bf16.msra.mxu0 %v3011
        %3063 = vmatprep.subr.bf16.mxu0 0
        %3064 = vmatpush1.bf16.msra.mxu0 %v3012
        %3065 = vmatprep.subr.bf16.mxu0 0
        %3066 = vmatpush1.bf16.msra.mxu0 %v3013
        %3067 = vmatprep.subr.bf16.mxu0 0
        %3068 = vmatpush1.bf16.msra.mxu0 %v3014
        %3069 = vmatprep.subr.bf16.mxu0 0
        %3070 = vmatpush1.bf16.msra.mxu0 %v3015
        %3071 = vmatprep.subr.bf16.mxu0 0
        %3072 = vmatpush1.bf16.msra.mxu0 %v3016
        %3073 = vmatprep.subr.bf16.mxu0 0
        %3074 = vmatpush1.bf16.msra.mxu0 %v3017
        %3075 = vmatprep.subr.bf16.mxu0 0
        %3076 = vmatpush1.bf16.msra.mxu0 %v3018
        %3077 = vmatprep.subr.bf16.mxu0 0
        %3078 = vmatpush1.bf16.msra.mxu0 %v3019
        %3079 = vmatprep.subr.bf16.mxu0 0
        %3080 = vmatpush1.bf16.msra.mxu0 %v3020
        %3081 = vmatprep.subr.bf16.mxu0 0
        %3082 = vmatpush1.bf16.msra.mxu0 %v3021
        %3083 = vmatprep.subr.bf16.mxu0 0
        %3084 = vmatpush1.bf16.msra.mxu0 %v3022
        %3085 = vmatprep.subr.bf16.mxu0 0
        %3086 = vmatpush1.bf16.msra.mxu0 %v3023
        %3087 = vmatprep.subr.bf16.mxu0 0
        %3088 = vmatpush1.bf16.msra.mxu0 %v3024
        %3089 = vmatprep.mubr.bf16.mxu0 %v2817
        %3090 = vmatmul.mubr.bf16.gmra.mrb[0].mxu0 %v2816
        %v3091 = vpop.f32.mrb[0].mxu0
        %v3092 = vadd.f32 0.0, %v3091
        %v3093 = vpop.f32.mrb[0].mxu0
        %v3094 = vpop.f32.mrb[0].mxu0
        %v3095 = vadd.f32 0.0, %v3094
        %v3096 = vpop.f32.mrb[0].mxu0
        %3097 = vmatprep.mubr.bf16.mxu0 %v2820
        %3098 = vmatmul.mubr.bf16.gmra.mrb[0].mxu0 %v2819
        %v3099 = vpop.f32.mrb[0].mxu0
        %v3100 = vadd.f32 0.0, %v3099
        %v3101 = vpop.f32.mrb[0].mxu0
        %v3102 = vpop.f32.mrb[0].mxu0
        %v3103 = vadd.f32 0.0, %v3102
        %v3104 = vpop.f32.mrb[0].mxu0
        %3105 = vmatprep.mubr.bf16.mxu0 %v2823
        %3106 = vmatmul.mubr.bf16.gmra.mrb[0].mxu0 %v2822
        %v3107 = vpop.f32.mrb[0].mxu0
        %v3108 = vadd.f32 0.0, %v3107
        %v3109 = vpop.f32.mrb[0].mxu0
        %v3110 = vpop.f32.mrb[0].mxu0
        %v3111 = vadd.f32 0.0, %v3110
        %v3112 = vpop.f32.mrb[0].mxu0
        %3113 = vmatprep.mubr.bf16.mxu0 %v2826
        %3114 = vmatmul.mubr.bf16.gmra.mrb[0].mxu0 %v2825
        %v3115 = vpop.f32.mrb[0].mxu0
        %v3116 = vadd.f32 0.0, %v3115
        %v3117 = vpop.f32.mrb[0].mxu0
        %v3118 = vpop.f32.mrb[0].mxu0
        %v3119 = vadd.f32 0.0, %v3118
        %v3120 = vpop.f32.mrb[0].mxu0
        %3121 = vmatprep.mubr.bf16.mxu0 %v2829
        %3122 = vmatmul.mubr.bf16.gmra.mrb[0].mxu0 %v2828
        %v3123 = vpop.f32.mrb[0].mxu0
        %v3124 = vadd.f32 0.0, %v3123
        %v3125 = vpop.f32.mrb[0].mxu0
        %v3126 = vpop.f32.mrb[0].mxu0
        %v3127 = vadd.f32 0.0, %v3126
        %v3128 = vpop.f32.mrb[0].mxu0
        %3129 = vmatprep.mubr.bf16.mxu0 %v2832
        %3130 = vmatmul.mubr.bf16.gmra.mrb[0].mxu0 %v2831
        %v3131 = vpop.f32.mrb[0].mxu0
        %v3132 = vadd.f32 0.0, %v3131
        %v3133 = vpop.f32.mrb[0].mxu0
        %v3134 = vpop.f32.mrb[0].mxu0
        %v3135 = vadd.f32 0.0, %v3134
        %v3136 = vpop.f32.mrb[0].mxu0
        %3137 = vmatprep.mubr.bf16.mxu0 %v2835
        %3138 = vmatmul.mubr.bf16.gmra.mrb[0].mxu0 %v2834
        %v3139 = vpop.f32.mrb[0].mxu0
        %v3140 = vadd.f32 0.0, %v3139
        %v3141 = vpop.f32.mrb[0].mxu0
        %v3142 = vpop.f32.mrb[0].mxu0
        %v3143 = vadd.f32 0.0, %v3142
        %v3144 = vpop.f32.mrb[0].mxu0
        %3145 = vmatprep.mubr.bf16.mxu0 %v2838
        %3146 = vmatmul.mubr.bf16.gmra.mrb[0].mxu0 %v2837
        %v3147 = vpop.f32.mrb[0].mxu0
        %v3148 = vadd.f32 0.0, %v3147
        %v3149 = vpop.f32.mrb[0].mxu0
        %v3150 = vpop.f32.mrb[0].mxu0
        %v3151 = vadd.f32 0.0, %v3150
        %v3152 = vpop.f32.mrb[0].mxu0
        %3153 = vmatprep.mubr.bf16.mxu0 %v2841
        %3154 = vmatmul.mubr.bf16.gmra.mrb[0].mxu0 %v2840
        %v3155 = vpop.f32.mrb[0].mxu0
        %v3156 = vadd.f32 0.0, %v3155
        %v3157 = vpop.f32.mrb[0].mxu0
        %v3158 = vpop.f32.mrb[0].mxu0
        %v3159 = vadd.f32 0.0, %v3158
        %v3160 = vpop.f32.mrb[0].mxu0
        %3161 = vmatprep.mubr.bf16.mxu0 %v2844
        %3162 = vmatmul.mubr.bf16.gmra.mrb[0].mxu0 %v2843
        %v3163 = vpop.f32.mrb[0].mxu0
        %v3164 = vadd.f32 0.0, %v3163
        %v3165 = vpop.f32.mrb[0].mxu0
        %v3166 = vpop.f32.mrb[0].mxu0
        %v3167 = vadd.f32 0.0, %v3166
        %v3168 = vpop.f32.mrb[0].mxu0
        %3169 = vmatprep.mubr.bf16.mxu0 %v2847
        %3170 = vmatmul.mubr.bf16.gmra.mrb[0].mxu0 %v2846
        %v3171 = vpop.f32.mrb[0].mxu0
        %v3172 = vadd.f32 0.0, %v3171
        %v3173 = vpop.f32.mrb[0].mxu0
        %v3174 = vpop.f32.mrb[0].mxu0
        %v3175 = vadd.f32 0.0, %v3174
        %v3176 = vpop.f32.mrb[0].mxu0
        %3177 = vmatprep.mubr.bf16.mxu0 %v2850
        %3178 = vmatmul.mubr.bf16.gmra.mrb[0].mxu0 %v2849
        %v3179 = vpop.f32.mrb[0].mxu0
        %v3180 = vadd.f32 0.0, %v3179
        %v3181 = vpop.f32.mrb[0].mxu0
        %v3182 = vpop.f32.mrb[0].mxu0
        %v3183 = vadd.f32 0.0, %v3182
        %v3184 = vpop.f32.mrb[0].mxu0
        %3185 = vmatprep.mubr.bf16.mxu0 %v2853
        %3186 = vmatmul.mubr.bf16.gmra.mrb[0].mxu0 %v2852
        %v3187 = vpop.f32.mrb[0].mxu0
        %v3188 = vadd.f32 0.0, %v3187
        %v3189 = vpop.f32.mrb[0].mxu0
        %v3190 = vpop.f32.mrb[0].mxu0
        %v3191 = vadd.f32 0.0, %v3190
        %v3192 = vpop.f32.mrb[0].mxu0
        %3193 = vmatprep.mubr.bf16.mxu0 %v2856
        %3194 = vmatmul.mubr.bf16.gmra.mrb[0].mxu0 %v2855
        %v3195 = vpop.f32.mrb[0].mxu0
        %v3196 = vadd.f32 0.0, %v3195
        %v3197 = vpop.f32.mrb[0].mxu0
        %v3198 = vpop.f32.mrb[0].mxu0
        %v3199 = vadd.f32 0.0, %v3198
        %v3200 = vpop.f32.mrb[0].mxu0
        %3201 = vmatprep.mubr.bf16.mxu0 %v2859
        %3202 = vmatmul.mubr.bf16.gmra.mrb[0].mxu0 %v2858
        %v3203 = vpop.f32.mrb[0].mxu0
        %v3204 = vadd.f32 0.0, %v3203
        %v3205 = vpop.f32.mrb[0].mxu0
        %v3206 = vpop.f32.mrb[0].mxu0
        %v3207 = vadd.f32 0.0, %v3206
        %v3208 = vpop.f32.mrb[0].mxu0
        %3209 = vmatprep.mubr.bf16.mxu0 %v2862
        %3210 = vmatmul.mubr.bf16.gmra.mrb[0].mxu0 %v2861
        %v3211 = vpop.f32.mrb[0].mxu0
        %v3212 = vadd.f32 0.0, %v3211
        %v3213 = vpop.f32.mrb[0].mxu0
        %v3214 = vpop.f32.mrb[0].mxu0
        %v3215 = vadd.f32 0.0, %v3214
        %v3216 = vpop.f32.mrb[0].mxu0
        %3217 = vdwg.mxu0
        %3218 = vmatprep.subr.bf16.mxu0 0
        %3219 = vmatpush1.bf16.msra.mxu0 %v3025
        %3220 = vmatprep.subr.bf16.mxu0 0
        %3221 = vmatpush1.bf16.msra.mxu0 %v3026
        %3222 = vmatprep.subr.bf16.mxu0 0
        %3223 = vmatpush1.bf16.msra.mxu0 %v3027
        %3224 = vmatprep.subr.bf16.mxu0 0
        %3225 = vmatpush1.bf16.msra.mxu0 %v3028
        %3226 = vmatprep.subr.bf16.mxu0 0
        %3227 = vmatpush1.bf16.msra.mxu0 %v3029
        %3228 = vmatprep.subr.bf16.mxu0 0
        %3229 = vmatpush1.bf16.msra.mxu0 %v3030
        %3230 = vmatprep.subr.bf16.mxu0 0
        %3231 = vmatpush1.bf16.msra.mxu0 %v3031
        %3232 = vmatprep.subr.bf16.mxu0 0
        %3233 = vmatpush1.bf16.msra.mxu0 %v3032
        %3234 = vmatprep.subr.bf16.mxu0 0
        %3235 = vmatpush1.bf16.msra.mxu0 0
        %3236 = vmatprep.subr.bf16.mxu0 0
        %3237 = vmatpush1.bf16.msra.mxu0 0
        %3238 = vmatprep.subr.bf16.mxu0 0
        %3239 = vmatpush1.bf16.msra.mxu0 0
        %3240 = vmatprep.subr.bf16.mxu0 0
        %3241 = vmatpush1.bf16.msra.mxu0 0
        %3242 = vmatprep.subr.bf16.mxu0 0
        %3243 = vmatpush1.bf16.msra.mxu0 0
        %3244 = vmatprep.subr.bf16.mxu0 0
        %3245 = vmatpush1.bf16.msra.mxu0 0
        %3246 = vmatprep.subr.bf16.mxu0 0
        %3247 = vmatpush1.bf16.msra.mxu0 0
        %3248 = vmatprep.subr.bf16.mxu0 0
        %3249 = vmatpush1.bf16.msra.mxu0 0
        %3250 = vmatprep.mubr.bf16.mxu0 0
        %3251 = vmatmul.mubr.bf16.gmra.mrb[0].mxu0 %v2818
        %v3252 = vpop.f32.mrb[0].mxu0
        %v3253 = vadd.f32 %v3092, %v3252
        %v3254 = vpop.f32.mrb[0].mxu0
        %v3255 = vpop.f32.mrb[0].mxu0
        %v3256 = vadd.f32 %v3095, %v3255
        %v3257 = vpop.f32.mrb[0].mxu0
        %3258 = vmatprep.mubr.bf16.mxu0 0
        %3259 = vmatmul.mubr.bf16.gmra.mrb[0].mxu0 %v2821
        %v3260 = vpop.f32.mrb[0].mxu0
        %v3261 = vadd.f32 %v3100, %v3260
        %v3262 = vpop.f32.mrb[0].mxu0
        %v3263 = vpop.f32.mrb[0].mxu0
        %v3264 = vadd.f32 %v3103, %v3263
        %v3265 = vpop.f32.mrb[0].mxu0
        %3266 = vmatprep.mubr.bf16.mxu0 0
        %3267 = vmatmul.mubr.bf16.gmra.mrb[0].mxu0 %v2824
        %v3268 = vpop.f32.mrb[0].mxu0
        %v3269 = vadd.f32 %v3108, %v3268
        %v3270 = vpop.f32.mrb[0].mxu0
        %v3271 = vpop.f32.mrb[0].mxu0
        %v3272 = vadd.f32 %v3111, %v3271
        %v3273 = vpop.f32.mrb[0].mxu0
        %3274 = vmatprep.mubr.bf16.mxu0 0
        %3275 = vmatmul.mubr.bf16.gmra.mrb[0].mxu0 %v2827
        %v3276 = vpop.f32.mrb[0].mxu0
        %v3277 = vadd.f32 %v3116, %v3276
        %v3278 = vpop.f32.mrb[0].mxu0
        %v3279 = vpop.f32.mrb[0].mxu0
        %v3280 = vadd.f32 %v3119, %v3279
        %v3281 = vpop.f32.mrb[0].mxu0
        %3282 = vmatprep.mubr.bf16.mxu0 0
        %3283 = vmatmul.mubr.bf16.gmra.mrb[0].mxu0 %v2830
        %v3284 = vpop.f32.mrb[0].mxu0
        %v3285 = vadd.f32 %v3124, %v3284
        %v3286 = vpop.f32.mrb[0].mxu0
        %v3287 = vpop.f32.mrb[0].mxu0
        %v3288 = vadd.f32 %v3127, %v3287
        %v3289 = vpop.f32.mrb[0].mxu0
        %3290 = vmatprep.mubr.bf16.mxu0 0
        %3291 = vmatmul.mubr.bf16.gmra.mrb[0].mxu0 %v2833
        %v3292 = vpop.f32.mrb[0].mxu0
        %v3293 = vadd.f32 %v3132, %v3292
        %v3294 = vpop.f32.mrb[0].mxu0
        %v3295 = vpop.f32.mrb[0].mxu0
        %v3296 = vadd.f32 %v3135, %v3295
        %v3297 = vpop.f32.mrb[0].mxu0
        %3298 = vmatprep.mubr.bf16.mxu0 0
        %3299 = vmatmul.mubr.bf16.gmra.mrb[0].mxu0 %v2836
        %v3300 = vpop.f32.mrb[0].mxu0
        %v3301 = vadd.f32 %v3140, %v3300
        %v3302 = vpop.f32.mrb[0].mxu0
        %v3303 = vpop.f32.mrb[0].mxu0
        %v3304 = vadd.f32 %v3143, %v3303
        %v3305 = vpop.f32.mrb[0].mxu0
        %3306 = vmatprep.mubr.bf16.mxu0 0
        %3307 = vmatmul.mubr.bf16.gmra.mrb[0].mxu0 %v2839
        %v3308 = vpop.f32.mrb[0].mxu0
        %v3309 = vadd.f32 %v3148, %v3308
        %v3310 = vpop.f32.mrb[0].mxu0
        %v3311 = vpop.f32.mrb[0].mxu0
        %v3312 = vadd.f32 %v3151, %v3311
        %v3313 = vpop.f32.mrb[0].mxu0
        %3314 = vmatprep.mubr.bf16.mxu0 0
        %3315 = vmatmul.mubr.bf16.gmra.mrb[0].mxu0 %v2842
        %v3316 = vpop.f32.mrb[0].mxu0
        %v3317 = vadd.f32 %v3156, %v3316
        %v3318 = vpop.f32.mrb[0].mxu0
        %v3319 = vpop.f32.mrb[0].mxu0
        %v3320 = vadd.f32 %v3159, %v3319
        %v3321 = vpop.f32.mrb[0].mxu0
        %3322 = vmatprep.mubr.bf16.mxu0 0
        %3323 = vmatmul.mubr.bf16.gmra.mrb[0].mxu0 %v2845
        %v3324 = vpop.f32.mrb[0].mxu0
        %v3325 = vadd.f32 %v3164, %v3324
        %v3326 = vpop.f32.mrb[0].mxu0
        %v3327 = vpop.f32.mrb[0].mxu0
        %v3328 = vadd.f32 %v3167, %v3327
        %v3329 = vpop.f32.mrb[0].mxu0
        %3330 = vmatprep.mubr.bf16.mxu0 0
        %3331 = vmatmul.mubr.bf16.gmra.mrb[0].mxu0 %v2848
        %v3332 = vpop.f32.mrb[0].mxu0
        %v3333 = vadd.f32 %v3172, %v3332
        %v3334 = vpop.f32.mrb[0].mxu0
        %v3335 = vpop.f32.mrb[0].mxu0
        %v3336 = vadd.f32 %v3175, %v3335
        %v3337 = vpop.f32.mrb[0].mxu0
        %3338 = vmatprep.mubr.bf16.mxu0 0
        %3339 = vmatmul.mubr.bf16.gmra.mrb[0].mxu0 %v2851
        %v3340 = vpop.f32.mrb[0].mxu0
        %v3341 = vadd.f32 %v3180, %v3340
        %v3342 = vpop.f32.mrb[0].mxu0
        %v3343 = vpop.f32.mrb[0].mxu0
        %v3344 = vadd.f32 %v3183, %v3343
        %v3345 = vpop.f32.mrb[0].mxu0
        %3346 = vmatprep.mubr.bf16.mxu0 0
        %3347 = vmatmul.mubr.bf16.gmra.mrb[0].mxu0 %v2854
        %v3348 = vpop.f32.mrb[0].mxu0
        %v3349 = vadd.f32 %v3188, %v3348
        %v3350 = vpop.f32.mrb[0].mxu0
        %v3351 = vpop.f32.mrb[0].mxu0
        %v3352 = vadd.f32 %v3191, %v3351
        %v3353 = vpop.f32.mrb[0].mxu0
        %3354 = vmatprep.mubr.bf16.mxu0 0
        %3355 = vmatmul.mubr.bf16.gmra.mrb[0].mxu0 %v2857
        %v3356 = vpop.f32.mrb[0].mxu0
        %v3357 = vadd.f32 %v3196, %v3356
        %v3358 = vpop.f32.mrb[0].mxu0
        %v3359 = vpop.f32.mrb[0].mxu0
        %v3360 = vadd.f32 %v3199, %v3359
        %v3361 = vpop.f32.mrb[0].mxu0
        %3362 = vmatprep.mubr.bf16.mxu0 0
        %3363 = vmatmul.mubr.bf16.gmra.mrb[0].mxu0 %v2860
        %v3364 = vpop.f32.mrb[0].mxu0
        %v3365 = vadd.f32 %v3204, %v3364
        %v3366 = vpop.f32.mrb[0].mxu0
        %v3367 = vpop.f32.mrb[0].mxu0
        %v3368 = vadd.f32 %v3207, %v3367
        %v3369 = vpop.f32.mrb[0].mxu0
        %3370 = vmatprep.mubr.bf16.mxu0 0
        %3371 = vmatmul.mubr.bf16.gmra.mrb[0].mxu0 %v2863
        %v3372 = vpop.f32.mrb[0].mxu0
        %v3373 = vadd.f32 %v3212, %v3372
        %v3374 = vpop.f32.mrb[0].mxu0
        %v3375 = vpop.f32.mrb[0].mxu0
        %v3376 = vadd.f32 %v3215, %v3375
        %v3377 = vpop.f32.mrb[0].mxu0
        %3378 = vdwg.mxu0
        %v3379 = vadd.f32 %v2783, %v3253
        %v3380 = vadd.f32 %v2784, %v3256
        %v3381 = vadd.f32 %v2785, %v3261
        %v3382 = vadd.f32 %v2786, %v3264
        %v3383 = vadd.f32 %v2787, %v3269
        %v3384 = vadd.f32 %v2788, %v3272
        %v3385 = vadd.f32 %v2789, %v3277
        %v3386 = vadd.f32 %v2790, %v3280
        %v3387 = vadd.f32 %v2791, %v3285
        %v3388 = vadd.f32 %v2792, %v3288
        %v3389 = vadd.f32 %v2793, %v3293
        %v3390 = vadd.f32 %v2794, %v3296
        %v3391 = vadd.f32 %v2795, %v3301
        %v3392 = vadd.f32 %v2796, %v3304
        %v3393 = vadd.f32 %v2797, %v3309
        %v3394 = vadd.f32 %v2798, %v3312
        %v3395 = vadd.f32 %v2799, %v3317
        %v3396 = vadd.f32 %v2800, %v3320
        %v3397 = vadd.f32 %v2801, %v3325
        %v3398 = vadd.f32 %v2802, %v3328
        %v3399 = vadd.f32 %v2803, %v3333
        %v3400 = vadd.f32 %v2804, %v3336
        %v3401 = vadd.f32 %v2805, %v3341
        %v3402 = vadd.f32 %v2806, %v3344
        %v3403 = vadd.f32 %v2807, %v3349
        %v3404 = vadd.f32 %v2808, %v3352
        %v3405 = vadd.f32 %v2809, %v3357
        %v3406 = vadd.f32 %v2810, %v3360
        %v3407 = vadd.f32 %v2811, %v3365
        %v3408 = vadd.f32 %v2812, %v3368
        %v3409 = vadd.f32 %v2813, %v3373
        %v3410 = vadd.f32 %v2814, %v3376
        %3411 = vst [vmem:[#allocation4] sm:$0xff] %v3379
        %3412 = vst [vmem:[#allocation4 + $0x8] sm:$0xff] %v3380
        %3413 = vst [vmem:[#allocation4 + $0x10] sm:$0xff] %v3381
        %3414 = vst [vmem:[#allocation4 + $0x18] sm:$0xff] %v3382
        %3415 = vst [vmem:[#allocation4 + $0x20] sm:$0xff] %v3383
        %3416 = vst [vmem:[#allocation4 + $0x28] sm:$0xff] %v3384
        %3417 = vst [vmem:[#allocation4 + $0x30] sm:$0xff] %v3385
        %3418 = vst [vmem:[#allocation4 + $0x38] sm:$0xff] %v3386
        %3419 = vst [vmem:[#allocation4 + $0x40] sm:$0xff] %v3387
        %3420 = vst [vmem:[#allocation4 + $0x48] sm:$0xff] %v3388
        %3421 = vst [vmem:[#allocation4 + $0x50] sm:$0xff] %v3389
        %3422 = vst [vmem:[#allocation4 + $0x58] sm:$0xff] %v3390
        %3423 = vst [vmem:[#allocation4 + $0x60] sm:$0xff] %v3391
        %3424 = vst [vmem:[#allocation4 + $0x68] sm:$0xff] %v3392
        %3425 = vst [vmem:[#allocation4 + $0x70] sm:$0xff] %v3393
        %3426 = vst [vmem:[#allocation4 + $0x78] sm:$0xff] %v3394
        %3427 = vst [vmem:[#allocation4 + $0x80] sm:$0xff] %v3395
        %3428 = vst [vmem:[#allocation4 + $0x88] sm:$0xff] %v3396
        %3429 = vst [vmem:[#allocation4 + $0x90] sm:$0xff] %v3397
        %3430 = vst [vmem:[#allocation4 + $0x98] sm:$0xff] %v3398
        %3431 = vst [vmem:[#allocation4 + $0xa0] sm:$0xff] %v3399
        %3432 = vst [vmem:[#allocation4 + $0xa8] sm:$0xff] %v3400
        %3433 = vst [vmem:[#allocation4 + $0xb0] sm:$0xff] %v3401
        %3434 = vst [vmem:[#allocation4 + $0xb8] sm:$0xff] %v3402
        %3435 = vst [vmem:[#allocation4 + $0xc0] sm:$0xff] %v3403
        %3436 = vst [vmem:[#allocation4 + $0xc8] sm:$0xff] %v3404
        %3437 = vst [vmem:[#allocation4 + $0xd0] sm:$0xff] %v3405
        %3438 = vst [vmem:[#allocation4 + $0xd8] sm:$0xff] %v3406
        %3439 = vst [vmem:[#allocation4 + $0xe0] sm:$0xff] %v3407
        %3440 = vst [vmem:[#allocation4 + $0xe8] sm:$0xff] %v3408
        %3441 = vst [vmem:[#allocation4 + $0xf0] sm:$0xff] %v3409
        %3442 = vst [vmem:[#allocation4 + $0xf8] sm:$0xff] %v3410
        %v3443 = vld [vmem:[#allocation4] sm:$0xff]
        %v3444 = vld [vmem:[#allocation4 + $0x8] sm:$0xff]
        %v3445 = vld [vmem:[#allocation4 + $0x10] sm:$0xff]
        %v3446 = vld [vmem:[#allocation4 + $0x18] sm:$0xff]
        %v3447 = vld [vmem:[#allocation4 + $0x20] sm:$0xff]
        %v3448 = vld [vmem:[#allocation4 + $0x28] sm:$0xff]
        %v3449 = vld [vmem:[#allocation4 + $0x30] sm:$0xff]
        %v3450 = vld [vmem:[#allocation4 + $0x38] sm:$0xff]
        %v3451 = vld [vmem:[#allocation4 + $0x40] sm:$0xff]
        %v3452 = vld [vmem:[#allocation4 + $0x48] sm:$0xff]
        %v3453 = vld [vmem:[#allocation4 + $0x50] sm:$0xff]
        %v3454 = vld [vmem:[#allocation4 + $0x58] sm:$0xff]
        %v3455 = vld [vmem:[#allocation4 + $0x60] sm:$0xff]
        %v3456 = vld [vmem:[#allocation4 + $0x68] sm:$0xff]
        %v3457 = vld [vmem:[#allocation4 + $0x70] sm:$0xff]
        %v3458 = vld [vmem:[#allocation4 + $0x78] sm:$0xff]
        %v3459 = vld [vmem:[#allocation4 + $0x80] sm:$0xff]
        %v3460 = vld [vmem:[#allocation4 + $0x88] sm:$0xff]
        %v3461 = vld [vmem:[#allocation4 + $0x90] sm:$0xff]
        %v3462 = vld [vmem:[#allocation4 + $0x98] sm:$0xff]
        %v3463 = vld [vmem:[#allocation4 + $0xa0] sm:$0xff]
        %v3464 = vld [vmem:[#allocation4 + $0xa8] sm:$0xff]
        %v3465 = vld [vmem:[#allocation4 + $0xb0] sm:$0xff]
        %v3466 = vld [vmem:[#allocation4 + $0xb8] sm:$0xff]
        %v3467 = vld [vmem:[#allocation4 + $0xc0] sm:$0xff]
        %v3468 = vld [vmem:[#allocation4 + $0xc8] sm:$0xff]
        %v3469 = vld [vmem:[#allocation4 + $0xd0] sm:$0xff]
        %v3470 = vld [vmem:[#allocation4 + $0xd8] sm:$0xff]
        %v3471 = vld [vmem:[#allocation4 + $0xe0] sm:$0xff]
        %v3472 = vld [vmem:[#allocation4 + $0xe8] sm:$0xff]
        %v3473 = vld [vmem:[#allocation4 + $0xf0] sm:$0xff]
        %v3474 = vld [vmem:[#allocation4 + $0xf8] sm:$0xff]
        %v3475 = vld [vmem:[%s6] sm:$0x1]
        %v3477 = vlaneseq
        %v3478 = vshrl.u32 %v3477, 7
        %v3479 = vsub.s32 0, %v3478
        %v3480 = vrot.slane %v3475, %v3479
        %v3482 = vadd.f32 %v3443, %v3480
        %v3483 = vadd.f32 %v3444, %v3480
        %v3484 = vadd.f32 %v3445, %v3480
        %v3485 = vadd.f32 %v3446, %v3480
        %v3486 = vadd.f32 %v3447, %v3480
        %v3487 = vadd.f32 %v3448, %v3480
        %v3488 = vadd.f32 %v3449, %v3480
        %v3489 = vadd.f32 %v3450, %v3480
        %v3490 = vadd.f32 %v3451, %v3480
        %v3491 = vadd.f32 %v3452, %v3480
        %v3492 = vadd.f32 %v3453, %v3480
        %v3493 = vadd.f32 %v3454, %v3480
        %v3494 = vadd.f32 %v3455, %v3480
        %v3495 = vadd.f32 %v3456, %v3480
        %v3496 = vadd.f32 %v3457, %v3480
        %v3497 = vadd.f32 %v3458, %v3480
        %v3498 = vadd.f32 %v3459, %v3480
        %v3499 = vadd.f32 %v3460, %v3480
        %v3500 = vadd.f32 %v3461, %v3480
        %v3501 = vadd.f32 %v3462, %v3480
        %v3502 = vadd.f32 %v3463, %v3480
        %v3503 = vadd.f32 %v3464, %v3480
        %v3504 = vadd.f32 %v3465, %v3480
        %v3505 = vadd.f32 %v3466, %v3480
        %v3506 = vadd.f32 %v3467, %v3480
        %v3507 = vadd.f32 %v3468, %v3480
        %v3508 = vadd.f32 %v3469, %v3480
        %v3509 = vadd.f32 %v3470, %v3480
        %v3510 = vadd.f32 %v3471, %v3480
        %v3511 = vadd.f32 %v3472, %v3480
        %v3512 = vadd.f32 %v3473, %v3480
        %v3513 = vadd.f32 %v3474, %v3480
        %v3514 = vxor.u32 %v3482, 2147483648
        %v3515 = vxor.u32 %v3483, 2147483648
        %v3516 = vxor.u32 %v3484, 2147483648
        %v3517 = vxor.u32 %v3485, 2147483648
        %v3518 = vxor.u32 %v3486, 2147483648
        %v3519 = vxor.u32 %v3487, 2147483648
        %v3520 = vxor.u32 %v3488, 2147483648
        %v3521 = vxor.u32 %v3489, 2147483648
        %v3522 = vxor.u32 %v3490, 2147483648
        %v3523 = vxor.u32 %v3491, 2147483648
        %v3524 = vxor.u32 %v3492, 2147483648
        %v3525 = vxor.u32 %v3493, 2147483648
        %v3526 = vxor.u32 %v3494, 2147483648
        %v3527 = vxor.u32 %v3495, 2147483648
        %v3528 = vxor.u32 %v3496, 2147483648
        %v3529 = vxor.u32 %v3497, 2147483648
        %v3530 = vxor.u32 %v3498, 2147483648
        %v3531 = vxor.u32 %v3499, 2147483648
        %v3532 = vxor.u32 %v3500, 2147483648
        %v3533 = vxor.u32 %v3501, 2147483648
        %v3534 = vxor.u32 %v3502, 2147483648
        %v3535 = vxor.u32 %v3503, 2147483648
        %v3536 = vxor.u32 %v3504, 2147483648
        %v3537 = vxor.u32 %v3505, 2147483648
        %v3538 = vxor.u32 %v3506, 2147483648
        %v3539 = vxor.u32 %v3507, 2147483648
        %v3540 = vxor.u32 %v3508, 2147483648
        %v3541 = vxor.u32 %v3509, 2147483648
        %v3542 = vxor.u32 %v3510, 2147483648
        %v3543 = vxor.u32 %v3511, 2147483648
        %v3544 = vxor.u32 %v3512, 2147483648
        %v3545 = vxor.u32 %v3513, 2147483648
        %v3546 = vmul.f32 %v3514, 1.442695
        %v3547 = vpow.pop %v3546
        %v3548 = vmul.f32 %v3515, 1.442695
        %v3549 = vpow.pop %v3548
        %v3550 = vmul.f32 %v3516, 1.442695
        %v3551 = vpow.pop %v3550
        %v3552 = vmul.f32 %v3517, 1.442695
        %v3553 = vpow.pop %v3552
        %v3554 = vmul.f32 %v3518, 1.442695
        %v3555 = vpow.pop %v3554
        %v3556 = vmul.f32 %v3519, 1.442695
        %v3557 = vpow.pop %v3556
        %v3558 = vmul.f32 %v3520, 1.442695
        %v3559 = vpow.pop %v3558
        %v3560 = vmul.f32 %v3521, 1.442695
        %v3561 = vpow.pop %v3560
        %v3562 = vmul.f32 %v3522, 1.442695
        %v3563 = vpow.pop %v3562
        %v3564 = vmul.f32 %v3523, 1.442695
        %v3565 = vpow.pop %v3564
        %v3566 = vmul.f32 %v3524, 1.442695
        %v3567 = vpow.pop %v3566
        %v3568 = vmul.f32 %v3525, 1.442695
        %v3569 = vpow.pop %v3568
        %v3570 = vmul.f32 %v3526, 1.442695
        %v3571 = vpow.pop %v3570
        %v3572 = vmul.f32 %v3527, 1.442695
        %v3573 = vpow.pop %v3572
        %v3574 = vmul.f32 %v3528, 1.442695
        %v3575 = vpow.pop %v3574
        %v3576 = vmul.f32 %v3529, 1.442695
        %v3577 = vpow.pop %v3576
        %v3578 = vmul.f32 %v3530, 1.442695
        %v3579 = vpow.pop %v3578
        %v3580 = vmul.f32 %v3531, 1.442695
        %v3581 = vpow.pop %v3580
        %v3582 = vmul.f32 %v3532, 1.442695
        %v3583 = vpow.pop %v3582
        %v3584 = vmul.f32 %v3533, 1.442695
        %v3585 = vpow.pop %v3584
        %v3586 = vmul.f32 %v3534, 1.442695
        %v3587 = vpow.pop %v3586
        %v3588 = vmul.f32 %v3535, 1.442695
        %v3589 = vpow.pop %v3588
        %v3590 = vmul.f32 %v3536, 1.442695
        %v3591 = vpow.pop %v3590
        %v3592 = vmul.f32 %v3537, 1.442695
        %v3593 = vpow.pop %v3592
        %v3594 = vmul.f32 %v3538, 1.442695
        %v3595 = vpow.pop %v3594
        %v3596 = vmul.f32 %v3539, 1.442695
        %v3597 = vpow.pop %v3596
        %v3598 = vmul.f32 %v3540, 1.442695
        %v3599 = vpow.pop %v3598
        %v3600 = vmul.f32 %v3541, 1.442695
        %v3601 = vpow.pop %v3600
        %v3602 = vmul.f32 %v3542, 1.442695
        %v3603 = vpow.pop %v3602
        %v3604 = vmul.f32 %v3543, 1.442695
        %v3605 = vpow.pop %v3604
        %v3606 = vmul.f32 %v3544, 1.442695
        %v3607 = vpow.pop %v3606
        %v3608 = vmul.f32 %v3545, 1.442695
        %v3609 = vpow.pop %v3608
        %v3610 = vadd.f32 %v3547, 1.0
        %v3611 = vadd.f32 %v3549, 1.0
        %v3612 = vadd.f32 %v3551, 1.0
        %v3613 = vadd.f32 %v3553, 1.0
        %v3614 = vadd.f32 %v3555, 1.0
        %v3615 = vadd.f32 %v3557, 1.0
        %v3616 = vadd.f32 %v3559, 1.0
        %v3617 = vadd.f32 %v3561, 1.0
        %v3618 = vadd.f32 %v3563, 1.0
        %v3619 = vadd.f32 %v3565, 1.0
        %v3620 = vadd.f32 %v3567, 1.0
        %v3621 = vadd.f32 %v3569, 1.0
        %v3622 = vadd.f32 %v3571, 1.0
        %v3623 = vadd.f32 %v3573, 1.0
        %v3624 = vadd.f32 %v3575, 1.0
        %v3625 = vadd.f32 %v3577, 1.0
        %v3626 = vadd.f32 %v3579, 1.0
        %v3627 = vadd.f32 %v3581, 1.0
        %v3628 = vadd.f32 %v3583, 1.0
        %v3629 = vadd.f32 %v3585, 1.0
        %v3630 = vadd.f32 %v3587, 1.0
        %v3631 = vadd.f32 %v3589, 1.0
        %v3632 = vadd.f32 %v3591, 1.0
        %v3633 = vadd.f32 %v3593, 1.0
        %v3634 = vadd.f32 %v3595, 1.0
        %v3635 = vadd.f32 %v3597, 1.0
        %v3636 = vadd.f32 %v3599, 1.0
        %v3637 = vadd.f32 %v3601, 1.0
        %v3638 = vadd.f32 %v3603, 1.0
        %v3639 = vadd.f32 %v3605, 1.0
        %v3640 = vadd.f32 %v3607, 1.0
        %v3641 = vadd.f32 %v3609, 1.0
        %v3642 = vrcp.pop %v3610
        %v3643 = vmul.f32 1.0, %v3642
        %v3644 = vrcp.pop %v3611
        %v3645 = vmul.f32 1.0, %v3644
        %v3646 = vrcp.pop %v3612
        %v3647 = vmul.f32 1.0, %v3646
        %v3648 = vrcp.pop %v3613
        %v3649 = vmul.f32 1.0, %v3648
        %v3650 = vrcp.pop %v3614
        %v3651 = vmul.f32 1.0, %v3650
        %v3652 = vrcp.pop %v3615
        %v3653 = vmul.f32 1.0, %v3652
        %v3654 = vrcp.pop %v3616
        %v3655 = vmul.f32 1.0, %v3654
        %v3656 = vrcp.pop %v3617
        %v3657 = vmul.f32 1.0, %v3656
        %v3658 = vrcp.pop %v3618
        %v3659 = vmul.f32 1.0, %v3658
        %v3660 = vrcp.pop %v3619
        %v3661 = vmul.f32 1.0, %v3660
        %v3662 = vrcp.pop %v3620
        %v3663 = vmul.f32 1.0, %v3662
        %v3664 = vrcp.pop %v3621
        %v3665 = vmul.f32 1.0, %v3664
        %v3666 = vrcp.pop %v3622
        %v3667 = vmul.f32 1.0, %v3666
        %v3668 = vrcp.pop %v3623
        %v3669 = vmul.f32 1.0, %v3668
        %v3670 = vrcp.pop %v3624
        %v3671 = vmul.f32 1.0, %v3670
        %v3672 = vrcp.pop %v3625
        %v3673 = vmul.f32 1.0, %v3672
        %v3674 = vrcp.pop %v3626
        %v3675 = vmul.f32 1.0, %v3674
        %v3676 = vrcp.pop %v3627
        %v3677 = vmul.f32 1.0, %v3676
        %v3678 = vrcp.pop %v3628
        %v3679 = vmul.f32 1.0, %v3678
        %v3680 = vrcp.pop %v3629
        %v3681 = vmul.f32 1.0, %v3680
        %v3682 = vrcp.pop %v3630
        %v3683 = vmul.f32 1.0, %v3682
        %v3684 = vrcp.pop %v3631
        %v3685 = vmul.f32 1.0, %v3684
        %v3686 = vrcp.pop %v3632
        %v3687 = vmul.f32 1.0, %v3686
        %v3688 = vrcp.pop %v3633
        %v3689 = vmul.f32 1.0, %v3688
        %v3690 = vrcp.pop %v3634
        %v3691 = vmul.f32 1.0, %v3690
        %v3692 = vrcp.pop %v3635
        %v3693 = vmul.f32 1.0, %v3692
        %v3694 = vrcp.pop %v3636
        %v3695 = vmul.f32 1.0, %v3694
        %v3696 = vrcp.pop %v3637
        %v3697 = vmul.f32 1.0, %v3696
        %v3698 = vrcp.pop %v3638
        %v3699 = vmul.f32 1.0, %v3698
        %v3700 = vrcp.pop %v3639
        %v3701 = vmul.f32 1.0, %v3700
        %v3702 = vrcp.pop %v3640
        %v3703 = vmul.f32 1.0, %v3702
        %v3704 = vrcp.pop %v3641
        %v3705 = vmul.f32 1.0, %v3704
        %v3706 = vmul.f32 %v3482, %v3643
        %v3707 = vmul.f32 %v3483, %v3645
        %v3708 = vmul.f32 %v3484, %v3647
        %v3709 = vmul.f32 %v3485, %v3649
        %v3710 = vmul.f32 %v3486, %v3651
        %v3711 = vmul.f32 %v3487, %v3653
        %v3712 = vmul.f32 %v3488, %v3655
        %v3713 = vmul.f32 %v3489, %v3657
        %v3714 = vmul.f32 %v3490, %v3659
        %v3715 = vmul.f32 %v3491, %v3661
        %v3716 = vmul.f32 %v3492, %v3663
        %v3717 = vmul.f32 %v3493, %v3665
        %v3718 = vmul.f32 %v3494, %v3667
        %v3719 = vmul.f32 %v3495, %v3669
        %v3720 = vmul.f32 %v3496, %v3671
        %v3721 = vmul.f32 %v3497, %v3673
        %v3722 = vmul.f32 %v3498, %v3675
        %v3723 = vmul.f32 %v3499, %v3677
        %v3724 = vmul.f32 %v3500, %v3679
        %v3725 = vmul.f32 %v3501, %v3681
        %v3726 = vmul.f32 %v3502, %v3683
        %v3727 = vmul.f32 %v3503, %v3685
        %v3728 = vmul.f32 %v3504, %v3687
        %v3729 = vmul.f32 %v3505, %v3689
        %v3730 = vmul.f32 %v3506, %v3691
        %v3731 = vmul.f32 %v3507, %v3693
        %v3732 = vmul.f32 %v3508, %v3695
        %v3733 = vmul.f32 %v3509, %v3697
        %v3734 = vmul.f32 %v3510, %v3699
        %v3735 = vmul.f32 %v3511, %v3701
        %v3736 = vmul.f32 %v3512, %v3703
        %v3737 = vmul.f32 %v3513, %v3705
        %v3738 = vld [vmem:[%s387] sm:$0xff]
        %v3739 = vld [vmem:[%s387 + $0x8] sm:$0xff]
        %v3740 = vld [vmem:[%s387 + $0x10] sm:$0xff]
        %v3741 = vld [vmem:[%s387 + $0x18] sm:$0xff]
        %v3742 = vld [vmem:[%s387 + $0x20] sm:$0xff]
        %v3743 = vld [vmem:[%s387 + $0x28] sm:$0xff]
        %v3744 = vld [vmem:[%s387 + $0x30] sm:$0xff]
        %v3745 = vld [vmem:[%s387 + $0x38] sm:$0xff]
        %v3746 = vld [vmem:[%s387 + $0x40] sm:$0xff]
        %v3747 = vld [vmem:[%s387 + $0x48] sm:$0xff]
        %v3748 = vld [vmem:[%s387 + $0x50] sm:$0xff]
        %v3749 = vld [vmem:[%s387 + $0x58] sm:$0xff]
        %v3750 = vld [vmem:[%s387 + $0x60] sm:$0xff]
        %v3751 = vld [vmem:[%s387 + $0x68] sm:$0xff]
        %v3752 = vld [vmem:[%s387 + $0x70] sm:$0xff]
        %v3753 = vld [vmem:[%s387 + $0x78] sm:$0xff]
        %v3754 = vld [vmem:[%s387 + $0x80] sm:$0xff]
        %v3755 = vld [vmem:[%s387 + $0x88] sm:$0xff]
        %v3756 = vld [vmem:[%s387 + $0x90] sm:$0xff]
        %v3757 = vld [vmem:[%s387 + $0x98] sm:$0xff]
        %v3758 = vld [vmem:[%s387 + $0xa0] sm:$0xff]
        %v3759 = vld [vmem:[%s387 + $0xa8] sm:$0xff]
        %v3760 = vld [vmem:[%s387 + $0xb0] sm:$0xff]
        %v3761 = vld [vmem:[%s387 + $0xb8] sm:$0xff]
        %v3762 = vld [vmem:[%s387 + $0xc0] sm:$0xff]
        %v3763 = vld [vmem:[%s387 + $0xc8] sm:$0xff]
        %v3764 = vld [vmem:[%s387 + $0xd0] sm:$0xff]
        %v3765 = vld [vmem:[%s387 + $0xd8] sm:$0xff]
        %v3766 = vld [vmem:[%s387 + $0xe0] sm:$0xff]
        %v3767 = vld [vmem:[%s387 + $0xe8] sm:$0xff]
        %v3768 = vld [vmem:[%s387 + $0xf0] sm:$0xff]
        %v3769 = vld [vmem:[%s387 + $0xf8] sm:$0xff]
        %v3770 = vadd.f32 %v3706, %v3738
        %v3771 = vadd.f32 %v3707, %v3739
        %v3772 = vadd.f32 %v3708, %v3740
        %v3773 = vadd.f32 %v3709, %v3741
        %v3774 = vadd.f32 %v3710, %v3742
        %v3775 = vadd.f32 %v3711, %v3743
        %v3776 = vadd.f32 %v3712, %v3744
        %v3777 = vadd.f32 %v3713, %v3745
        %v3778 = vadd.f32 %v3714, %v3746
        %v3779 = vadd.f32 %v3715, %v3747
        %v3780 = vadd.f32 %v3716, %v3748
        %v3781 = vadd.f32 %v3717, %v3749
        %v3782 = vadd.f32 %v3718, %v3750
        %v3783 = vadd.f32 %v3719, %v3751
        %v3784 = vadd.f32 %v3720, %v3752
        %v3785 = vadd.f32 %v3721, %v3753
        %v3786 = vadd.f32 %v3722, %v3754
        %v3787 = vadd.f32 %v3723, %v3755
        %v3788 = vadd.f32 %v3724, %v3756
        %v3789 = vadd.f32 %v3725, %v3757
        %v3790 = vadd.f32 %v3726, %v3758
        %v3791 = vadd.f32 %v3727, %v3759
        %v3792 = vadd.f32 %v3728, %v3760
        %v3793 = vadd.f32 %v3729, %v3761
        %v3794 = vadd.f32 %v3730, %v3762
        %v3795 = vadd.f32 %v3731, %v3763
        %v3796 = vadd.f32 %v3732, %v3764
        %v3797 = vadd.f32 %v3733, %v3765
        %v3798 = vadd.f32 %v3734, %v3766
        %v3799 = vadd.f32 %v3735, %v3767
        %v3800 = vadd.f32 %v3736, %v3768
        %v3801 = vadd.f32 %v3737, %v3769
        %3802 = vst [vmem:[%s453] sm:$0xff] %v3770
        %3803 = vst [vmem:[%s453 + $0x8] sm:$0xff] %v3771
        %3804 = vst [vmem:[%s453 + $0x10] sm:$0xff] %v3772
        %3805 = vst [vmem:[%s453 + $0x18] sm:$0xff] %v3773
        %3806 = vst [vmem:[%s453 + $0x20] sm:$0xff] %v3774
        %3807 = vst [vmem:[%s453 + $0x28] sm:$0xff] %v3775
        %3808 = vst [vmem:[%s453 + $0x30] sm:$0xff] %v3776
        %3809 = vst [vmem:[%s453 + $0x38] sm:$0xff] %v3777
        %3810 = vst [vmem:[%s453 + $0x40] sm:$0xff] %v3778
        %3811 = vst [vmem:[%s453 + $0x48] sm:$0xff] %v3779
        %3812 = vst [vmem:[%s453 + $0x50] sm:$0xff] %v3780
        %3813 = vst [vmem:[%s453 + $0x58] sm:$0xff] %v3781
        %3814 = vst [vmem:[%s453 + $0x60] sm:$0xff] %v3782
        %3815 = vst [vmem:[%s453 + $0x68] sm:$0xff] %v3783
        %3816 = vst [vmem:[%s453 + $0x70] sm:$0xff] %v3784
        %3817 = vst [vmem:[%s453 + $0x78] sm:$0xff] %v3785
        %3818 = vst [vmem:[%s453 + $0x80] sm:$0xff] %v3786
        %3819 = vst [vmem:[%s453 + $0x88] sm:$0xff] %v3787
        %3820 = vst [vmem:[%s453 + $0x90] sm:$0xff] %v3788
        %3821 = vst [vmem:[%s453 + $0x98] sm:$0xff] %v3789
        %3822 = vst [vmem:[%s453 + $0xa0] sm:$0xff] %v3790
        %3823 = vst [vmem:[%s453 + $0xa8] sm:$0xff] %v3791
        %3824 = vst [vmem:[%s453 + $0xb0] sm:$0xff] %v3792
        %3825 = vst [vmem:[%s453 + $0xb8] sm:$0xff] %v3793
        %3826 = vst [vmem:[%s453 + $0xc0] sm:$0xff] %v3794
        %3827 = vst [vmem:[%s453 + $0xc8] sm:$0xff] %v3795
        %3828 = vst [vmem:[%s453 + $0xd0] sm:$0xff] %v3796
        %3829 = vst [vmem:[%s453 + $0xd8] sm:$0xff] %v3797
        %3830 = vst [vmem:[%s453 + $0xe0] sm:$0xff] %v3798
        %3831 = vst [vmem:[%s453 + $0xe8] sm:$0xff] %v3799
        %3832 = vst [vmem:[%s453 + $0xf0] sm:$0xff] %v3800
        %3833 = vst [vmem:[%s453 + $0xf8] sm:$0xff] %v3801
        %s3834 = sand.u32 %s234, 1
        %s3835 = scalar_lea.sflag [#allocation7], %s3834
        %s3836 = sand.u32 %s234, 1
        %s3837 = smul.addr %s3836, 256
        %s3838 = scalar_lea.vmem [#allocation14], %s3837
        // Predicated region
        $region73: #{tpu_custom_call.1} parent=47 // pred_check
          %p3839 = pneg %p244
        $region74: #{tpu_custom_call.1} parent=47 // pred_check_branch
          %3841 = sbr.rel (%p3839) target = $region76
        $region75: #{tpu_custom_call.1} parent=47 // pred_region
          %s3842 = smul.u32 16, %s32
          %s3844 = ssub.s32 4096, 4096
          %3845 = vsyncadd %s3835, %s3844
          %s3846 = smul.addr %s3842, 2
          %s3847 = smul.addr %s33, 32
          %s3848 = sadd.s32 %s3846, %s3847
          %s3849 = smul.addr %s3848, 128
          %s3850 = scalar_lea.hbm %s7, %s3849
          %s3851 = sshll.u32 %s3838, 4
          %s3852 = int_to_ptr.vmem [resolvable:$true] %s3851
          %3857 = dma.vmem_to_hbm [thread:$0]  %s3852, 4096, %s3850, %s3835, 128, 128, 8
        $region76: #{tpu_custom_call.1} parent=47 // pred_fallthru
          _
      $region48: #{tpu_custom_call.1} parent=5 // pred_fallthru
        _
      %p3858 = scmp.le.s32.totalorder 2, %s23
      // Predicated region
      $region77: #{tpu_custom_call.1} parent=5 // pred_check
        %p3859 = pneg %p3858
      $region78: #{tpu_custom_call.1} parent=5 // pred_check_branch
        %3861 = sbr.rel (%p3859) target = $region80
      $region79: #{tpu_custom_call.1} parent=5 // pred_region
        %s3862 = ssub.s32 %s23, 2
        // Predicated region
        $region81: #{tpu_custom_call.1} parent=79 // pred_check
          %p3863 = pneg %p250
        $region82: #{tpu_custom_call.1} parent=79 // pred_check_branch
          %3865 = sbr.rel (%p3863) target = $region84
        $region83: #{tpu_custom_call.1} parent=79 // pred_region
          %s3866 = sand.u32 %s235, 1
          %s3867 = scalar_lea.sflag [#allocation7], %s3866
          %s3868 = sand.u32 %s235, 1
          %s3869 = smul.addr %s3868, 256
          %s3870 = scalar_lea.vmem [#allocation14], %s3869
          %3871 = dma.done %s3867, 4096
        $region84: #{tpu_custom_call.1} parent=79 // pred_fallthru
          _
      $region80: #{tpu_custom_call.1} parent=5 // pred_fallthru
        _
    $region6: #{tpu_custom_call.1} parent=1 // loop_footer
      %s27 = sadd.s32 1, %s23
    $region7: #{tpu_custom_call.1} parent=1 // loop_footer_branch
      %22 = sbr.rel target = $region3
    $region8: #{tpu_custom_call.1} parent=1 // loop_exit
      _
    %3872 = vsyncpa [#allocation6], 1
    %s3873 = scalar_lea.sflag [#allocation6], 1
    %3874 = vsyncpa %s3873, 1
    %3875 = vsyncpa [#allocation9], 1
    %s3876 = scalar_lea.sflag [#allocation9], 1
    %3877 = vsyncpa %s3876, 1
    %3878 = vsyncpa [#allocation12], 1
    %3879 = vsyncpa [#allocation7], 1
    %s3880 = scalar_lea.sflag [#allocation7], 1
    %3881 = vsyncpa %s3880, 1

</llo_original>
